<compile_context>
chip_gen: v7x
topology: tpu7x:2x2x1
jax: 0.10.0
libtpu: 0.0.40
codegen_flags: <defaults>
</compile_context>

<pallas_src>
import functools

import numpy as np

import jax
import jax.numpy as jnp
from jax.experimental import pallas as pl
from jax.experimental.pallas import tpu as pltpu


MXU_DTYPE = jnp.bfloat16  # matmul operand dtype (accumulation stays f32)


# ---------------------------------------------------------------------------
# Host-side (cached, numpy-only) align_corners=True interpolation helpers
# ---------------------------------------------------------------------------
@functools.lru_cache(maxsize=None)
def _interp_pairs(out_size, in_size):
    """For each output index: (lo, frac) over the input (align_corners=True)."""
    if in_size == 1:
        return tuple((0, 0.0) for _ in range(out_size))
    pairs = []
    for o in range(out_size):
        coord = 0.0 if out_size == 1 else o * (in_size - 1) / (out_size - 1)
        lo = min(int(coord), in_size - 2)
        pairs.append((lo, float(coord - lo)))
    return tuple(pairs)


@functools.lru_cache(maxsize=None)
def _interp_matrix_np(out_size, in_size):
    """(out_size, in_size) align_corners=True linear-interp matrix (numpy)."""
    a = np.zeros((out_size, in_size), np.float32)
    for o, (lo, frac) in enumerate(_interp_pairs(out_size, in_size)):
        a[o, lo] += 1.0 - frac
        if frac > 0.0:
            a[o, lo + 1] += frac
    return a


# ---------------------------------------------------------------------------
# The fused kernel: all three pyramid levels, grid over batch
# ---------------------------------------------------------------------------
def _edge_fused_kernel(x1_ref, x2_ref, x3_ref,
                       w11_ref, s1_ref, t1_ref,
                       w12_ref, s2_ref, t2_ref,
                       w13_ref, s3_ref, t3_ref,
                       wa1_ref, wa2_ref, wa3_ref,
                       awt2_ref, awt3_ref, bt_ref,
                       fea_ref, edge_ref, *, spatial, hmaps):
    (h, w), (h2, w2), (h3, w3) = spatial
    hmap2, hmap3 = hmaps
    mid = w11_ref.shape[0]
    out_fea = bt_ref.shape[0]

    def conv_stage(x_ref, w1_ref, s_ref, t_ref, wa_ref, hi, wi):
        """1x1 conv + folded BN, then 3x3 conv (conv4 with conv5 folded)."""
        mi = hi * wi

        # ---- 1x1 conv + folded BN:  f = (W1 @ x) * scale + shift ---------
        x = x_ref[...].astype(MXU_DTYPE)                          # (cin, mi)
        f = jnp.dot(w1_ref[...], x,
                    preferred_element_type=jnp.float32)           # (mid, mi)
        f = f * s_ref[...] + t_ref[...]                           # f32 epilogue
        f_bf = f.astype(MXU_DTYPE)                                # single cast

        # ---- 3x3 conv, padding=1, conv5 folded per level ------------------
        # Shift-the-result trick: one matmul gives every tap's per-pixel
        # contribution; the halo is applied to the tiny (out_fea, mi) tap
        # rows.  No im2col patches buffer, no shifted copies of f.
        u = jnp.dot(wa_ref[...], f_bf,
                    preferred_element_type=jnp.float32)           # (9*out, mi)
        pad = jnp.zeros((9 * out_fea, wi + 1), jnp.float32)
        up = jnp.concatenate([pad, u, pad], axis=1)               # lane halo
        xx = jax.lax.broadcasted_iota(jnp.int32, (1, mi), 1) % wi
        m_left = (xx >= 1).astype(jnp.float32)       # valid when dx == -1
        m_right = (xx < wi - 1).astype(jnp.float32)  # valid when dx == +1

        e = jnp.zeros((out_fea, mi), jnp.float32)
        tap = 0
        for dy in (-1, 0, 1):
            for dx in (-1, 0, 1):
                start = (wi + 1) + dy * wi + dx
                sh = up[tap * out_fea:(tap + 1) * out_fea, start:start + mi]
                if dx == -1:
                    sh = sh * m_left
                elif dx == 1:
                    sh = sh * m_right
                e = e + sh
                tap += 1
        return f, f_bf, e

    def upsample(cat_bf, awt_ref, hmap, hi, wi):
        """Separable align_corners=True bilinear (c, hi*wi) -> (c, h*w)."""
        # Width stage: one small bf16 MXU matmul per input row-block.
        wblks = [jnp.dot(cat_bf[:, r * wi:(r + 1) * wi], awt_ref[...],
                         preferred_element_type=jnp.float32)
                 for r in range(hi)]                              # hi x (c, w)
        # Height stage: static scalar-weighted row blends (VPU only).
        rows = []
        for lo, frac in hmap:
            if frac <= 0.0:
                rows.append(wblks[lo])
            elif frac >= 1.0:
                rows.append(wblks[lo + 1])
            else:
                rows.append((1.0 - frac) * wblks[lo] + frac * wblks[lo + 1])
        return jnp.concatenate(rows, axis=1)                      # (c, h*w)

    f1, _, e1 = conv_stage(x1_ref, w11_ref, s1_ref, t1_ref, wa1_ref, h, w)
    _, f2_bf, e2 = conv_stage(x2_ref, w12_ref, s2_ref, t2_ref, wa2_ref, h2, w2)
    _, f3_bf, e3 = conv_stage(x3_ref, w13_ref, s3_ref, t3_ref, wa3_ref, h3, w3)

    # Fuse features + edge logits along channels so levels 2/3 each run ONE
    # upsample pass (the 2-row edge matmuls ride along for free).
    cat2 = jnp.concatenate([f2_bf, e2.astype(MXU_DTYPE)], axis=0)  # (mid+out, m2)
    cat3 = jnp.concatenate([f3_bf, e3.astype(MXU_DTYPE)], axis=0)
    up2 = upsample(cat2, awt2_ref, hmap2, h2, w2)                  # (mid+out, h*w)
    up3 = upsample(cat3, awt3_ref, hmap3, h3, w3)

    # ---- outputs: already channel-first == NCHW once reshaped ------------
    fea_ref[0:mid, :] = f1.astype(fea_ref.dtype)
    fea_ref[mid:2 * mid, :] = up2[0:mid, :].astype(fea_ref.dtype)
    fea_ref[2 * mid:3 * mid, :] = up3[0:mid, :].astype(fea_ref.dtype)
    edge_ref[...] = (e1 + up2[mid:mid + out_fea, :] + up3[mid:mid + out_fea, :]
                     + bt_ref[...]).astype(edge_ref.dtype)


# ---------------------------------------------------------------------------
# Parameters: synthetic PyTorch-layout weights + kernel-ready preparation
# ---------------------------------------------------------------------------
def init_params(key, in_fea=(64, 128, 256), mid_fea=64, out_fea=2):
    """Deterministic synthetic parameters in the PyTorch layouts."""
    keys = iter(jax.random.split(key, 32))
    nrm = lambda k, shape, s=0.05: s * jax.random.normal(k, shape, jnp.float32)
    p = {}
    for i, cin in enumerate(in_fea, start=1):
        p[f"conv{i}_w"] = nrm(next(keys), (mid_fea, cin, 1, 1))
        p[f"bn{i}_gamma"] = 1.0 + 0.1 * jax.random.normal(next(keys), (mid_fea,), jnp.float32)
        p[f"bn{i}_beta"] = 0.1 * jax.random.normal(next(keys), (mid_fea,), jnp.float32)
        p[f"bn{i}_mean"] = 0.1 * jax.random.normal(next(keys), (mid_fea,), jnp.float32)
        p[f"bn{i}_var"] = jnp.abs(jax.random.normal(next(keys), (mid_fea,), jnp.float32)) + 0.5
    p["conv4_w"] = nrm(next(keys), (out_fea, mid_fea, 3, 3))
    p["conv4_b"] = nrm(next(keys), (out_fea,))
    p["conv5_w"] = nrm(next(keys), (out_fea, 3 * out_fea, 1, 1))
    p["conv5_b"] = nrm(next(keys), (out_fea,))
    return p


def prepare_params(raw, eps=1e-5):
    """Fold BN (inference mode) and conv5 into kernel-ready tensors."""
    # TODO(synk): training-mode BatchNorm (batch statistics) not implemented;
    # running statistics are folded into a per-channel affine (deploy mode).
    prep = {}
    for i in (1, 2, 3):
        w = raw[f"conv{i}_w"][:, :, 0, 0]                        # (mid, cin)
        scale = raw[f"bn{i}_gamma"] / jnp.sqrt(raw[f"bn{i}_var"] + eps)
        shift = raw[f"bn{i}_beta"] - raw[f"bn{i}_mean"] * scale
        prep[f"w{i}"] = w.astype(MXU_DTYPE)
        prep[f"s{i}"] = scale.reshape(-1, 1).astype(jnp.float32)
        prep[f"t{i}"] = shift.reshape(-1, 1).astype(jnp.float32)

    w4 = raw["conv4_w"]                                          # (out, mid, 3, 3)
    b4 = raw["conv4_b"]                                          # (out,)
    w5 = raw["conv5_w"][:, :, 0, 0]                              # (out, 3*out)
    b5 = raw["conv5_b"]                                          # (out,)
    out_fea, mid = w4.shape[0], w4.shape[1]

    bt = b5
    for i in (1, 2, 3):
        w5_blk = w5[:, (i - 1) * out_fea:i * out_fea]            # (out, out)
        # conv5 is 1x1 and everything between conv4 and conv5 is linear
        # (bilinear resize + concat), so fold it into conv4 per level.
        w4_eff = jnp.einsum("om,mckl->ockl", w5_blk, w4)         # (out, mid, 3, 3)
        # (ky, kx, out, mid) -> (9*out, mid): row tap*out + o, tap = ky*3 + kx
        wa = w4_eff.transpose(2, 3, 0, 1).reshape(9 * out_fea, mid)
        prep[f"wa{i}"] = wa.astype(MXU_DTYPE)
        bt = bt + w5_blk @ b4
    prep["bt"] = bt.reshape(-1, 1).astype(jnp.float32)           # (out, 1)
    return prep


# ---------------------------------------------------------------------------
# Forward
# ---------------------------------------------------------------------------
def edge_module_forward(params, x1_nchw, x2_nchw, x3_nchw, fea_dtype=jnp.float32):
    n, c1, h, w = x1_nchw.shape
    _, c2, h2, w2 = x2_nchw.shape
    _, c3, h3, w3 = x3_nchw.shape
    m1, m2, m3 = h * w, h2 * w2, h3 * w3
    mid = params["w1"].shape[0]
    out_fea = params["bt"].shape[0]

    # NCHW -> (N, C, H*W): metadata-only reshapes, no transposes anywhere.
    x1f = x1_nchw.reshape(n, c1, m1)
    x2f = x2_nchw.reshape(n, c2, m2)
    x3f = x3_nchw.reshape(n, c3, m3)

    # Separable upsample operands: small bf16 (w_in, w_out) width matrices and
    # static per-output-row (lo, frac) height tables baked into the kernel.
    awt2 = jnp.asarray(_interp_matrix_np(w, w2).T, dtype=MXU_DTYPE)  # (w2, w)
    awt3 = jnp.asarray(_interp_matrix_np(w, w3).T, dtype=MXU_DTYPE)  # (w3, w)
    hmap2 = _interp_pairs(h, h2)
    hmap3 = _interp_pairs(h, h3)

    kernel = functools.partial(
        _edge_fused_kernel,
        spatial=((h, w), (h2, w2), (h3, w3)),
        hmaps=(hmap2, hmap3))

    const2d = lambda a: pl.BlockSpec(a.shape, lambda b: (0, 0))

    # TODO(synk): further v7x-specific tuning not applied here: single-buffer
    # the constant operands (pipeline_mode=pl.Buffered(1)), add a spatial
    # "parallel" grid axis when n is small, and process several batch elements
    # per grid step / tile the lane dimension at production H*W.
    fea, edge = pl.pallas_call(
        kernel,
        grid=(n,),
        in_specs=[
            pl.BlockSpec((None, c1, m1), lambda b: (b, 0, 0)),
            pl.BlockSpec((None, c2, m2), lambda b: (b, 0, 0)),
            pl.BlockSpec((None, c3, m3), lambda b: (b, 0, 0)),
            const2d(params["w1"]), const2d(params["s1"]), const2d(params["t1"]),
            const2d(params["w2"]), const2d(params["s2"]), const2d(params["t2"]),
            const2d(params["w3"]), const2d(params["s3"]), const2d(params["t3"]),
            const2d(params["wa1"]), const2d(params["wa2"]), const2d(params["wa3"]),
            const2d(awt2), const2d(awt3), const2d(params["bt"]),
        ],
        out_specs=[
            pl.BlockSpec((None, 3 * mid, m1), lambda b: (b, 0, 0)),
            pl.BlockSpec((None, out_fea, m1), lambda b: (b, 0, 0)),
        ],
        out_shape=[
            jax.ShapeDtypeStruct((n, 3 * mid, m1), fea_dtype),
            jax.ShapeDtypeStruct((n, out_fea, m1), jnp.float32),
        ],
        compiler_params=pltpu.CompilerParams(
            dimension_semantics=("parallel",),
            vmem_limit_bytes=64 * 1024 * 1024),
    )(x1f, x2f, x3f,
      params["w1"], params["s1"], params["t1"],
      params["w2"], params["s2"], params["t2"],
      params["w3"], params["s3"], params["t3"],
      params["wa1"], params["wa2"], params["wa3"],
      awt2, awt3, params["bt"])

    # final free reshapes: outputs are already channel-first (NCHW)
    edge = edge.reshape(n, out_fea, h, w)
    edge_fea = fea.reshape(n, 3 * mid, h, w)
    return edge, edge_fea


# ---------------------------------------------------------------------------
# Pure-JAX f32 reference (inference-mode BN) for tolerance testing
# ---------------------------------------------------------------------------
def edge_module_ref(raw, x1, x2, x3, eps=1e-5):
    def conv1x1_bn(x, w, g, b, mu, var):
        y = jnp.einsum("oc,nchw->nohw", w[:, :, 0, 0], x)
        scale = g / jnp.sqrt(var + eps)
        shift = b - mu * scale
        return y * scale[None, :, None, None] + shift[None, :, None, None]

    def conv3x3(x, w, b):
        y = jax.lax.conv_general_dilated(
            x, w, (1, 1), "SAME", dimension_numbers=("NCHW", "OIHW", "NCHW"))
        return y + b[None, :, None, None]

    def upsample(x, ho, wo):
        ah = jnp.asarray(_interp_matrix_np(ho, x.shape[2]))
        aw = jnp.asarray(_interp_matrix_np(wo, x.shape[3]))
        y = jnp.einsum("oh,nchw->ncow", ah, x)
        return jnp.einsum("pw,ncow->ncop", aw, y)

    h, w = x1.shape[2], x1.shape[3]
    f1 = conv1x1_bn(x1, raw["conv1_w"], raw["bn1_gamma"], raw["bn1_beta"],
                    raw["bn1_mean"], raw["bn1_var"])
    f2 = conv1x1_bn(x2, raw["conv2_w"], raw["bn2_gamma"], raw["bn2_beta"],
                    raw["bn2_mean"], raw["bn2_var"])
    f3 = conv1x1_bn(x3, raw["conv3_w"], raw["bn3_gamma"], raw["bn3_beta"],
                    raw["bn3_mean"], raw["bn3_var"])
    e1 = conv3x3(f1, raw["conv4_w"], raw["conv4_b"])
    e2 = conv3x3(f2, raw["conv4_w"], raw["conv4_b"])
    e3 = conv3x3(f3, raw["conv4_w"], raw["conv4_b"])
    f2u, f3u = upsample(f2, h, w), upsample(f3, h, w)
    e2u, e3u = upsample(e2, h, w), upsample(e3, h, w)
    edge_cat = jnp.concatenate([e1, e2u, e3u], axis=1)
    edge = (jnp.einsum("oc,nchw->nohw", raw["conv5_w"][:, :, 0, 0], edge_cat)
            + raw["conv5_b"][None, :, None, None])
    edge_fea = jnp.concatenate([f1, f2u, f3u], axis=1)
    return edge, edge_fea


if __name__ == "__main__":
    key = jax.random.PRNGKey(0)
    k_in1, k_in2, k_in3, k_par = jax.random.split(key, 4)

    # in_fea=[64, 128, 256] pyramid with small spatial sizes.
    x1 = jax.random.normal(k_in1, (2, 64, 16, 16), jnp.float32)
    x2 = jax.random.normal(k_in2, (2, 128, 8, 8), jnp.float32)
    x3 = jax.random.normal(k_in3, (2, 256, 4, 4), jnp.float32)

    raw = init_params(k_par)
    params = prepare_params(raw)

    edge, edge_fea = edge_module_forward(params, x1, x2, x3)
    edge = jax.block_until_ready(edge)
    edge_fea = jax.block_until_ready(edge_fea)

    assert edge.shape == (2, 2, 16, 16), edge.shape
    assert edge_fea.shape == (2, 192, 16, 16), edge_fea.shape
    assert bool(jnp.all(jnp.isfinite(edge))) and bool(jnp.all(jnp.isfinite(edge_fea)))

    # Tolerance check vs the pure-JAX f32 reference (bf16 MXU operands in the
    # kernel give roughly 1e-2 relative deviation, well inside this margin).
    edge_ref, edge_fea_ref = edge_module_ref(raw, x1, x2, x3)

    def _close(a, b, atol=5e-2, rtol=5e-2):
        return bool(jnp.all(jnp.abs(a - b) <= atol + rtol * jnp.abs(b)))

    assert _close(edge, edge_ref), "edge mismatch vs reference"
    assert _close(edge_fea, edge_fea_ref), "edge_fea mismatch vs reference"

    print("KERNEL_OK")
</pallas_src>

<mosaic_0001>
module attributes {stable_mosaic.version = 11 : i64} {
  func.func @_edge_fused_kernel(%arg0: i32, %arg1: memref<1x64x256xf32, #tpu.memory_space<vmem>>, %arg2: memref<1x128x64xf32, #tpu.memory_space<vmem>>, %arg3: memref<1x256x16xf32, #tpu.memory_space<vmem>>, %arg4: memref<64x64xbf16, #tpu.memory_space<vmem>>, %arg5: memref<64x1xf32, #tpu.memory_space<vmem>>, %arg6: memref<64x1xf32, #tpu.memory_space<vmem>>, %arg7: memref<64x128xbf16, #tpu.memory_space<vmem>>, %arg8: memref<64x1xf32, #tpu.memory_space<vmem>>, %arg9: memref<64x1xf32, #tpu.memory_space<vmem>>, %arg10: memref<64x256xbf16, #tpu.memory_space<vmem>>, %arg11: memref<64x1xf32, #tpu.memory_space<vmem>>, %arg12: memref<64x1xf32, #tpu.memory_space<vmem>>, %arg13: memref<18x64xbf16, #tpu.memory_space<vmem>>, %arg14: memref<18x64xbf16, #tpu.memory_space<vmem>>, %arg15: memref<18x64xbf16, #tpu.memory_space<vmem>>, %arg16: memref<8x16xbf16, #tpu.memory_space<vmem>>, %arg17: memref<4x16xbf16, #tpu.memory_space<vmem>>, %arg18: memref<2x1xf32, #tpu.memory_space<vmem>>, %arg19: memref<1x192x256xf32, #tpu.memory_space<vmem>>, %arg20: memref<1x2x256xf32, #tpu.memory_space<vmem>>) attributes {dimension_semantics = [#tpu.dimension_semantics<parallel>], iteration_bounds = array<i64: 2>, scalar_prefetch = 0 : i64, scratch_operands = 0 : i64, tpu.core_type = #tpu.core_type<tc>, window_params = [{transform_indices = @transform_0, window_bounds = array<i64: 1, 64, 256>}, {transform_indices = @transform_1, window_bounds = array<i64: 1, 128, 64>}, {transform_indices = @transform_2, window_bounds = array<i64: 1, 256, 16>}, {pipeline_mode = #tpu.pipeline_mode<synchronous>, transform_indices = @transform_3, window_bounds = array<i64: 64, 64>}, {pipeline_mode = #tpu.pipeline_mode<synchronous>, transform_indices = @transform_4, window_bounds = array<i64: 64, 1>}, {pipeline_mode = #tpu.pipeline_mode<synchronous>, transform_indices = @transform_5, window_bounds = array<i64: 64, 1>}, {pipeline_mode = #tpu.pipeline_mode<synchronous>, transform_indices = @transform_6, window_bounds = array<i64: 64, 128>}, {pipeline_mode = #tpu.pipeline_mode<synchronous>, transform_indices = @transform_7, window_bounds = array<i64: 64, 1>}, {pipeline_mode = #tpu.pipeline_mode<synchronous>, transform_indices = @transform_8, window_bounds = array<i64: 64, 1>}, {pipeline_mode = #tpu.pipeline_mode<synchronous>, transform_indices = @transform_9, window_bounds = array<i64: 64, 256>}, {pipeline_mode = #tpu.pipeline_mode<synchronous>, transform_indices = @transform_10, window_bounds = array<i64: 64, 1>}, {pipeline_mode = #tpu.pipeline_mode<synchronous>, transform_indices = @transform_11, window_bounds = array<i64: 64, 1>}, {pipeline_mode = #tpu.pipeline_mode<synchronous>, transform_indices = @transform_12, window_bounds = array<i64: 18, 64>}, {pipeline_mode = #tpu.pipeline_mode<synchronous>, transform_indices = @transform_13, window_bounds = array<i64: 18, 64>}, {pipeline_mode = #tpu.pipeline_mode<synchronous>, transform_indices = @transform_14, window_bounds = array<i64: 18, 64>}, {pipeline_mode = #tpu.pipeline_mode<synchronous>, transform_indices = @transform_15, window_bounds = array<i64: 8, 16>}, {pipeline_mode = #tpu.pipeline_mode<synchronous>, transform_indices = @transform_16, window_bounds = array<i64: 4, 16>}, {pipeline_mode = #tpu.pipeline_mode<synchronous>, transform_indices = @transform_17, window_bounds = array<i64: 2, 1>}, {transform_indices = @transform_18, window_bounds = array<i64: 1, 192, 256>}, {transform_indices = @transform_19, window_bounds = array<i64: 1, 2, 256>}]} {
    %c0 = arith.constant 0 : index
    %c0_0 = arith.constant 0 : index
    %c0_1 = arith.constant 0 : index
    %0 = vector.load %arg1[%c0, %c0_0, %c0_1] : memref<1x64x256xf32, #tpu.memory_space<vmem>>, vector<1x64x256xf32>
    %1 = vector.shape_cast %0 : vector<1x64x256xf32> to vector<64x256xf32>
    %2 = arith.truncf %1 : vector<64x256xf32> to vector<64x256xbf16>
    %c0_2 = arith.constant 0 : index
    %c0_3 = arith.constant 0 : index
    %3 = vector.load %arg4[%c0_2, %c0_3] : memref<64x64xbf16, #tpu.memory_space<vmem>>, vector<64x64xbf16>
    %cst = arith.constant dense<0.000000e+00> : vector<64x256xf32>
    %4 = tpu.matmul %3, %2, %cst {dimension_numbers = #tpu.dot_dimension_numbers<[1], [0], [0], [1], [0, 0, 1, 1], [], []>} : vector<64x64xbf16>, vector<64x256xbf16>, vector<64x256xf32> -> vector<64x256xf32>
    %c0_4 = arith.constant 0 : index
    %c0_5 = arith.constant 0 : index
    %5 = vector.load %arg5[%c0_4, %c0_5] : memref<64x1xf32, #tpu.memory_space<vmem>>, vector<64x1xf32>
    %6 = vector.broadcast %5 : vector<64x1xf32> to vector<64x256xf32>
    %7 = arith.mulf %4, %6 : vector<64x256xf32>
    %c0_6 = arith.constant 0 : index
    %c0_7 = arith.constant 0 : index
    %8 = vector.load %arg6[%c0_6, %c0_7] : memref<64x1xf32, #tpu.memory_space<vmem>>, vector<64x1xf32>
    %9 = vector.broadcast %8 : vector<64x1xf32> to vector<64x256xf32>
    %10 = arith.addf %7, %9 : vector<64x256xf32>
    %11 = arith.truncf %10 : vector<64x256xf32> to vector<64x256xbf16>
    %c0_8 = arith.constant 0 : index
    %c0_9 = arith.constant 0 : index
    %12 = vector.load %arg13[%c0_8, %c0_9] : memref<18x64xbf16, #tpu.memory_space<vmem>>, vector<18x64xbf16>
    %cst_10 = arith.constant dense<0.000000e+00> : vector<18x256xf32>
    %13 = tpu.matmul %12, %11, %cst_10 {dimension_numbers = #tpu.dot_dimension_numbers<[1], [0], [0], [1], [0, 0, 1, 1], [], []>} : vector<18x64xbf16>, vector<64x256xbf16>, vector<18x256xf32> -> vector<18x256xf32>
    %cst_11 = arith.constant 0.000000e+00 : f32
    %14 = vector.broadcast %cst_11 : f32 to vector<18x17xf32>
    %15 = tpu.concatenate %14, %13, %14 in 1 : vector<18x17xf32>, vector<18x256xf32>, vector<18x17xf32> -> vector<18x290xf32>
    %16 = tpu.iota {dimensions = array<i32: 1>} : vector<1x256xi32>
    %c16_i32 = arith.constant 16 : i32
    %c0_i32 = arith.constant 0 : i32
    %17 = arith.cmpi eq, %c16_i32, %c0_i32 : i32
    %c1_i32 = arith.constant 1 : i32
    %18 = arith.select %17, %c1_i32, %c16_i32 : i32
    %19 = vector.broadcast %18 : i32 to vector<1x256xi32>
    %20 = arith.remsi %16, %19 : vector<1x256xi32>
    %c0_i32_12 = arith.constant 0 : i32
    %21 = vector.broadcast %c0_i32_12 : i32 to vector<1x256xi32>
    %22 = arith.cmpi ne, %20, %21 : vector<1x256xi32>
    %c0_i32_13 = arith.constant 0 : i32
    %23 = vector.broadcast %c0_i32_13 : i32 to vector<1x256xi32>
    %24 = arith.cmpi slt, %20, %23 : vector<1x256xi32>
    %c0_i32_14 = arith.constant 0 : i32
    %25 = arith.cmpi slt, %18, %c0_i32_14 : i32
    %26 = vector.broadcast %25 : i1 to vector<1x256xi1>
    %27 = vector.broadcast %26 : vector<1x256xi1> to vector<1x256xi1>
    %28 = arith.xori %24, %27 : vector<1x256xi1>
    %29 = arith.andi %28, %22 : vector<1x256xi1>
    %30 = vector.broadcast %18 : i32 to vector<1x256xi32>
    %31 = arith.addi %20, %30 : vector<1x256xi32>
    %32 = arith.select %29, %31, %20 : vector<1x256xi1>, vector<1x256xi32>
    %c1_i32_15 = arith.constant 1 : i32
    %33 = vector.broadcast %c1_i32_15 : i32 to vector<1x256xi32>
    %34 = arith.cmpi sge, %32, %33 : vector<1x256xi32>
    %35 = arith.extui %34 : vector<1x256xi1> to vector<1x256xi32>
    %36 = arith.sitofp %35 : vector<1x256xi32> to vector<1x256xf32>
    %c15_i32 = arith.constant 15 : i32
    %37 = vector.broadcast %c15_i32 : i32 to vector<1x256xi32>
    %38 = arith.cmpi slt, %32, %37 : vector<1x256xi32>
    %39 = arith.extui %38 : vector<1x256xi1> to vector<1x256xi32>
    %40 = arith.sitofp %39 : vector<1x256xi32> to vector<1x256xf32>
    %cst_16 = arith.constant 0.000000e+00 : f32
    %41 = vector.broadcast %cst_16 : f32 to vector<2x256xf32>
    %42 = vector.extract_strided_slice %15 {offsets = [0, 0], sizes = [2, 256], strides = [1, 1]} : vector<18x290xf32> to vector<2x256xf32>
    %43 = vector.broadcast %36 : vector<1x256xf32> to vector<2x256xf32>
    %44 = arith.mulf %42, %43 : vector<2x256xf32>
    %45 = arith.addf %41, %44 : vector<2x256xf32>
    %46 = vector.extract_strided_slice %15 {offsets = [2, 1], sizes = [2, 256], strides = [1, 1]} : vector<18x290xf32> to vector<2x256xf32>
    %47 = arith.addf %45, %46 : vector<2x256xf32>
    %48 = vector.extract_strided_slice %15 {offsets = [4, 2], sizes = [2, 256], strides = [1, 1]} : vector<18x290xf32> to vector<2x256xf32>
    %49 = vector.broadcast %40 : vector<1x256xf32> to vector<2x256xf32>
    %50 = arith.mulf %48, %49 : vector<2x256xf32>
    %51 = arith.addf %47, %50 : vector<2x256xf32>
    %52 = vector.extract_strided_slice %15 {offsets = [6, 16], sizes = [2, 256], strides = [1, 1]} : vector<18x290xf32> to vector<2x256xf32>
    %53 = vector.broadcast %36 : vector<1x256xf32> to vector<2x256xf32>
    %54 = arith.mulf %52, %53 : vector<2x256xf32>
    %55 = arith.addf %51, %54 : vector<2x256xf32>
    %56 = vector.extract_strided_slice %15 {offsets = [8, 17], sizes = [2, 256], strides = [1, 1]} : vector<18x290xf32> to vector<2x256xf32>
    %57 = arith.addf %55, %56 : vector<2x256xf32>
    %58 = vector.extract_strided_slice %15 {offsets = [10, 18], sizes = [2, 256], strides = [1, 1]} : vector<18x290xf32> to vector<2x256xf32>
    %59 = vector.broadcast %40 : vector<1x256xf32> to vector<2x256xf32>
    %60 = arith.mulf %58, %59 : vector<2x256xf32>
    %61 = arith.addf %57, %60 : vector<2x256xf32>
    %62 = vector.extract_strided_slice %15 {offsets = [12, 32], sizes = [2, 256], strides = [1, 1]} : vector<18x290xf32> to vector<2x256xf32>
    %63 = vector.broadcast %36 : vector<1x256xf32> to vector<2x256xf32>
    %64 = arith.mulf %62, %63 : vector<2x256xf32>
    %65 = arith.addf %61, %64 : vector<2x256xf32>
    %66 = vector.extract_strided_slice %15 {offsets = [14, 33], sizes = [2, 256], strides = [1, 1]} : vector<18x290xf32> to vector<2x256xf32>
    %67 = arith.addf %65, %66 : vector<2x256xf32>
    %68 = vector.extract_strided_slice %15 {offsets = [16, 34], sizes = [2, 256], strides = [1, 1]} : vector<18x290xf32> to vector<2x256xf32>
    %69 = vector.broadcast %40 : vector<1x256xf32> to vector<2x256xf32>
    %70 = arith.mulf %68, %69 : vector<2x256xf32>
    %71 = arith.addf %67, %70 : vector<2x256xf32>
    %c0_17 = arith.constant 0 : index
    %c0_18 = arith.constant 0 : index
    %c0_19 = arith.constant 0 : index
    %72 = vector.load %arg2[%c0_17, %c0_18, %c0_19] : memref<1x128x64xf32, #tpu.memory_space<vmem>>, vector<1x128x64xf32>
    %73 = vector.shape_cast %72 : vector<1x128x64xf32> to vector<128x64xf32>
    %74 = arith.truncf %73 : vector<128x64xf32> to vector<128x64xbf16>
    %c0_20 = arith.constant 0 : index
    %c0_21 = arith.constant 0 : index
    %75 = vector.load %arg7[%c0_20, %c0_21] : memref<64x128xbf16, #tpu.memory_space<vmem>>, vector<64x128xbf16>
    %cst_22 = arith.constant dense<0.000000e+00> : vector<64x64xf32>
    %76 = tpu.matmul %75, %74, %cst_22 {dimension_numbers = #tpu.dot_dimension_numbers<[1], [0], [0], [1], [0, 0, 1, 1], [], []>} : vector<64x128xbf16>, vector<128x64xbf16>, vector<64x64xf32> -> vector<64x64xf32>
    %c0_23 = arith.constant 0 : index
    %c0_24 = arith.constant 0 : index
    %77 = vector.load %arg8[%c0_23, %c0_24] : memref<64x1xf32, #tpu.memory_space<vmem>>, vector<64x1xf32>
    %78 = vector.broadcast %77 : vector<64x1xf32> to vector<64x64xf32>
    %79 = arith.mulf %76, %78 : vector<64x64xf32>
    %c0_25 = arith.constant 0 : index
    %c0_26 = arith.constant 0 : index
    %80 = vector.load %arg9[%c0_25, %c0_26] : memref<64x1xf32, #tpu.memory_space<vmem>>, vector<64x1xf32>
    %81 = vector.broadcast %80 : vector<64x1xf32> to vector<64x64xf32>
    %82 = arith.addf %79, %81 : vector<64x64xf32>
    %83 = arith.truncf %82 : vector<64x64xf32> to vector<64x64xbf16>
    %c0_27 = arith.constant 0 : index
    %c0_28 = arith.constant 0 : index
    %84 = vector.load %arg14[%c0_27, %c0_28] : memref<18x64xbf16, #tpu.memory_space<vmem>>, vector<18x64xbf16>
    %cst_29 = arith.constant dense<0.000000e+00> : vector<18x64xf32>
    %85 = tpu.matmul %84, %83, %cst_29 {dimension_numbers = #tpu.dot_dimension_numbers<[1], [0], [0], [1], [0, 0, 1, 1], [], []>} : vector<18x64xbf16>, vector<64x64xbf16>, vector<18x64xf32> -> vector<18x64xf32>
    %cst_30 = arith.constant 0.000000e+00 : f32
    %86 = vector.broadcast %cst_30 : f32 to vector<18x9xf32>
    %87 = tpu.concatenate %86, %85, %86 in 1 : vector<18x9xf32>, vector<18x64xf32>, vector<18x9xf32> -> vector<18x82xf32>
    %88 = tpu.iota {dimensions = array<i32: 1>} : vector<1x64xi32>
    %c8_i32 = arith.constant 8 : i32
    %c0_i32_31 = arith.constant 0 : i32
    %89 = arith.cmpi eq, %c8_i32, %c0_i32_31 : i32
    %c1_i32_32 = arith.constant 1 : i32
    %90 = arith.select %89, %c1_i32_32, %c8_i32 : i32
    %91 = vector.broadcast %90 : i32 to vector<1x64xi32>
    %92 = arith.remsi %88, %91 : vector<1x64xi32>
    %c0_i32_33 = arith.constant 0 : i32
    %93 = vector.broadcast %c0_i32_33 : i32 to vector<1x64xi32>
    %94 = arith.cmpi ne, %92, %93 : vector<1x64xi32>
    %c0_i32_34 = arith.constant 0 : i32
    %95 = vector.broadcast %c0_i32_34 : i32 to vector<1x64xi32>
    %96 = arith.cmpi slt, %92, %95 : vector<1x64xi32>
    %c0_i32_35 = arith.constant 0 : i32
    %97 = arith.cmpi slt, %90, %c0_i32_35 : i32
    %98 = vector.broadcast %97 : i1 to vector<1x64xi1>
    %99 = vector.broadcast %98 : vector<1x64xi1> to vector<1x64xi1>
    %100 = arith.xori %96, %99 : vector<1x64xi1>
    %101 = arith.andi %100, %94 : vector<1x64xi1>
    %102 = vector.broadcast %90 : i32 to vector<1x64xi32>
    %103 = arith.addi %92, %102 : vector<1x64xi32>
    %104 = arith.select %101, %103, %92 : vector<1x64xi1>, vector<1x64xi32>
    %c1_i32_36 = arith.constant 1 : i32
    %105 = vector.broadcast %c1_i32_36 : i32 to vector<1x64xi32>
    %106 = arith.cmpi sge, %104, %105 : vector<1x64xi32>
    %107 = arith.extui %106 : vector<1x64xi1> to vector<1x64xi32>
    %108 = arith.sitofp %107 : vector<1x64xi32> to vector<1x64xf32>
    %c7_i32 = arith.constant 7 : i32
    %109 = vector.broadcast %c7_i32 : i32 to vector<1x64xi32>
    %110 = arith.cmpi slt, %104, %109 : vector<1x64xi32>
    %111 = arith.extui %110 : vector<1x64xi1> to vector<1x64xi32>
    %112 = arith.sitofp %111 : vector<1x64xi32> to vector<1x64xf32>
    %cst_37 = arith.constant 0.000000e+00 : f32
    %113 = vector.broadcast %cst_37 : f32 to vector<2x64xf32>
    %114 = vector.extract_strided_slice %87 {offsets = [0, 0], sizes = [2, 64], strides = [1, 1]} : vector<18x82xf32> to vector<2x64xf32>
    %115 = vector.broadcast %108 : vector<1x64xf32> to vector<2x64xf32>
    %116 = arith.mulf %114, %115 : vector<2x64xf32>
    %117 = arith.addf %113, %116 : vector<2x64xf32>
    %118 = vector.extract_strided_slice %87 {offsets = [2, 1], sizes = [2, 64], strides = [1, 1]} : vector<18x82xf32> to vector<2x64xf32>
    %119 = arith.addf %117, %118 : vector<2x64xf32>
    %120 = vector.extract_strided_slice %87 {offsets = [4, 2], sizes = [2, 64], strides = [1, 1]} : vector<18x82xf32> to vector<2x64xf32>
    %121 = vector.broadcast %112 : vector<1x64xf32> to vector<2x64xf32>
    %122 = arith.mulf %120, %121 : vector<2x64xf32>
    %123 = arith.addf %119, %122 : vector<2x64xf32>
    %124 = vector.extract_strided_slice %87 {offsets = [6, 8], sizes = [2, 64], strides = [1, 1]} : vector<18x82xf32> to vector<2x64xf32>
    %125 = vector.broadcast %108 : vector<1x64xf32> to vector<2x64xf32>
    %126 = arith.mulf %124, %125 : vector<2x64xf32>
    %127 = arith.addf %123, %126 : vector<2x64xf32>
    %128 = vector.extract_strided_slice %87 {offsets = [8, 9], sizes = [2, 64], strides = [1, 1]} : vector<18x82xf32> to vector<2x64xf32>
    %129 = arith.addf %127, %128 : vector<2x64xf32>
    %130 = vector.extract_strided_slice %87 {offsets = [10, 10], sizes = [2, 64], strides = [1, 1]} : vector<18x82xf32> to vector<2x64xf32>
    %131 = vector.broadcast %112 : vector<1x64xf32> to vector<2x64xf32>
    %132 = arith.mulf %130, %131 : vector<2x64xf32>
    %133 = arith.addf %129, %132 : vector<2x64xf32>
    %134 = vector.extract_strided_slice %87 {offsets = [12, 16], sizes = [2, 64], strides = [1, 1]} : vector<18x82xf32> to vector<2x64xf32>
    %135 = vector.broadcast %108 : vector<1x64xf32> to vector<2x64xf32>
    %136 = arith.mulf %134, %135 : vector<2x64xf32>
    %137 = arith.addf %133, %136 : vector<2x64xf32>
    %138 = vector.extract_strided_slice %87 {offsets = [14, 17], sizes = [2, 64], strides = [1, 1]} : vector<18x82xf32> to vector<2x64xf32>
    %139 = arith.addf %137, %138 : vector<2x64xf32>
    %140 = vector.extract_strided_slice %87 {offsets = [16, 18], sizes = [2, 64], strides = [1, 1]} : vector<18x82xf32> to vector<2x64xf32>
    %141 = vector.broadcast %112 : vector<1x64xf32> to vector<2x64xf32>
    %142 = arith.mulf %140, %141 : vector<2x64xf32>
    %143 = arith.addf %139, %142 : vector<2x64xf32>
    %c0_38 = arith.constant 0 : index
    %c0_39 = arith.constant 0 : index
    %c0_40 = arith.constant 0 : index
    %144 = vector.load %arg3[%c0_38, %c0_39, %c0_40] : memref<1x256x16xf32, #tpu.memory_space<vmem>>, vector<1x256x16xf32>
    %145 = vector.shape_cast %144 : vector<1x256x16xf32> to vector<256x16xf32>
    %146 = arith.truncf %145 : vector<256x16xf32> to vector<256x16xbf16>
    %c0_41 = arith.constant 0 : index
    %c0_42 = arith.constant 0 : index
    %147 = vector.load %arg10[%c0_41, %c0_42] : memref<64x256xbf16, #tpu.memory_space<vmem>>, vector<64x256xbf16>
    %cst_43 = arith.constant dense<0.000000e+00> : vector<64x16xf32>
    %148 = tpu.matmul %147, %146, %cst_43 {dimension_numbers = #tpu.dot_dimension_numbers<[1], [0], [0], [1], [0, 0, 1, 1], [], []>} : vector<64x256xbf16>, vector<256x16xbf16>, vector<64x16xf32> -> vector<64x16xf32>
    %c0_44 = arith.constant 0 : index
    %c0_45 = arith.constant 0 : index
    %149 = vector.load %arg11[%c0_44, %c0_45] : memref<64x1xf32, #tpu.memory_space<vmem>>, vector<64x1xf32>
    %150 = vector.broadcast %149 : vector<64x1xf32> to vector<64x16xf32>
    %151 = arith.mulf %148, %150 : vector<64x16xf32>
    %c0_46 = arith.constant 0 : index
    %c0_47 = arith.constant 0 : index
    %152 = vector.load %arg12[%c0_46, %c0_47] : memref<64x1xf32, #tpu.memory_space<vmem>>, vector<64x1xf32>
    %153 = vector.broadcast %152 : vector<64x1xf32> to vector<64x16xf32>
    %154 = arith.addf %151, %153 : vector<64x16xf32>
    %155 = arith.truncf %154 : vector<64x16xf32> to vector<64x16xbf16>
    %c0_48 = arith.constant 0 : index
    %c0_49 = arith.constant 0 : index
    %156 = vector.load %arg15[%c0_48, %c0_49] : memref<18x64xbf16, #tpu.memory_space<vmem>>, vector<18x64xbf16>
    %cst_50 = arith.constant dense<0.000000e+00> : vector<18x16xf32>
    %157 = tpu.matmul %156, %155, %cst_50 {dimension_numbers = #tpu.dot_dimension_numbers<[1], [0], [0], [1], [0, 0, 1, 1], [], []>} : vector<18x64xbf16>, vector<64x16xbf16>, vector<18x16xf32> -> vector<18x16xf32>
    %cst_51 = arith.constant 0.000000e+00 : f32
    %158 = vector.broadcast %cst_51 : f32 to vector<18x5xf32>
    %159 = tpu.concatenate %158, %157, %158 in 1 : vector<18x5xf32>, vector<18x16xf32>, vector<18x5xf32> -> vector<18x26xf32>
    %160 = tpu.iota {dimensions = array<i32: 1>} : vector<1x16xi32>
    %c4_i32 = arith.constant 4 : i32
    %c0_i32_52 = arith.constant 0 : i32
    %161 = arith.cmpi eq, %c4_i32, %c0_i32_52 : i32
    %c1_i32_53 = arith.constant 1 : i32
    %162 = arith.select %161, %c1_i32_53, %c4_i32 : i32
    %163 = vector.broadcast %162 : i32 to vector<1x16xi32>
    %164 = arith.remsi %160, %163 : vector<1x16xi32>
    %c0_i32_54 = arith.constant 0 : i32
    %165 = vector.broadcast %c0_i32_54 : i32 to vector<1x16xi32>
    %166 = arith.cmpi ne, %164, %165 : vector<1x16xi32>
    %c0_i32_55 = arith.constant 0 : i32
    %167 = vector.broadcast %c0_i32_55 : i32 to vector<1x16xi32>
    %168 = arith.cmpi slt, %164, %167 : vector<1x16xi32>
    %c0_i32_56 = arith.constant 0 : i32
    %169 = arith.cmpi slt, %162, %c0_i32_56 : i32
    %170 = vector.broadcast %169 : i1 to vector<1x16xi1>
    %171 = vector.broadcast %170 : vector<1x16xi1> to vector<1x16xi1>
    %172 = arith.xori %168, %171 : vector<1x16xi1>
    %173 = arith.andi %172, %166 : vector<1x16xi1>
    %174 = vector.broadcast %162 : i32 to vector<1x16xi32>
    %175 = arith.addi %164, %174 : vector<1x16xi32>
    %176 = arith.select %173, %175, %164 : vector<1x16xi1>, vector<1x16xi32>
    %c1_i32_57 = arith.constant 1 : i32
    %177 = vector.broadcast %c1_i32_57 : i32 to vector<1x16xi32>
    %178 = arith.cmpi sge, %176, %177 : vector<1x16xi32>
    %179 = arith.extui %178 : vector<1x16xi1> to vector<1x16xi32>
    %180 = arith.sitofp %179 : vector<1x16xi32> to vector<1x16xf32>
    %c3_i32 = arith.constant 3 : i32
    %181 = vector.broadcast %c3_i32 : i32 to vector<1x16xi32>
    %182 = arith.cmpi slt, %176, %181 : vector<1x16xi32>
    %183 = arith.extui %182 : vector<1x16xi1> to vector<1x16xi32>
    %184 = arith.sitofp %183 : vector<1x16xi32> to vector<1x16xf32>
    %cst_58 = arith.constant 0.000000e+00 : f32
    %185 = vector.broadcast %cst_58 : f32 to vector<2x16xf32>
    %186 = vector.extract_strided_slice %159 {offsets = [0, 0], sizes = [2, 16], strides = [1, 1]} : vector<18x26xf32> to vector<2x16xf32>
    %187 = vector.broadcast %180 : vector<1x16xf32> to vector<2x16xf32>
    %188 = arith.mulf %186, %187 : vector<2x16xf32>
    %189 = arith.addf %185, %188 : vector<2x16xf32>
    %190 = vector.extract_strided_slice %159 {offsets = [2, 1], sizes = [2, 16], strides = [1, 1]} : vector<18x26xf32> to vector<2x16xf32>
    %191 = arith.addf %189, %190 : vector<2x16xf32>
    %192 = vector.extract_strided_slice %159 {offsets = [4, 2], sizes = [2, 16], strides = [1, 1]} : vector<18x26xf32> to vector<2x16xf32>
    %193 = vector.broadcast %184 : vector<1x16xf32> to vector<2x16xf32>
    %194 = arith.mulf %192, %193 : vector<2x16xf32>
    %195 = arith.addf %191, %194 : vector<2x16xf32>
    %196 = vector.extract_strided_slice %159 {offsets = [6, 4], sizes = [2, 16], strides = [1, 1]} : vector<18x26xf32> to vector<2x16xf32>
    %197 = vector.broadcast %180 : vector<1x16xf32> to vector<2x16xf32>
    %198 = arith.mulf %196, %197 : vector<2x16xf32>
    %199 = arith.addf %195, %198 : vector<2x16xf32>
    %200 = vector.extract_strided_slice %159 {offsets = [8, 5], sizes = [2, 16], strides = [1, 1]} : vector<18x26xf32> to vector<2x16xf32>
    %201 = arith.addf %199, %200 : vector<2x16xf32>
    %202 = vector.extract_strided_slice %159 {offsets = [10, 6], sizes = [2, 16], strides = [1, 1]} : vector<18x26xf32> to vector<2x16xf32>
    %203 = vector.broadcast %184 : vector<1x16xf32> to vector<2x16xf32>
    %204 = arith.mulf %202, %203 : vector<2x16xf32>
    %205 = arith.addf %201, %204 : vector<2x16xf32>
    %206 = vector.extract_strided_slice %159 {offsets = [12, 8], sizes = [2, 16], strides = [1, 1]} : vector<18x26xf32> to vector<2x16xf32>
    %207 = vector.broadcast %180 : vector<1x16xf32> to vector<2x16xf32>
    %208 = arith.mulf %206, %207 : vector<2x16xf32>
    %209 = arith.addf %205, %208 : vector<2x16xf32>
    %210 = vector.extract_strided_slice %159 {offsets = [14, 9], sizes = [2, 16], strides = [1, 1]} : vector<18x26xf32> to vector<2x16xf32>
    %211 = arith.addf %209, %210 : vector<2x16xf32>
    %212 = vector.extract_strided_slice %159 {offsets = [16, 10], sizes = [2, 16], strides = [1, 1]} : vector<18x26xf32> to vector<2x16xf32>
    %213 = vector.broadcast %184 : vector<1x16xf32> to vector<2x16xf32>
    %214 = arith.mulf %212, %213 : vector<2x16xf32>
    %215 = arith.addf %211, %214 : vector<2x16xf32>
    %216 = arith.truncf %143 : vector<2x64xf32> to vector<2x64xbf16>
    %217 = tpu.concatenate %83, %216 in 0 : vector<64x64xbf16>, vector<2x64xbf16> -> vector<66x64xbf16>
    %218 = arith.truncf %215 : vector<2x16xf32> to vector<2x16xbf16>
    %219 = tpu.concatenate %155, %218 in 0 : vector<64x16xbf16>, vector<2x16xbf16> -> vector<66x16xbf16>
    %220 = vector.extract_strided_slice %217 {offsets = [0, 0], sizes = [66, 8], strides = [1, 1]} : vector<66x64xbf16> to vector<66x8xbf16>
    %c0_59 = arith.constant 0 : index
    %c0_60 = arith.constant 0 : index
    %221 = vector.load %arg16[%c0_59, %c0_60] : memref<8x16xbf16, #tpu.memory_space<vmem>>, vector<8x16xbf16>
    %cst_61 = arith.constant dense<0.000000e+00> : vector<66x16xf32>
    %222 = tpu.matmul %220, %221, %cst_61 {dimension_numbers = #tpu.dot_dimension_numbers<[1], [0], [0], [1], [0, 0, 1, 1], [], []>} : vector<66x8xbf16>, vector<8x16xbf16>, vector<66x16xf32> -> vector<66x16xf32>
    %223 = vector.extract_strided_slice %217 {offsets = [0, 8], sizes = [66, 8], strides = [1, 1]} : vector<66x64xbf16> to vector<66x8xbf16>
    %c0_62 = arith.constant 0 : index
    %c0_63 = arith.constant 0 : index
    %224 = vector.load %arg16[%c0_62, %c0_63] : memref<8x16xbf16, #tpu.memory_space<vmem>>, vector<8x16xbf16>
    %cst_64 = arith.constant dense<0.000000e+00> : vector<66x16xf32>
    %225 = tpu.matmul %223, %224, %cst_64 {dimension_numbers = #tpu.dot_dimension_numbers<[1], [0], [0], [1], [0, 0, 1, 1], [], []>} : vector<66x8xbf16>, vector<8x16xbf16>, vector<66x16xf32> -> vector<66x16xf32>
    %226 = vector.extract_strided_slice %217 {offsets = [0, 16], sizes = [66, 8], strides = [1, 1]} : vector<66x64xbf16> to vector<66x8xbf16>
    %c0_65 = arith.constant 0 : index
    %c0_66 = arith.constant 0 : index
    %227 = vector.load %arg16[%c0_65, %c0_66] : memref<8x16xbf16, #tpu.memory_space<vmem>>, vector<8x16xbf16>
    %cst_67 = arith.constant dense<0.000000e+00> : vector<66x16xf32>
    %228 = tpu.matmul %226, %227, %cst_67 {dimension_numbers = #tpu.dot_dimension_numbers<[1], [0], [0], [1], [0, 0, 1, 1], [], []>} : vector<66x8xbf16>, vector<8x16xbf16>, vector<66x16xf32> -> vector<66x16xf32>
    %229 = vector.extract_strided_slice %217 {offsets = [0, 24], sizes = [66, 8], strides = [1, 1]} : vector<66x64xbf16> to vector<66x8xbf16>
    %c0_68 = arith.constant 0 : index
    %c0_69 = arith.constant 0 : index
    %230 = vector.load %arg16[%c0_68, %c0_69] : memref<8x16xbf16, #tpu.memory_space<vmem>>, vector<8x16xbf16>
    %cst_70 = arith.constant dense<0.000000e+00> : vector<66x16xf32>
    %231 = tpu.matmul %229, %230, %cst_70 {dimension_numbers = #tpu.dot_dimension_numbers<[1], [0], [0], [1], [0, 0, 1, 1], [], []>} : vector<66x8xbf16>, vector<8x16xbf16>, vector<66x16xf32> -> vector<66x16xf32>
    %232 = vector.extract_strided_slice %217 {offsets = [0, 32], sizes = [66, 8], strides = [1, 1]} : vector<66x64xbf16> to vector<66x8xbf16>
    %c0_71 = arith.constant 0 : index
    %c0_72 = arith.constant 0 : index
    %233 = vector.load %arg16[%c0_71, %c0_72] : memref<8x16xbf16, #tpu.memory_space<vmem>>, vector<8x16xbf16>
    %cst_73 = arith.constant dense<0.000000e+00> : vector<66x16xf32>
    %234 = tpu.matmul %232, %233, %cst_73 {dimension_numbers = #tpu.dot_dimension_numbers<[1], [0], [0], [1], [0, 0, 1, 1], [], []>} : vector<66x8xbf16>, vector<8x16xbf16>, vector<66x16xf32> -> vector<66x16xf32>
    %235 = vector.extract_strided_slice %217 {offsets = [0, 40], sizes = [66, 8], strides = [1, 1]} : vector<66x64xbf16> to vector<66x8xbf16>
    %c0_74 = arith.constant 0 : index
    %c0_75 = arith.constant 0 : index
    %236 = vector.load %arg16[%c0_74, %c0_75] : memref<8x16xbf16, #tpu.memory_space<vmem>>, vector<8x16xbf16>
    %cst_76 = arith.constant dense<0.000000e+00> : vector<66x16xf32>
    %237 = tpu.matmul %235, %236, %cst_76 {dimension_numbers = #tpu.dot_dimension_numbers<[1], [0], [0], [1], [0, 0, 1, 1], [], []>} : vector<66x8xbf16>, vector<8x16xbf16>, vector<66x16xf32> -> vector<66x16xf32>
    %238 = vector.extract_strided_slice %217 {offsets = [0, 48], sizes = [66, 8], strides = [1, 1]} : vector<66x64xbf16> to vector<66x8xbf16>
    %c0_77 = arith.constant 0 : index
    %c0_78 = arith.constant 0 : index
    %239 = vector.load %arg16[%c0_77, %c0_78] : memref<8x16xbf16, #tpu.memory_space<vmem>>, vector<8x16xbf16>
    %cst_79 = arith.constant dense<0.000000e+00> : vector<66x16xf32>
    %240 = tpu.matmul %238, %239, %cst_79 {dimension_numbers = #tpu.dot_dimension_numbers<[1], [0], [0], [1], [0, 0, 1, 1], [], []>} : vector<66x8xbf16>, vector<8x16xbf16>, vector<66x16xf32> -> vector<66x16xf32>
    %241 = vector.extract_strided_slice %217 {offsets = [0, 56], sizes = [66, 8], strides = [1, 1]} : vector<66x64xbf16> to vector<66x8xbf16>
    %c0_80 = arith.constant 0 : index
    %c0_81 = arith.constant 0 : index
    %242 = vector.load %arg16[%c0_80, %c0_81] : memref<8x16xbf16, #tpu.memory_space<vmem>>, vector<8x16xbf16>
    %cst_82 = arith.constant dense<0.000000e+00> : vector<66x16xf32>
    %243 = tpu.matmul %241, %242, %cst_82 {dimension_numbers = #tpu.dot_dimension_numbers<[1], [0], [0], [1], [0, 0, 1, 1], [], []>} : vector<66x8xbf16>, vector<8x16xbf16>, vector<66x16xf32> -> vector<66x16xf32>
    %cst_83 = arith.constant 0.533333361 : f32
    %244 = vector.broadcast %cst_83 : f32 to vector<66x16xf32>
    %245 = arith.mulf %244, %222 : vector<66x16xf32>
    %cst_84 = arith.constant 0.466666669 : f32
    %246 = vector.broadcast %cst_84 : f32 to vector<66x16xf32>
    %247 = arith.mulf %246, %225 : vector<66x16xf32>
    %248 = arith.addf %245, %247 : vector<66x16xf32>
    %cst_85 = arith.constant 0.0666666701 : f32
    %249 = vector.broadcast %cst_85 : f32 to vector<66x16xf32>
    %250 = arith.mulf %249, %222 : vector<66x16xf32>
    %cst_86 = arith.constant 0.933333337 : f32
    %251 = vector.broadcast %cst_86 : f32 to vector<66x16xf32>
    %252 = arith.mulf %251, %225 : vector<66x16xf32>
    %253 = arith.addf %250, %252 : vector<66x16xf32>
    %cst_87 = arith.constant 6.000000e-01 : f32
    %254 = vector.broadcast %cst_87 : f32 to vector<66x16xf32>
    %255 = arith.mulf %254, %225 : vector<66x16xf32>
    %cst_88 = arith.constant 4.000000e-01 : f32
    %256 = vector.broadcast %cst_88 : f32 to vector<66x16xf32>
    %257 = arith.mulf %256, %228 : vector<66x16xf32>
    %258 = arith.addf %255, %257 : vector<66x16xf32>
    %cst_89 = arith.constant 0.13333334 : f32
    %259 = vector.broadcast %cst_89 : f32 to vector<66x16xf32>
    %260 = arith.mulf %259, %225 : vector<66x16xf32>
    %cst_90 = arith.constant 0.866666674 : f32
    %261 = vector.broadcast %cst_90 : f32 to vector<66x16xf32>
    %262 = arith.mulf %261, %228 : vector<66x16xf32>
    %263 = arith.addf %260, %262 : vector<66x16xf32>
    %cst_91 = arith.constant 0.666666686 : f32
    %264 = vector.broadcast %cst_91 : f32 to vector<66x16xf32>
    %265 = arith.mulf %264, %228 : vector<66x16xf32>
    %cst_92 = arith.constant 0.333333343 : f32
    %266 = vector.broadcast %cst_92 : f32 to vector<66x16xf32>
    %267 = arith.mulf %266, %231 : vector<66x16xf32>
    %268 = arith.addf %265, %267 : vector<66x16xf32>
    %cst_93 = arith.constant 2.000000e-01 : f32
    %269 = vector.broadcast %cst_93 : f32 to vector<66x16xf32>
    %270 = arith.mulf %269, %228 : vector<66x16xf32>
    %cst_94 = arith.constant 8.000000e-01 : f32
    %271 = vector.broadcast %cst_94 : f32 to vector<66x16xf32>
    %272 = arith.mulf %271, %231 : vector<66x16xf32>
    %273 = arith.addf %270, %272 : vector<66x16xf32>
    %cst_95 = arith.constant 0.733333349 : f32
    %274 = vector.broadcast %cst_95 : f32 to vector<66x16xf32>
    %275 = arith.mulf %274, %231 : vector<66x16xf32>
    %cst_96 = arith.constant 0.266666681 : f32
    %276 = vector.broadcast %cst_96 : f32 to vector<66x16xf32>
    %277 = arith.mulf %276, %234 : vector<66x16xf32>
    %278 = arith.addf %275, %277 : vector<66x16xf32>
    %cst_97 = arith.constant 0.266666681 : f32
    %279 = vector.broadcast %cst_97 : f32 to vector<66x16xf32>
    %280 = arith.mulf %279, %231 : vector<66x16xf32>
    %cst_98 = arith.constant 0.733333349 : f32
    %281 = vector.broadcast %cst_98 : f32 to vector<66x16xf32>
    %282 = arith.mulf %281, %234 : vector<66x16xf32>
    %283 = arith.addf %280, %282 : vector<66x16xf32>
    %cst_99 = arith.constant 8.000000e-01 : f32
    %284 = vector.broadcast %cst_99 : f32 to vector<66x16xf32>
    %285 = arith.mulf %284, %234 : vector<66x16xf32>
    %cst_100 = arith.constant 2.000000e-01 : f32
    %286 = vector.broadcast %cst_100 : f32 to vector<66x16xf32>
    %287 = arith.mulf %286, %237 : vector<66x16xf32>
    %288 = arith.addf %285, %287 : vector<66x16xf32>
    %cst_101 = arith.constant 0.333333343 : f32
    %289 = vector.broadcast %cst_101 : f32 to vector<66x16xf32>
    %290 = arith.mulf %289, %234 : vector<66x16xf32>
    %cst_102 = arith.constant 0.666666686 : f32
    %291 = vector.broadcast %cst_102 : f32 to vector<66x16xf32>
    %292 = arith.mulf %291, %237 : vector<66x16xf32>
    %293 = arith.addf %290, %292 : vector<66x16xf32>
    %cst_103 = arith.constant 0.866666674 : f32
    %294 = vector.broadcast %cst_103 : f32 to vector<66x16xf32>
    %295 = arith.mulf %294, %237 : vector<66x16xf32>
    %cst_104 = arith.constant 0.13333334 : f32
    %296 = vector.broadcast %cst_104 : f32 to vector<66x16xf32>
    %297 = arith.mulf %296, %240 : vector<66x16xf32>
    %298 = arith.addf %295, %297 : vector<66x16xf32>
    %cst_105 = arith.constant 4.000000e-01 : f32
    %299 = vector.broadcast %cst_105 : f32 to vector<66x16xf32>
    %300 = arith.mulf %299, %237 : vector<66x16xf32>
    %cst_106 = arith.constant 6.000000e-01 : f32
    %301 = vector.broadcast %cst_106 : f32 to vector<66x16xf32>
    %302 = arith.mulf %301, %240 : vector<66x16xf32>
    %303 = arith.addf %300, %302 : vector<66x16xf32>
    %cst_107 = arith.constant 0.933333337 : f32
    %304 = vector.broadcast %cst_107 : f32 to vector<66x16xf32>
    %305 = arith.mulf %304, %240 : vector<66x16xf32>
    %cst_108 = arith.constant 0.0666666701 : f32
    %306 = vector.broadcast %cst_108 : f32 to vector<66x16xf32>
    %307 = arith.mulf %306, %243 : vector<66x16xf32>
    %308 = arith.addf %305, %307 : vector<66x16xf32>
    %cst_109 = arith.constant 0.466666669 : f32
    %309 = vector.broadcast %cst_109 : f32 to vector<66x16xf32>
    %310 = arith.mulf %309, %240 : vector<66x16xf32>
    %cst_110 = arith.constant 0.533333361 : f32
    %311 = vector.broadcast %cst_110 : f32 to vector<66x16xf32>
    %312 = arith.mulf %311, %243 : vector<66x16xf32>
    %313 = arith.addf %310, %312 : vector<66x16xf32>
    %314 = tpu.concatenate %222, %248, %253, %258, %263, %268, %273, %278, %283, %288, %293, %298, %303, %308, %313, %243 in 1 : vector<66x16xf32>, vector<66x16xf32>, vector<66x16xf32>, vector<66x16xf32>, vector<66x16xf32>, vector<66x16xf32>, vector<66x16xf32>, vector<66x16xf32>, vector<66x16xf32>, vector<66x16xf32>, vector<66x16xf32>, vector<66x16xf32>, vector<66x16xf32>, vector<66x16xf32>, vector<66x16xf32>, vector<66x16xf32> -> vector<66x256xf32>
    %315 = vector.extract_strided_slice %219 {offsets = [0, 0], sizes = [66, 4], strides = [1, 1]} : vector<66x16xbf16> to vector<66x4xbf16>
    %c0_111 = arith.constant 0 : index
    %c0_112 = arith.constant 0 : index
    %316 = vector.load %arg17[%c0_111, %c0_112] : memref<4x16xbf16, #tpu.memory_space<vmem>>, vector<4x16xbf16>
    %cst_113 = arith.constant dense<0.000000e+00> : vector<66x16xf32>
    %317 = tpu.matmul %315, %316, %cst_113 {dimension_numbers = #tpu.dot_dimension_numbers<[1], [0], [0], [1], [0, 0, 1, 1], [], []>} : vector<66x4xbf16>, vector<4x16xbf16>, vector<66x16xf32> -> vector<66x16xf32>
    %318 = vector.extract_strided_slice %219 {offsets = [0, 4], sizes = [66, 4], strides = [1, 1]} : vector<66x16xbf16> to vector<66x4xbf16>
    %c0_114 = arith.constant 0 : index
    %c0_115 = arith.constant 0 : index
    %319 = vector.load %arg17[%c0_114, %c0_115] : memref<4x16xbf16, #tpu.memory_space<vmem>>, vector<4x16xbf16>
    %cst_116 = arith.constant dense<0.000000e+00> : vector<66x16xf32>
    %320 = tpu.matmul %318, %319, %cst_116 {dimension_numbers = #tpu.dot_dimension_numbers<[1], [0], [0], [1], [0, 0, 1, 1], [], []>} : vector<66x4xbf16>, vector<4x16xbf16>, vector<66x16xf32> -> vector<66x16xf32>
    %321 = vector.extract_strided_slice %219 {offsets = [0, 8], sizes = [66, 4], strides = [1, 1]} : vector<66x16xbf16> to vector<66x4xbf16>
    %c0_117 = arith.constant 0 : index
    %c0_118 = arith.constant 0 : index
    %322 = vector.load %arg17[%c0_117, %c0_118] : memref<4x16xbf16, #tpu.memory_space<vmem>>, vector<4x16xbf16>
    %cst_119 = arith.constant dense<0.000000e+00> : vector<66x16xf32>
    %323 = tpu.matmul %321, %322, %cst_119 {dimension_numbers = #tpu.dot_dimension_numbers<[1], [0], [0], [1], [0, 0, 1, 1], [], []>} : vector<66x4xbf16>, vector<4x16xbf16>, vector<66x16xf32> -> vector<66x16xf32>
    %324 = vector.extract_strided_slice %219 {offsets = [0, 12], sizes = [66, 4], strides = [1, 1]} : vector<66x16xbf16> to vector<66x4xbf16>
    %c0_120 = arith.constant 0 : index
    %c0_121 = arith.constant 0 : index
    %325 = vector.load %arg17[%c0_120, %c0_121] : memref<4x16xbf16, #tpu.memory_space<vmem>>, vector<4x16xbf16>
    %cst_122 = arith.constant dense<0.000000e+00> : vector<66x16xf32>
    %326 = tpu.matmul %324, %325, %cst_122 {dimension_numbers = #tpu.dot_dimension_numbers<[1], [0], [0], [1], [0, 0, 1, 1], [], []>} : vector<66x4xbf16>, vector<4x16xbf16>, vector<66x16xf32> -> vector<66x16xf32>
    %cst_123 = arith.constant 8.000000e-01 : f32
    %327 = vector.broadcast %cst_123 : f32 to vector<66x16xf32>
    %328 = arith.mulf %327, %317 : vector<66x16xf32>
    %cst_124 = arith.constant 2.000000e-01 : f32
    %329 = vector.broadcast %cst_124 : f32 to vector<66x16xf32>
    %330 = arith.mulf %329, %320 : vector<66x16xf32>
    %331 = arith.addf %328, %330 : vector<66x16xf32>
    %cst_125 = arith.constant 6.000000e-01 : f32
    %332 = vector.broadcast %cst_125 : f32 to vector<66x16xf32>
    %333 = arith.mulf %332, %317 : vector<66x16xf32>
    %cst_126 = arith.constant 4.000000e-01 : f32
    %334 = vector.broadcast %cst_126 : f32 to vector<66x16xf32>
    %335 = arith.mulf %334, %320 : vector<66x16xf32>
    %336 = arith.addf %333, %335 : vector<66x16xf32>
    %cst_127 = arith.constant 4.000000e-01 : f32
    %337 = vector.broadcast %cst_127 : f32 to vector<66x16xf32>
    %338 = arith.mulf %337, %317 : vector<66x16xf32>
    %cst_128 = arith.constant 6.000000e-01 : f32
    %339 = vector.broadcast %cst_128 : f32 to vector<66x16xf32>
    %340 = arith.mulf %339, %320 : vector<66x16xf32>
    %341 = arith.addf %338, %340 : vector<66x16xf32>
    %cst_129 = arith.constant 2.000000e-01 : f32
    %342 = vector.broadcast %cst_129 : f32 to vector<66x16xf32>
    %343 = arith.mulf %342, %317 : vector<66x16xf32>
    %cst_130 = arith.constant 8.000000e-01 : f32
    %344 = vector.broadcast %cst_130 : f32 to vector<66x16xf32>
    %345 = arith.mulf %344, %320 : vector<66x16xf32>
    %346 = arith.addf %343, %345 : vector<66x16xf32>
    %cst_131 = arith.constant 8.000000e-01 : f32
    %347 = vector.broadcast %cst_131 : f32 to vector<66x16xf32>
    %348 = arith.mulf %347, %320 : vector<66x16xf32>
    %cst_132 = arith.constant 2.000000e-01 : f32
    %349 = vector.broadcast %cst_132 : f32 to vector<66x16xf32>
    %350 = arith.mulf %349, %323 : vector<66x16xf32>
    %351 = arith.addf %348, %350 : vector<66x16xf32>
    %cst_133 = arith.constant 6.000000e-01 : f32
    %352 = vector.broadcast %cst_133 : f32 to vector<66x16xf32>
    %353 = arith.mulf %352, %320 : vector<66x16xf32>
    %cst_134 = arith.constant 4.000000e-01 : f32
    %354 = vector.broadcast %cst_134 : f32 to vector<66x16xf32>
    %355 = arith.mulf %354, %323 : vector<66x16xf32>
    %356 = arith.addf %353, %355 : vector<66x16xf32>
    %cst_135 = arith.constant 4.000000e-01 : f32
    %357 = vector.broadcast %cst_135 : f32 to vector<66x16xf32>
    %358 = arith.mulf %357, %320 : vector<66x16xf32>
    %cst_136 = arith.constant 6.000000e-01 : f32
    %359 = vector.broadcast %cst_136 : f32 to vector<66x16xf32>
    %360 = arith.mulf %359, %323 : vector<66x16xf32>
    %361 = arith.addf %358, %360 : vector<66x16xf32>
    %cst_137 = arith.constant 2.000000e-01 : f32
    %362 = vector.broadcast %cst_137 : f32 to vector<66x16xf32>
    %363 = arith.mulf %362, %320 : vector<66x16xf32>
    %cst_138 = arith.constant 8.000000e-01 : f32
    %364 = vector.broadcast %cst_138 : f32 to vector<66x16xf32>
    %365 = arith.mulf %364, %323 : vector<66x16xf32>
    %366 = arith.addf %363, %365 : vector<66x16xf32>
    %cst_139 = arith.constant 8.000000e-01 : f32
    %367 = vector.broadcast %cst_139 : f32 to vector<66x16xf32>
    %368 = arith.mulf %367, %323 : vector<66x16xf32>
    %cst_140 = arith.constant 2.000000e-01 : f32
    %369 = vector.broadcast %cst_140 : f32 to vector<66x16xf32>
    %370 = arith.mulf %369, %326 : vector<66x16xf32>
    %371 = arith.addf %368, %370 : vector<66x16xf32>
    %cst_141 = arith.constant 6.000000e-01 : f32
    %372 = vector.broadcast %cst_141 : f32 to vector<66x16xf32>
    %373 = arith.mulf %372, %323 : vector<66x16xf32>
    %cst_142 = arith.constant 4.000000e-01 : f32
    %374 = vector.broadcast %cst_142 : f32 to vector<66x16xf32>
    %375 = arith.mulf %374, %326 : vector<66x16xf32>
    %376 = arith.addf %373, %375 : vector<66x16xf32>
    %cst_143 = arith.constant 4.000000e-01 : f32
    %377 = vector.broadcast %cst_143 : f32 to vector<66x16xf32>
    %378 = arith.mulf %377, %323 : vector<66x16xf32>
    %cst_144 = arith.constant 6.000000e-01 : f32
    %379 = vector.broadcast %cst_144 : f32 to vector<66x16xf32>
    %380 = arith.mulf %379, %326 : vector<66x16xf32>
    %381 = arith.addf %378, %380 : vector<66x16xf32>
    %cst_145 = arith.constant 2.000000e-01 : f32
    %382 = vector.broadcast %cst_145 : f32 to vector<66x16xf32>
    %383 = arith.mulf %382, %323 : vector<66x16xf32>
    %cst_146 = arith.constant 8.000000e-01 : f32
    %384 = vector.broadcast %cst_146 : f32 to vector<66x16xf32>
    %385 = arith.mulf %384, %326 : vector<66x16xf32>
    %386 = arith.addf %383, %385 : vector<66x16xf32>
    %387 = tpu.concatenate %317, %331, %336, %341, %346, %320, %351, %356, %361, %366, %323, %371, %376, %381, %386, %326 in 1 : vector<66x16xf32>, vector<66x16xf32>, vector<66x16xf32>, vector<66x16xf32>, vector<66x16xf32>, vector<66x16xf32>, vector<66x16xf32>, vector<66x16xf32>, vector<66x16xf32>, vector<66x16xf32>, vector<66x16xf32>, vector<66x16xf32>, vector<66x16xf32>, vector<66x16xf32>, vector<66x16xf32>, vector<66x16xf32> -> vector<66x256xf32>
    %c0_147 = arith.constant 0 : index
    %c0_148 = arith.constant 0 : index
    %c0_149 = arith.constant 0 : index
    %388 = vector.load %arg19[%c0_147, %c0_148, %c0_149] : memref<1x192x256xf32, #tpu.memory_space<vmem>>, vector<1x64x256xf32>
    %389 = vector.shape_cast %388 : vector<1x64x256xf32> to vector<64x256xf32>
    %390 = vector.shape_cast %10 : vector<64x256xf32> to vector<1x64x256xf32>
    tpu.vector_store %arg19[%c0_147, %c0_148, %c0_149], %390 {strides = array<i32>} : memref<1x192x256xf32, #tpu.memory_space<vmem>>, vector<1x64x256xf32>,
    %391 = vector.extract_strided_slice %314 {offsets = [0, 0], sizes = [64, 256], strides = [1, 1]} : vector<66x256xf32> to vector<64x256xf32>
    %c0_150 = arith.constant 0 : index
    %c64 = arith.constant 64 : index
    %c0_151 = arith.constant 0 : index
    %392 = vector.load %arg19[%c0_150, %c64, %c0_151] : memref<1x192x256xf32, #tpu.memory_space<vmem>>, vector<1x64x256xf32>
    %393 = vector.shape_cast %392 : vector<1x64x256xf32> to vector<64x256xf32>
    %394 = vector.shape_cast %391 : vector<64x256xf32> to vector<1x64x256xf32>
    tpu.vector_store %arg19[%c0_150, %c64, %c0_151], %394 {strides = array<i32>} : memref<1x192x256xf32, #tpu.memory_space<vmem>>, vector<1x64x256xf32>,
    %395 = vector.extract_strided_slice %387 {offsets = [0, 0], sizes = [64, 256], strides = [1, 1]} : vector<66x256xf32> to vector<64x256xf32>
    %c0_152 = arith.constant 0 : index
    %c128 = arith.constant 128 : index
    %c0_153 = arith.constant 0 : index
    %396 = vector.load %arg19[%c0_152, %c128, %c0_153] : memref<1x192x256xf32, #tpu.memory_space<vmem>>, vector<1x64x256xf32>
    %397 = vector.shape_cast %396 : vector<1x64x256xf32> to vector<64x256xf32>
    %398 = vector.shape_cast %395 : vector<64x256xf32> to vector<1x64x256xf32>
    tpu.vector_store %arg19[%c0_152, %c128, %c0_153], %398 {strides = array<i32>} : memref<1x192x256xf32, #tpu.memory_space<vmem>>, vector<1x64x256xf32>,
    %399 = vector.extract_strided_slice %314 {offsets = [64, 0], sizes = [2, 256], strides = [1, 1]} : vector<66x256xf32> to vector<2x256xf32>
    %400 = arith.addf %71, %399 : vector<2x256xf32>
    %401 = vector.extract_strided_slice %387 {offsets = [64, 0], sizes = [2, 256], strides = [1, 1]} : vector<66x256xf32> to vector<2x256xf32>
    %402 = arith.addf %400, %401 : vector<2x256xf32>
    %c0_154 = arith.constant 0 : index
    %c0_155 = arith.constant 0 : index
    %403 = vector.load %arg18[%c0_154, %c0_155] : memref<2x1xf32, #tpu.memory_space<vmem>>, vector<2x1xf32>
    %404 = vector.broadcast %403 : vector<2x1xf32> to vector<2x256xf32>
    %405 = arith.addf %402, %404 : vector<2x256xf32>
    %c0_156 = arith.constant 0 : index
    %c0_157 = arith.constant 0 : index
    %c0_158 = arith.constant 0 : index
    %406 = vector.load %arg20[%c0_156, %c0_157, %c0_158] : memref<1x2x256xf32, #tpu.memory_space<vmem>>, vector<1x2x256xf32>
    %407 = vector.shape_cast %406 : vector<1x2x256xf32> to vector<2x256xf32>
    %408 = vector.shape_cast %405 : vector<2x256xf32> to vector<1x2x256xf32>
    tpu.vector_store %arg20[%c0_156, %c0_157, %c0_158], %408 {strides = array<i32>} : memref<1x2x256xf32, #tpu.memory_space<vmem>>, vector<1x2x256xf32>,
    return
  }
  func.func @transform_0(%arg0: i32) -> (i32, i32, i32) {
    %c0_i32 = arith.constant 0 : i32
    %c0_i32_0 = arith.constant 0 : i32
    %c0_i32_1 = arith.constant 0 : i32
    return %arg0, %c0_i32, %c0_i32_0 : i32, i32, i32
  }
  func.func @transform_1(%arg0: i32) -> (i32, i32, i32) {
    %c0_i32 = arith.constant 0 : i32
    %c0_i32_0 = arith.constant 0 : i32
    %c0_i32_1 = arith.constant 0 : i32
    return %arg0, %c0_i32, %c0_i32_0 : i32, i32, i32
  }
  func.func @transform_2(%arg0: i32) -> (i32, i32, i32) {
    %c0_i32 = arith.constant 0 : i32
    %c0_i32_0 = arith.constant 0 : i32
    %c0_i32_1 = arith.constant 0 : i32
    return %arg0, %c0_i32, %c0_i32_0 : i32, i32, i32
  }
  func.func @transform_3(%arg0: i32) -> (i32, i32) {
    %c0_i32 = arith.constant 0 : i32
    %c0_i32_0 = arith.constant 0 : i32
    %c0_i32_1 = arith.constant 0 : i32
    return %c0_i32, %c0_i32_0 : i32, i32
  }
  func.func @transform_4(%arg0: i32) -> (i32, i32) {
    %c0_i32 = arith.constant 0 : i32
    %c0_i32_0 = arith.constant 0 : i32
    %c0_i32_1 = arith.constant 0 : i32
    return %c0_i32, %c0_i32_0 : i32, i32
  }
  func.func @transform_5(%arg0: i32) -> (i32, i32) {
    %c0_i32 = arith.constant 0 : i32
    %c0_i32_0 = arith.constant 0 : i32
    %c0_i32_1 = arith.constant 0 : i32
    return %c0_i32, %c0_i32_0 : i32, i32
  }
  func.func @transform_6(%arg0: i32) -> (i32, i32) {
    %c0_i32 = arith.constant 0 : i32
    %c0_i32_0 = arith.constant 0 : i32
    %c0_i32_1 = arith.constant 0 : i32
    return %c0_i32, %c0_i32_0 : i32, i32
  }
  func.func @transform_7(%arg0: i32) -> (i32, i32) {
    %c0_i32 = arith.constant 0 : i32
    %c0_i32_0 = arith.constant 0 : i32
    %c0_i32_1 = arith.constant 0 : i32
    return %c0_i32, %c0_i32_0 : i32, i32
  }
  func.func @transform_8(%arg0: i32) -> (i32, i32) {
    %c0_i32 = arith.constant 0 : i32
    %c0_i32_0 = arith.constant 0 : i32
    %c0_i32_1 = arith.constant 0 : i32
    return %c0_i32, %c0_i32_0 : i32, i32
  }
  func.func @transform_9(%arg0: i32) -> (i32, i32) {
    %c0_i32 = arith.constant 0 : i32
    %c0_i32_0 = arith.constant 0 : i32
    %c0_i32_1 = arith.constant 0 : i32
    return %c0_i32, %c0_i32_0 : i32, i32
  }
  func.func @transform_10(%arg0: i32) -> (i32, i32) {
    %c0_i32 = arith.constant 0 : i32
    %c0_i32_0 = arith.constant 0 : i32
    %c0_i32_1 = arith.constant 0 : i32
    return %c0_i32, %c0_i32_0 : i32, i32
  }
  func.func @transform_11(%arg0: i32) -> (i32, i32) {
    %c0_i32 = arith.constant 0 : i32
    %c0_i32_0 = arith.constant 0 : i32
    %c0_i32_1 = arith.constant 0 : i32
    return %c0_i32, %c0_i32_0 : i32, i32
  }
  func.func @transform_12(%arg0: i32) -> (i32, i32) {
    %c0_i32 = arith.constant 0 : i32
    %c0_i32_0 = arith.constant 0 : i32
    %c0_i32_1 = arith.constant 0 : i32
    return %c0_i32, %c0_i32_0 : i32, i32
  }
  func.func @transform_13(%arg0: i32) -> (i32, i32) {
    %c0_i32 = arith.constant 0 : i32
    %c0_i32_0 = arith.constant 0 : i32
    %c0_i32_1 = arith.constant 0 : i32
    return %c0_i32, %c0_i32_0 : i32, i32
  }
  func.func @transform_14(%arg0: i32) -> (i32, i32) {
    %c0_i32 = arith.constant 0 : i32
    %c0_i32_0 = arith.constant 0 : i32
    %c0_i32_1 = arith.constant 0 : i32
    return %c0_i32, %c0_i32_0 : i32, i32
  }
  func.func @transform_15(%arg0: i32) -> (i32, i32) {
    %c0_i32 = arith.constant 0 : i32
    %c0_i32_0 = arith.constant 0 : i32
    %c0_i32_1 = arith.constant 0 : i32
    return %c0_i32, %c0_i32_0 : i32, i32
  }
  func.func @transform_16(%arg0: i32) -> (i32, i32) {
    %c0_i32 = arith.constant 0 : i32
    %c0_i32_0 = arith.constant 0 : i32
    %c0_i32_1 = arith.constant 0 : i32
    return %c0_i32, %c0_i32_0 : i32, i32
  }
  func.func @transform_17(%arg0: i32) -> (i32, i32) {
    %c0_i32 = arith.constant 0 : i32
    %c0_i32_0 = arith.constant 0 : i32
    %c0_i32_1 = arith.constant 0 : i32
    return %c0_i32, %c0_i32_0 : i32, i32
  }
  func.func @transform_18(%arg0: i32) -> (i32, i32, i32) {
    %c0_i32 = arith.constant 0 : i32
    %c0_i32_0 = arith.constant 0 : i32
    %c0_i32_1 = arith.constant 0 : i32
    return %arg0, %c0_i32, %c0_i32_0 : i32, i32, i32
  }
  func.func @transform_19(%arg0: i32) -> (i32, i32, i32) {
    %c0_i32 = arith.constant 0 : i32
    %c0_i32_0 = arith.constant 0 : i32
    %c0_i32_1 = arith.constant 0 : i32
    return %arg0, %c0_i32, %c0_i32_0 : i32, i32, i32
  }
}

</mosaic_0001>

<llo_original>
// kernel: tpu_custom_call.1
$region0: #{tpu_custom_call.1}
  #allocation0 [shape = 'u32[]', space=smem, size = 0x4, offset = 0x4, fixed_abs, tag = 'smem constant byte address 0x4 - core index']
  #allocation1 [shape = 'u32[144,128]{1,0:T(1,128)}', space=vmem, size = 0x12000, scoped, tag = 'internal scratch']
  %s0 = inlined_call_operand.hbm [shape: f32[2,64,256], index: 0, kind: input, shape index: {}]
  %s1 = inlined_call_operand.hbm [shape: f32[2,128,64], index: 1, kind: input, shape index: {}]
  %s2 = inlined_call_operand.hbm [shape: f32[2,256,16], index: 2, kind: input, shape index: {}]
  %s3 = inlined_call_operand.hbm [shape: bf16[64,64], index: 3, kind: input, shape index: {}]
  %s4 = inlined_call_operand.hbm [shape: f32[64,1], index: 4, kind: input, shape index: {}]
  %s5 = inlined_call_operand.hbm [shape: f32[64,1], index: 5, kind: input, shape index: {}]
  %s6 = inlined_call_operand.hbm [shape: bf16[64,128], index: 6, kind: input, shape index: {}]
  %s7 = inlined_call_operand.hbm [shape: f32[64,1], index: 7, kind: input, shape index: {}]
  %s8 = inlined_call_operand.hbm [shape: f32[64,1], index: 8, kind: input, shape index: {}]
  %s9 = inlined_call_operand.hbm [shape: bf16[64,256], index: 9, kind: input, shape index: {}]
  %s10 = inlined_call_operand.hbm [shape: f32[64,1], index: 10, kind: input, shape index: {}]
  %s11 = inlined_call_operand.hbm [shape: f32[64,1], index: 11, kind: input, shape index: {}]
  %s12 = inlined_call_operand.hbm [shape: bf16[18,64], index: 12, kind: input, shape index: {}]
  %s13 = inlined_call_operand.hbm [shape: bf16[18,64], index: 13, kind: input, shape index: {}]
  %s14 = inlined_call_operand.hbm [shape: bf16[18,64], index: 14, kind: input, shape index: {}]
  %s15 = inlined_call_operand.hbm [shape: bf16[8,16], index: 15, kind: input, shape index: {}]
  %s16 = inlined_call_operand.hbm [shape: bf16[4,16], index: 16, kind: input, shape index: {}]
  %s17 = inlined_call_operand.hbm [shape: f32[2,1], index: 17, kind: input, shape index: {}]
  %s18 = inlined_call_operand.hbm [shape: f32[2,192,256], index: 18, kind: output, shape index: {0}]
  %s19 = inlined_call_operand.hbm [shape: f32[2,2,256], index: 19, kind: output, shape index: {1}]
  %20 = xla_tuple %s18, %s19
  %s21 = sld [smem:[#allocation0]]
  $region185: #{tpu_custom_call.1} parent=0
    _
  %s23 = ssub.s32 1, %s21
  %s24 = scalar_select 0, %s23, %s21
  $region1: #{tpu_custom_call.1} parent=0
    #allocation2 [shape = 'u8[131072]{0}', space=vmem, size = 0x20000, scoped, tag = 'input window, operand 0']
    #allocation3 [shape = 's32[2]{0}', space=sflag, size = 0x8, scoped, tag = 'scoped memory for tpu_custom_call.1']
    #allocation4 [shape = 's32[2]{0}', space=sflag, size = 0x8, scoped, tag = 'scoped memory for tpu_custom_call.1']
    #allocation5 [shape = 'u8[131072]{0}', space=vmem, size = 0x20000, scoped, tag = 'input window, operand 1']
    #allocation6 [shape = 's32[2]{0}', space=sflag, size = 0x8, scoped, tag = 'scoped memory for tpu_custom_call.1']
    #allocation7 [shape = 'u8[262144]{0}', space=vmem, size = 0x40000, scoped, tag = 'input window, operand 2']
    #allocation8 [shape = 'u8[16384]{0}', space=vmem, size = 0x4000, scoped, tag = 'input window, operand 3, single buffered']
    #allocation9 [shape = 's32[1]{0}', space=sflag, size = 0x4, scoped, tag = 'scoped memory for tpu_custom_call.1']
    #allocation10 [shape = 'u8[32768]{0}', space=vmem, size = 0x8000, scoped, tag = 'input window, operand 4, single buffered']
    #allocation11 [shape = 'u8[32768]{0}', space=vmem, size = 0x8000, scoped, tag = 'input window, operand 5, single buffered']
    #allocation12 [shape = 's32[1]{0}', space=sflag, size = 0x4, scoped, tag = 'scoped memory for tpu_custom_call.1']
    #allocation13 [shape = 'u8[16384]{0}', space=vmem, size = 0x4000, scoped, tag = 'input window, operand 6, single buffered']
    #allocation14 [shape = 'u8[32768]{0}', space=vmem, size = 0x8000, scoped, tag = 'input window, operand 7, single buffered']
    #allocation15 [shape = 's32[1]{0}', space=sflag, size = 0x4, scoped, tag = 'scoped memory for tpu_custom_call.1']
    #allocation16 [shape = 'u8[32768]{0}', space=vmem, size = 0x8000, scoped, tag = 'input window, operand 8, single buffered']
    #allocation17 [shape = 'u8[32768]{0}', space=vmem, size = 0x8000, scoped, tag = 'input window, operand 9, single buffered']
    #allocation18 [shape = 's32[1]{0}', space=sflag, size = 0x4, scoped, tag = 'scoped memory for tpu_custom_call.1']
    #allocation19 [shape = 'u8[32768]{0}', space=vmem, size = 0x8000, scoped, tag = 'input window, operand 10, single buffered']
    #allocation20 [shape = 'u8[32768]{0}', space=vmem, size = 0x8000, scoped, tag = 'input window, operand 11, single buffered']
    #allocation21 [shape = 's32[1]{0}', space=sflag, size = 0x4, scoped, tag = 'scoped memory for tpu_custom_call.1']
    #allocation22 [shape = 'u8[6144]{0}', space=vmem, size = 0x1800, scoped, tag = 'input window, operand 12, single buffered']
    #allocation23 [shape = 'u8[6144]{0}', space=vmem, size = 0x1800, scoped, tag = 'input window, operand 13, single buffered']
    #allocation24 [shape = 's32[1]{0}', space=sflag, size = 0x4, scoped, tag = 'scoped memory for tpu_custom_call.1']
    #allocation25 [shape = 'u8[6144]{0}', space=vmem, size = 0x1800, scoped, tag = 'input window, operand 14, single buffered']
    #allocation26 [shape = 'u8[2048]{0}', space=vmem, size = 0x800, scoped, tag = 'input window, operand 15, single buffered']
    #allocation27 [shape = 's32[1]{0}', space=sflag, size = 0x4, scoped, tag = 'scoped memory for tpu_custom_call.1']
    #allocation28 [shape = 'u8[1024]{0}', space=vmem, size = 0x400, scoped, tag = 'input window, operand 16, single buffered']
    #allocation29 [shape = 'u8[1024]{0}', space=vmem, size = 0x400, scoped, tag = 'input window, operand 17, single buffered']
    #allocation30 [shape = 's32[1]{0}', space=sflag, size = 0x4, scoped, tag = 'scoped memory for tpu_custom_call.1']
    #allocation31 [shape = 'u8[393216]{0}', space=vmem, size = 0x60000, scoped, tag = 'output window, operand 0']
    #allocation32 [shape = 'u8[4096]{0}', space=vmem, size = 0x1000, scoped, tag = 'output window, operand 1']
    #allocation33 [shape = 's32[2]{0}', space=sflag, size = 0x8, scoped, tag = 'scoped memory for tpu_custom_call.1']
    %25 = vsyncpa [#allocation3], 0
    %s26 = scalar_lea.sflag [#allocation3], 1
    %27 = vsyncpa %s26, 0
    %28 = vsyncpa [#allocation6], 0
    %s29 = scalar_lea.sflag [#allocation6], 1
    %30 = vsyncpa %s29, 0
    %31 = vsyncpa [#allocation9], 0
    %32 = vsyncpa [#allocation12], 0
    %33 = vsyncpa [#allocation15], 0
    %34 = vsyncpa [#allocation18], 0
    %35 = vsyncpa [#allocation21], 0
    %36 = vsyncpa [#allocation24], 0
    %37 = vsyncpa [#allocation27], 0
    %38 = vsyncpa [#allocation30], 0
    %39 = vsyncpa [#allocation4], 0
    %s40 = scalar_lea.sflag [#allocation4], 1
    %41 = vsyncpa %s40, 0
    %42 = vsyncpa [#allocation33], 0
    %s43 = scalar_lea.sflag [#allocation33], 1
    %44 = vsyncpa %s43, 0
    loop: start=0, step=1, limit=4
    $region2: #{tpu_custom_call.1} parent=1 // loop_pre_header
      _
    $region3: #{tpu_custom_call.1} parent=1 // loop_header
      %s46 = sphi 0, %s50
      %p47 = scmp.ge.s32.totalorder %s46, 4
      %s56 = sphi 0, %s58
      %s59 = sphi 0, %s56
      %s60 = sphi 0, %s59
      %s76 = sphi 0, %s60
      %s82 = sphi 0, %s84
      %s85 = sphi 0, %s82
      %s86 = sphi 0, %s85
      %s102 = sphi 0, %s86
      %s108 = sphi 0, %s110
      %s111 = sphi 0, %s108
      %s112 = sphi 0, %s111
      %s128 = sphi 0, %s112
      %s132 = sphi 0, %s132
      %s134 = sphi 0, %s132
      %s135 = sphi 0, %s134
      %s149 = sphi 0, %s135
      %s153 = sphi 0, %s153
      %s155 = sphi 0, %s153
      %s156 = sphi 0, %s155
      %s170 = sphi 0, %s156
      %s174 = sphi 0, %s174
      %s176 = sphi 0, %s174
      %s177 = sphi 0, %s176
      %s191 = sphi 0, %s177
      %s195 = sphi 0, %s195
      %s197 = sphi 0, %s195
      %s198 = sphi 0, %s197
      %s212 = sphi 0, %s198
      %s216 = sphi 0, %s216
      %s218 = sphi 0, %s216
      %s219 = sphi 0, %s218
      %s233 = sphi 0, %s219
      %s237 = sphi 0, %s237
      %s239 = sphi 0, %s237
      %s240 = sphi 0, %s239
      %s254 = sphi 0, %s240
      %s258 = sphi 0, %s258
      %s260 = sphi 0, %s258
      %s261 = sphi 0, %s260
      %s275 = sphi 0, %s261
      %s279 = sphi 0, %s279
      %s281 = sphi 0, %s279
      %s282 = sphi 0, %s281
      %s296 = sphi 0, %s282
      %s300 = sphi 0, %s300
      %s302 = sphi 0, %s300
      %s303 = sphi 0, %s302
      %s317 = sphi 0, %s303
      %s321 = sphi 0, %s321
      %s323 = sphi 0, %s321
      %s324 = sphi 0, %s323
      %s338 = sphi 0, %s324
      %s342 = sphi 0, %s342
      %s344 = sphi 0, %s342
      %s345 = sphi 0, %s344
      %s359 = sphi 0, %s345
      %s363 = sphi 0, %s363
      %s365 = sphi 0, %s363
      %s366 = sphi 0, %s365
      %s380 = sphi 0, %s366
      %s384 = sphi 0, %s384
      %s386 = sphi 0, %s384
      %s387 = sphi 0, %s386
      %s401 = sphi 0, %s387
      %s405 = sphi 0, %s405
      %s407 = sphi 0, %s405
      %s408 = sphi 0, %s407
      %s422 = sphi 0, %s408
      %s426 = sphi 0, %s426
      %s428 = sphi 0, %s426
      %s429 = sphi 0, %s428
      %s443 = sphi 0, %s429
      %s449 = sphi 0, %s451
      %s452 = sphi 0, %s449
      %s453 = sphi 0, %s452
      %s469 = sphi 0, %s453
      %s475 = sphi 0, %s477
      %s478 = sphi 0, %s475
      %s479 = sphi 0, %s478
      %s495 = sphi 0, %s479
    $region4: #{tpu_custom_call.1} parent=1 // loop_header_branch
      %49 = sbr.rel (%p47) target = $region8
    $region5: #{tpu_custom_call.1} parent=1 // loop_body
      %s51 = ssub.s32 %s46, 1
      %s52 = ssub.s32 %s46, 2
      %s53 = sadd.s32 %s46, 1
      %s54 = ssub.s32 %s46, %s53
      %p55 = scmp.eq.s32.totalorder %s54, 0
      %s57 = sadd.s32 %s56, 1
      %s58 = scalar_select %p55, %s56, %s57
      %p61 = pneg %p55
      %p62 = scmp.eq.s32.totalorder %s46, 1
      %p63 = por %p61, %p62
      %p64 = scmp.ne.s32.totalorder %s56, %s59
      %p65 = scmp.eq.s32.totalorder %s46, 0
      %p66 = por %p64, %p65
      %p67 = scmp.ne.s32.totalorder %s56, %s59
      %p68 = scmp.eq.s32.totalorder %s51, 1
      %p69 = por %p67, %p68
      %p70 = scmp.ne.s32.totalorder %s59, %s60
      %p71 = scmp.eq.s32.totalorder %s51, 0
      %p72 = por %p70, %p71
      %p73 = scmp.ne.s32.totalorder %s59, %s60
      %p74 = scmp.eq.s32.totalorder %s52, 1
      %p75 = por %p73, %p74
      %p77 = scmp.ne.s32.totalorder %s60, %s76
      %p78 = scmp.eq.s32.totalorder %s52, 0
      %p79 = por %p77, %p78
      %s80 = ssub.s32 %s46, %s53
      %p81 = scmp.eq.s32.totalorder %s80, 0
      %s83 = sadd.s32 %s82, 1
      %s84 = scalar_select %p81, %s82, %s83
      %p87 = pneg %p81
      %p88 = scmp.eq.s32.totalorder %s46, 1
      %p89 = por %p87, %p88
      %p90 = scmp.ne.s32.totalorder %s82, %s85
      %p91 = scmp.eq.s32.totalorder %s46, 0
      %p92 = por %p90, %p91
      %p93 = scmp.ne.s32.totalorder %s82, %s85
      %p94 = scmp.eq.s32.totalorder %s51, 1
      %p95 = por %p93, %p94
      %p96 = scmp.ne.s32.totalorder %s85, %s86
      %p97 = scmp.eq.s32.totalorder %s51, 0
      %p98 = por %p96, %p97
      %p99 = scmp.ne.s32.totalorder %s85, %s86
      %p100 = scmp.eq.s32.totalorder %s52, 1
      %p101 = por %p99, %p100
      %p103 = scmp.ne.s32.totalorder %s86, %s102
      %p104 = scmp.eq.s32.totalorder %s52, 0
      %p105 = por %p103, %p104
      %s106 = ssub.s32 %s46, %s53
      %p107 = scmp.eq.s32.totalorder %s106, 0
      %s109 = sadd.s32 %s108, 1
      %s110 = scalar_select %p107, %s108, %s109
      %p113 = pneg %p107
      %p114 = scmp.eq.s32.totalorder %s46, 1
      %p115 = por %p113, %p114
      %p116 = scmp.ne.s32.totalorder %s108, %s111
      %p117 = scmp.eq.s32.totalorder %s46, 0
      %p118 = por %p116, %p117
      %p119 = scmp.ne.s32.totalorder %s108, %s111
      %p120 = scmp.eq.s32.totalorder %s51, 1
      %p121 = por %p119, %p120
      %p122 = scmp.ne.s32.totalorder %s111, %s112
      %p123 = scmp.eq.s32.totalorder %s51, 0
      %p124 = por %p122, %p123
      %p125 = scmp.ne.s32.totalorder %s111, %s112
      %p126 = scmp.eq.s32.totalorder %s52, 1
      %p127 = por %p125, %p126
      %p129 = scmp.ne.s32.totalorder %s112, %s128
      %p130 = scmp.eq.s32.totalorder %s52, 0
      %p131 = por %p129, %p130
      %s133 = sadd.s32 %s132, 1
      %p136 = scmp.eq.s32.totalorder %s46, 1
      %p137 = scmp.ne.s32.totalorder %s132, %s134
      %p138 = scmp.eq.s32.totalorder %s46, 0
      %p139 = por %p137, %p138
      %p140 = scmp.ne.s32.totalorder %s132, %s134
      %p141 = scmp.eq.s32.totalorder %s51, 1
      %p142 = por %p140, %p141
      %p143 = scmp.ne.s32.totalorder %s134, %s135
      %p144 = scmp.eq.s32.totalorder %s51, 0
      %p145 = por %p143, %p144
      %p146 = scmp.ne.s32.totalorder %s134, %s135
      %p147 = scmp.eq.s32.totalorder %s52, 1
      %p148 = por %p146, %p147
      %p150 = scmp.ne.s32.totalorder %s135, %s149
      %p151 = scmp.eq.s32.totalorder %s52, 0
      %p152 = por %p150, %p151
      %s154 = sadd.s32 %s153, 1
      %p157 = scmp.eq.s32.totalorder %s46, 1
      %p158 = scmp.ne.s32.totalorder %s153, %s155
      %p159 = scmp.eq.s32.totalorder %s46, 0
      %p160 = por %p158, %p159
      %p161 = scmp.ne.s32.totalorder %s153, %s155
      %p162 = scmp.eq.s32.totalorder %s51, 1
      %p163 = por %p161, %p162
      %p164 = scmp.ne.s32.totalorder %s155, %s156
      %p165 = scmp.eq.s32.totalorder %s51, 0
      %p166 = por %p164, %p165
      %p167 = scmp.ne.s32.totalorder %s155, %s156
      %p168 = scmp.eq.s32.totalorder %s52, 1
      %p169 = por %p167, %p168
      %p171 = scmp.ne.s32.totalorder %s156, %s170
      %p172 = scmp.eq.s32.totalorder %s52, 0
      %p173 = por %p171, %p172
      %s175 = sadd.s32 %s174, 1
      %p178 = scmp.eq.s32.totalorder %s46, 1
      %p179 = scmp.ne.s32.totalorder %s174, %s176
      %p180 = scmp.eq.s32.totalorder %s46, 0
      %p181 = por %p179, %p180
      %p182 = scmp.ne.s32.totalorder %s174, %s176
      %p183 = scmp.eq.s32.totalorder %s51, 1
      %p184 = por %p182, %p183
      %p185 = scmp.ne.s32.totalorder %s176, %s177
      %p186 = scmp.eq.s32.totalorder %s51, 0
      %p187 = por %p185, %p186
      %p188 = scmp.ne.s32.totalorder %s176, %s177
      %p189 = scmp.eq.s32.totalorder %s52, 1
      %p190 = por %p188, %p189
      %p192 = scmp.ne.s32.totalorder %s177, %s191
      %p193 = scmp.eq.s32.totalorder %s52, 0
      %p194 = por %p192, %p193
      %s196 = sadd.s32 %s195, 1
      %p199 = scmp.eq.s32.totalorder %s46, 1
      %p200 = scmp.ne.s32.totalorder %s195, %s197
      %p201 = scmp.eq.s32.totalorder %s46, 0
      %p202 = por %p200, %p201
      %p203 = scmp.ne.s32.totalorder %s195, %s197
      %p204 = scmp.eq.s32.totalorder %s51, 1
      %p205 = por %p203, %p204
      %p206 = scmp.ne.s32.totalorder %s197, %s198
      %p207 = scmp.eq.s32.totalorder %s51, 0
      %p208 = por %p206, %p207
      %p209 = scmp.ne.s32.totalorder %s197, %s198
      %p210 = scmp.eq.s32.totalorder %s52, 1
      %p211 = por %p209, %p210
      %p213 = scmp.ne.s32.totalorder %s198, %s212
      %p214 = scmp.eq.s32.totalorder %s52, 0
      %p215 = por %p213, %p214
      %s217 = sadd.s32 %s216, 1
      %p220 = scmp.eq.s32.totalorder %s46, 1
      %p221 = scmp.ne.s32.totalorder %s216, %s218
      %p222 = scmp.eq.s32.totalorder %s46, 0
      %p223 = por %p221, %p222
      %p224 = scmp.ne.s32.totalorder %s216, %s218
      %p225 = scmp.eq.s32.totalorder %s51, 1
      %p226 = por %p224, %p225
      %p227 = scmp.ne.s32.totalorder %s218, %s219
      %p228 = scmp.eq.s32.totalorder %s51, 0
      %p229 = por %p227, %p228
      %p230 = scmp.ne.s32.totalorder %s218, %s219
      %p231 = scmp.eq.s32.totalorder %s52, 1
      %p232 = por %p230, %p231
      %p234 = scmp.ne.s32.totalorder %s219, %s233
      %p235 = scmp.eq.s32.totalorder %s52, 0
      %p236 = por %p234, %p235
      %s238 = sadd.s32 %s237, 1
      %p241 = scmp.eq.s32.totalorder %s46, 1
      %p242 = scmp.ne.s32.totalorder %s237, %s239
      %p243 = scmp.eq.s32.totalorder %s46, 0
      %p244 = por %p242, %p243
      %p245 = scmp.ne.s32.totalorder %s237, %s239
      %p246 = scmp.eq.s32.totalorder %s51, 1
      %p247 = por %p245, %p246
      %p248 = scmp.ne.s32.totalorder %s239, %s240
      %p249 = scmp.eq.s32.totalorder %s51, 0
      %p250 = por %p248, %p249
      %p251 = scmp.ne.s32.totalorder %s239, %s240
      %p252 = scmp.eq.s32.totalorder %s52, 1
      %p253 = por %p251, %p252
      %p255 = scmp.ne.s32.totalorder %s240, %s254
      %p256 = scmp.eq.s32.totalorder %s52, 0
      %p257 = por %p255, %p256
      %s259 = sadd.s32 %s258, 1
      %p262 = scmp.eq.s32.totalorder %s46, 1
      %p263 = scmp.ne.s32.totalorder %s258, %s260
      %p264 = scmp.eq.s32.totalorder %s46, 0
      %p265 = por %p263, %p264
      %p266 = scmp.ne.s32.totalorder %s258, %s260
      %p267 = scmp.eq.s32.totalorder %s51, 1
      %p268 = por %p266, %p267
      %p269 = scmp.ne.s32.totalorder %s260, %s261
      %p270 = scmp.eq.s32.totalorder %s51, 0
      %p271 = por %p269, %p270
      %p272 = scmp.ne.s32.totalorder %s260, %s261
      %p273 = scmp.eq.s32.totalorder %s52, 1
      %p274 = por %p272, %p273
      %p276 = scmp.ne.s32.totalorder %s261, %s275
      %p277 = scmp.eq.s32.totalorder %s52, 0
      %p278 = por %p276, %p277
      %s280 = sadd.s32 %s279, 1
      %p283 = scmp.eq.s32.totalorder %s46, 1
      %p284 = scmp.ne.s32.totalorder %s279, %s281
      %p285 = scmp.eq.s32.totalorder %s46, 0
      %p286 = por %p284, %p285
      %p287 = scmp.ne.s32.totalorder %s279, %s281
      %p288 = scmp.eq.s32.totalorder %s51, 1
      %p289 = por %p287, %p288
      %p290 = scmp.ne.s32.totalorder %s281, %s282
      %p291 = scmp.eq.s32.totalorder %s51, 0
      %p292 = por %p290, %p291
      %p293 = scmp.ne.s32.totalorder %s281, %s282
      %p294 = scmp.eq.s32.totalorder %s52, 1
      %p295 = por %p293, %p294
      %p297 = scmp.ne.s32.totalorder %s282, %s296
      %p298 = scmp.eq.s32.totalorder %s52, 0
      %p299 = por %p297, %p298
      %s301 = sadd.s32 %s300, 1
      %p304 = scmp.eq.s32.totalorder %s46, 1
      %p305 = scmp.ne.s32.totalorder %s300, %s302
      %p306 = scmp.eq.s32.totalorder %s46, 0
      %p307 = por %p305, %p306
      %p308 = scmp.ne.s32.totalorder %s300, %s302
      %p309 = scmp.eq.s32.totalorder %s51, 1
      %p310 = por %p308, %p309
      %p311 = scmp.ne.s32.totalorder %s302, %s303
      %p312 = scmp.eq.s32.totalorder %s51, 0
      %p313 = por %p311, %p312
      %p314 = scmp.ne.s32.totalorder %s302, %s303
      %p315 = scmp.eq.s32.totalorder %s52, 1
      %p316 = por %p314, %p315
      %p318 = scmp.ne.s32.totalorder %s303, %s317
      %p319 = scmp.eq.s32.totalorder %s52, 0
      %p320 = por %p318, %p319
      %s322 = sadd.s32 %s321, 1
      %p325 = scmp.eq.s32.totalorder %s46, 1
      %p326 = scmp.ne.s32.totalorder %s321, %s323
      %p327 = scmp.eq.s32.totalorder %s46, 0
      %p328 = por %p326, %p327
      %p329 = scmp.ne.s32.totalorder %s321, %s323
      %p330 = scmp.eq.s32.totalorder %s51, 1
      %p331 = por %p329, %p330
      %p332 = scmp.ne.s32.totalorder %s323, %s324
      %p333 = scmp.eq.s32.totalorder %s51, 0
      %p334 = por %p332, %p333
      %p335 = scmp.ne.s32.totalorder %s323, %s324
      %p336 = scmp.eq.s32.totalorder %s52, 1
      %p337 = por %p335, %p336
      %p339 = scmp.ne.s32.totalorder %s324, %s338
      %p340 = scmp.eq.s32.totalorder %s52, 0
      %p341 = por %p339, %p340
      %s343 = sadd.s32 %s342, 1
      %p346 = scmp.eq.s32.totalorder %s46, 1
      %p347 = scmp.ne.s32.totalorder %s342, %s344
      %p348 = scmp.eq.s32.totalorder %s46, 0
      %p349 = por %p347, %p348
      %p350 = scmp.ne.s32.totalorder %s342, %s344
      %p351 = scmp.eq.s32.totalorder %s51, 1
      %p352 = por %p350, %p351
      %p353 = scmp.ne.s32.totalorder %s344, %s345
      %p354 = scmp.eq.s32.totalorder %s51, 0
      %p355 = por %p353, %p354
      %p356 = scmp.ne.s32.totalorder %s344, %s345
      %p357 = scmp.eq.s32.totalorder %s52, 1
      %p358 = por %p356, %p357
      %p360 = scmp.ne.s32.totalorder %s345, %s359
      %p361 = scmp.eq.s32.totalorder %s52, 0
      %p362 = por %p360, %p361
      %s364 = sadd.s32 %s363, 1
      %p367 = scmp.eq.s32.totalorder %s46, 1
      %p368 = scmp.ne.s32.totalorder %s363, %s365
      %p369 = scmp.eq.s32.totalorder %s46, 0
      %p370 = por %p368, %p369
      %p371 = scmp.ne.s32.totalorder %s363, %s365
      %p372 = scmp.eq.s32.totalorder %s51, 1
      %p373 = por %p371, %p372
      %p374 = scmp.ne.s32.totalorder %s365, %s366
      %p375 = scmp.eq.s32.totalorder %s51, 0
      %p376 = por %p374, %p375
      %p377 = scmp.ne.s32.totalorder %s365, %s366
      %p378 = scmp.eq.s32.totalorder %s52, 1
      %p379 = por %p377, %p378
      %p381 = scmp.ne.s32.totalorder %s366, %s380
      %p382 = scmp.eq.s32.totalorder %s52, 0
      %p383 = por %p381, %p382
      %s385 = sadd.s32 %s384, 1
      %p388 = scmp.eq.s32.totalorder %s46, 1
      %p389 = scmp.ne.s32.totalorder %s384, %s386
      %p390 = scmp.eq.s32.totalorder %s46, 0
      %p391 = por %p389, %p390
      %p392 = scmp.ne.s32.totalorder %s384, %s386
      %p393 = scmp.eq.s32.totalorder %s51, 1
      %p394 = por %p392, %p393
      %p395 = scmp.ne.s32.totalorder %s386, %s387
      %p396 = scmp.eq.s32.totalorder %s51, 0
      %p397 = por %p395, %p396
      %p398 = scmp.ne.s32.totalorder %s386, %s387
      %p399 = scmp.eq.s32.totalorder %s52, 1
      %p400 = por %p398, %p399
      %p402 = scmp.ne.s32.totalorder %s387, %s401
      %p403 = scmp.eq.s32.totalorder %s52, 0
      %p404 = por %p402, %p403
      %s406 = sadd.s32 %s405, 1
      %p409 = scmp.eq.s32.totalorder %s46, 1
      %p410 = scmp.ne.s32.totalorder %s405, %s407
      %p411 = scmp.eq.s32.totalorder %s46, 0
      %p412 = por %p410, %p411
      %p413 = scmp.ne.s32.totalorder %s405, %s407
      %p414 = scmp.eq.s32.totalorder %s51, 1
      %p415 = por %p413, %p414
      %p416 = scmp.ne.s32.totalorder %s407, %s408
      %p417 = scmp.eq.s32.totalorder %s51, 0
      %p418 = por %p416, %p417
      %p419 = scmp.ne.s32.totalorder %s407, %s408
      %p420 = scmp.eq.s32.totalorder %s52, 1
      %p421 = por %p419, %p420
      %p423 = scmp.ne.s32.totalorder %s408, %s422
      %p424 = scmp.eq.s32.totalorder %s52, 0
      %p425 = por %p423, %p424
      %s427 = sadd.s32 %s426, 1
      %p430 = scmp.eq.s32.totalorder %s46, 1
      %p431 = scmp.ne.s32.totalorder %s426, %s428
      %p432 = scmp.eq.s32.totalorder %s46, 0
      %p433 = por %p431, %p432
      %p434 = scmp.ne.s32.totalorder %s426, %s428
      %p435 = scmp.eq.s32.totalorder %s51, 1
      %p436 = por %p434, %p435
      %p437 = scmp.ne.s32.totalorder %s428, %s429
      %p438 = scmp.eq.s32.totalorder %s51, 0
      %p439 = por %p437, %p438
      %p440 = scmp.ne.s32.totalorder %s428, %s429
      %p441 = scmp.eq.s32.totalorder %s52, 1
      %p442 = por %p440, %p441
      %p444 = scmp.ne.s32.totalorder %s429, %s443
      %p445 = scmp.eq.s32.totalorder %s52, 0
      %p446 = por %p444, %p445
      %s447 = ssub.s32 %s46, %s53
      %p448 = scmp.eq.s32.totalorder %s447, 0
      %s450 = sadd.s32 %s449, 1
      %s451 = scalar_select %p448, %s449, %s450
      %p454 = pneg %p448
      %p455 = scmp.eq.s32.totalorder %s46, 1
      %p456 = por %p454, %p455
      %p457 = scmp.ne.s32.totalorder %s449, %s452
      %p458 = scmp.eq.s32.totalorder %s46, 0
      %p459 = por %p457, %p458
      %p460 = scmp.ne.s32.totalorder %s449, %s452
      %p461 = scmp.eq.s32.totalorder %s51, 1
      %p462 = por %p460, %p461
      %p463 = scmp.ne.s32.totalorder %s452, %s453
      %p464 = scmp.eq.s32.totalorder %s51, 0
      %p465 = por %p463, %p464
      %p466 = scmp.ne.s32.totalorder %s452, %s453
      %p467 = scmp.eq.s32.totalorder %s52, 1
      %p468 = por %p466, %p467
      %p470 = scmp.ne.s32.totalorder %s453, %s469
      %p471 = scmp.eq.s32.totalorder %s52, 0
      %p472 = por %p470, %p471
      %s473 = ssub.s32 %s46, %s53
      %p474 = scmp.eq.s32.totalorder %s473, 0
      %s476 = sadd.s32 %s475, 1
      %s477 = scalar_select %p474, %s475, %s476
      %p480 = pneg %p474
      %p481 = scmp.eq.s32.totalorder %s46, 1
      %p482 = por %p480, %p481
      %p483 = scmp.ne.s32.totalorder %s475, %s478
      %p484 = scmp.eq.s32.totalorder %s46, 0
      %p485 = por %p483, %p484
      %p486 = scmp.ne.s32.totalorder %s475, %s478
      %p487 = scmp.eq.s32.totalorder %s51, 1
      %p488 = por %p486, %p487
      %p489 = scmp.ne.s32.totalorder %s478, %s479
      %p490 = scmp.eq.s32.totalorder %s51, 0
      %p491 = por %p489, %p490
      %p492 = scmp.ne.s32.totalorder %s478, %s479
      %p493 = scmp.eq.s32.totalorder %s52, 1
      %p494 = por %p492, %p493
      %p496 = scmp.ne.s32.totalorder %s479, %s495
      %p497 = scmp.eq.s32.totalorder %s52, 0
      %p498 = por %p496, %p497
      %p499 = scmp.le.s32.totalorder 1, %s46
      %p500 = scmp.lt.s32.totalorder %s46, 3
      %p501 = pnand %p499, %p500
      %p502 = pneg %p501
      // Predicated region
      $region9: #{tpu_custom_call.1} parent=5 // pred_check
        _
      $region10: #{tpu_custom_call.1} parent=5 // pred_check_branch
        %504 = sbr.rel (%p501) target = $region12
      $region11: #{tpu_custom_call.1} parent=5 // pred_region
        %s505 = ssub.s32 %s46, 1
        // Predicated region
        $region13: #{tpu_custom_call.1} parent=11 // pred_check
          %p506 = pneg %p145
        $region14: #{tpu_custom_call.1} parent=11 // pred_check_branch
          %508 = sbr.rel (%p506) target = $region16
        $region15: #{tpu_custom_call.1} parent=11 // pred_region
          %s510 = ssub.s32 512, 512
          %511 = vsyncadd [#allocation9], %s510
          %s512 = sshll.u32 [#allocation8], 4
          %s513 = int_to_ptr.vmem [resolvable:$true] %s512
          %518 = dma.hbm_to_vmem [thread:$0]  %s3, 512, %s513, [#allocation9], 64, 64, 4
        $region16: #{tpu_custom_call.1} parent=11 // pred_fallthru
          _
        // Predicated region
        $region17: #{tpu_custom_call.1} parent=11 // pred_check
          %p519 = pneg %p166
        $region18: #{tpu_custom_call.1} parent=11 // pred_check_branch
          %521 = sbr.rel (%p519) target = $region20
        $region19: #{tpu_custom_call.1} parent=11 // pred_region
          %s523 = ssub.s32 1024, 1024
          %524 = vsyncadd [#allocation9], %s523
          %s525 = sshll.u32 [#allocation10], 4
          %s526 = int_to_ptr.vmem [resolvable:$true] %s525
          %531 = dma.hbm_to_vmem [thread:$0]  %s4, 1024, %s526, [#allocation9], 128, 128, 8
        $region20: #{tpu_custom_call.1} parent=11 // pred_fallthru
          _
        // Predicated region
        $region21: #{tpu_custom_call.1} parent=11 // pred_check
          %p532 = pneg %p187
        $region22: #{tpu_custom_call.1} parent=11 // pred_check_branch
          %534 = sbr.rel (%p532) target = $region24
        $region23: #{tpu_custom_call.1} parent=11 // pred_region
          %s536 = ssub.s32 1024, 1024
          %537 = vsyncadd [#allocation12], %s536
          %s538 = sshll.u32 [#allocation11], 4
          %s539 = int_to_ptr.vmem [resolvable:$true] %s538
          %544 = dma.hbm_to_vmem [thread:$0]  %s5, 1024, %s539, [#allocation12], 128, 128, 8
        $region24: #{tpu_custom_call.1} parent=11 // pred_fallthru
          _
        // Predicated region
        $region25: #{tpu_custom_call.1} parent=11 // pred_check
          %p545 = pneg %p208
        $region26: #{tpu_custom_call.1} parent=11 // pred_check_branch
          %547 = sbr.rel (%p545) target = $region28
        $region27: #{tpu_custom_call.1} parent=11 // pred_region
          %s549 = ssub.s32 512, 512
          %550 = vsyncadd [#allocation12], %s549
          %s551 = sshll.u32 [#allocation13], 4
          %s552 = int_to_ptr.vmem [resolvable:$true] %s551
          %557 = dma.hbm_to_vmem [thread:$0]  %s6, 512, %s552, [#allocation12], 64, 64, 4
        $region28: #{tpu_custom_call.1} parent=11 // pred_fallthru
          _
        // Predicated region
        $region29: #{tpu_custom_call.1} parent=11 // pred_check
          %p558 = pneg %p229
        $region30: #{tpu_custom_call.1} parent=11 // pred_check_branch
          %560 = sbr.rel (%p558) target = $region32
        $region31: #{tpu_custom_call.1} parent=11 // pred_region
          %s562 = ssub.s32 1024, 1024
          %563 = vsyncadd [#allocation15], %s562
          %s564 = sshll.u32 [#allocation14], 4
          %s565 = int_to_ptr.vmem [resolvable:$true] %s564
          %570 = dma.hbm_to_vmem [thread:$0]  %s7, 1024, %s565, [#allocation15], 128, 128, 8
        $region32: #{tpu_custom_call.1} parent=11 // pred_fallthru
          _
        // Predicated region
        $region33: #{tpu_custom_call.1} parent=11 // pred_check
          %p571 = pneg %p250
        $region34: #{tpu_custom_call.1} parent=11 // pred_check_branch
          %573 = sbr.rel (%p571) target = $region36
        $region35: #{tpu_custom_call.1} parent=11 // pred_region
          %s575 = ssub.s32 1024, 1024
          %576 = vsyncadd [#allocation15], %s575
          %s577 = sshll.u32 [#allocation16], 4
          %s578 = int_to_ptr.vmem [resolvable:$true] %s577
          %583 = dma.hbm_to_vmem [thread:$0]  %s8, 1024, %s578, [#allocation15], 128, 128, 8
        $region36: #{tpu_custom_call.1} parent=11 // pred_fallthru
          _
        // Predicated region
        $region37: #{tpu_custom_call.1} parent=11 // pred_check
          %p584 = pneg %p271
        $region38: #{tpu_custom_call.1} parent=11 // pred_check_branch
          %586 = sbr.rel (%p584) target = $region40
        $region39: #{tpu_custom_call.1} parent=11 // pred_region
          %s588 = ssub.s32 1024, 1024
          %589 = vsyncadd [#allocation18], %s588
          %s590 = sshll.u32 [#allocation17], 4
          %s591 = int_to_ptr.vmem [resolvable:$true] %s590
          %596 = dma.hbm_to_vmem [thread:$0]  %s9, 1024, %s591, [#allocation18], 128, 128, 8
        $region40: #{tpu_custom_call.1} parent=11 // pred_fallthru
          _
        // Predicated region
        $region41: #{tpu_custom_call.1} parent=11 // pred_check
          %p597 = pneg %p292
        $region42: #{tpu_custom_call.1} parent=11 // pred_check_branch
          %599 = sbr.rel (%p597) target = $region44
        $region43: #{tpu_custom_call.1} parent=11 // pred_region
          %s601 = ssub.s32 1024, 1024
          %602 = vsyncadd [#allocation18], %s601
          %s603 = sshll.u32 [#allocation19], 4
          %s604 = int_to_ptr.vmem [resolvable:$true] %s603
          %609 = dma.hbm_to_vmem [thread:$0]  %s10, 1024, %s604, [#allocation18], 128, 128, 8
        $region44: #{tpu_custom_call.1} parent=11 // pred_fallthru
          _
        // Predicated region
        $region45: #{tpu_custom_call.1} parent=11 // pred_check
          %p610 = pneg %p313
        $region46: #{tpu_custom_call.1} parent=11 // pred_check_branch
          %612 = sbr.rel (%p610) target = $region48
        $region47: #{tpu_custom_call.1} parent=11 // pred_region
          %s614 = ssub.s32 1024, 1024
          %615 = vsyncadd [#allocation21], %s614
          %s616 = sshll.u32 [#allocation20], 4
          %s617 = int_to_ptr.vmem [resolvable:$true] %s616
          %622 = dma.hbm_to_vmem [thread:$0]  %s11, 1024, %s617, [#allocation21], 128, 128, 8
        $region48: #{tpu_custom_call.1} parent=11 // pred_fallthru
          _
        // Predicated region
        $region49: #{tpu_custom_call.1} parent=11 // pred_check
          %p623 = pneg %p334
        $region50: #{tpu_custom_call.1} parent=11 // pred_check_branch
          %625 = sbr.rel (%p623) target = $region52
        $region51: #{tpu_custom_call.1} parent=11 // pred_region
          %s627 = ssub.s32 192, 192
          %628 = vsyncadd [#allocation21], %s627
          %s629 = sshll.u32 [#allocation22], 4
          %s630 = int_to_ptr.vmem [resolvable:$true] %s629
          %635 = dma.hbm_to_vmem [thread:$0]  %s12, 192, %s630, [#allocation21], 64, 64, 4
        $region52: #{tpu_custom_call.1} parent=11 // pred_fallthru
          _
        // Predicated region
        $region53: #{tpu_custom_call.1} parent=11 // pred_check
          %p636 = pneg %p355
        $region54: #{tpu_custom_call.1} parent=11 // pred_check_branch
          %638 = sbr.rel (%p636) target = $region56
        $region55: #{tpu_custom_call.1} parent=11 // pred_region
          %s640 = ssub.s32 192, 192
          %641 = vsyncadd [#allocation24], %s640
          %s642 = sshll.u32 [#allocation23], 4
          %s643 = int_to_ptr.vmem [resolvable:$true] %s642
          %648 = dma.hbm_to_vmem [thread:$0]  %s13, 192, %s643, [#allocation24], 64, 64, 4
        $region56: #{tpu_custom_call.1} parent=11 // pred_fallthru
          _
        // Predicated region
        $region57: #{tpu_custom_call.1} parent=11 // pred_check
          %p649 = pneg %p376
        $region58: #{tpu_custom_call.1} parent=11 // pred_check_branch
          %651 = sbr.rel (%p649) target = $region60
        $region59: #{tpu_custom_call.1} parent=11 // pred_region
          %s653 = ssub.s32 192, 192
          %654 = vsyncadd [#allocation24], %s653
          %s655 = sshll.u32 [#allocation25], 4
          %s656 = int_to_ptr.vmem [resolvable:$true] %s655
          %661 = dma.hbm_to_vmem [thread:$0]  %s14, 192, %s656, [#allocation24], 64, 64, 4
        $region60: #{tpu_custom_call.1} parent=11 // pred_fallthru
          _
        // Predicated region
        $region61: #{tpu_custom_call.1} parent=11 // pred_check
          %p662 = pneg %p397
        $region62: #{tpu_custom_call.1} parent=11 // pred_check_branch
          %664 = sbr.rel (%p662) target = $region64
        $region63: #{tpu_custom_call.1} parent=11 // pred_region
          %s666 = ssub.s32 64, 64
          %667 = vsyncadd [#allocation27], %s666
          %s669 = sshll.u32 [#allocation26], 4
          %s670 = int_to_ptr.vmem [resolvable:$true] %s669
          %672 = dma.hbm_to_vmem [thread:$0]  %s15, 64, %s670, [#allocation27]
        $region64: #{tpu_custom_call.1} parent=11 // pred_fallthru
          _
        // Predicated region
        $region65: #{tpu_custom_call.1} parent=11 // pred_check
          %p673 = pneg %p418
        $region66: #{tpu_custom_call.1} parent=11 // pred_check_branch
          %675 = sbr.rel (%p673) target = $region68
        $region67: #{tpu_custom_call.1} parent=11 // pred_region
          %s677 = ssub.s32 32, 32
          %678 = vsyncadd [#allocation27], %s677
          %s680 = sshll.u32 [#allocation28], 4
          %s681 = int_to_ptr.vmem [resolvable:$true] %s680
          %683 = dma.hbm_to_vmem [thread:$0]  %s16, 32, %s681, [#allocation27]
        $region68: #{tpu_custom_call.1} parent=11 // pred_fallthru
          _
        // Predicated region
        $region69: #{tpu_custom_call.1} parent=11 // pred_check
          %p684 = pneg %p439
        $region70: #{tpu_custom_call.1} parent=11 // pred_check_branch
          %686 = sbr.rel (%p684) target = $region72
        $region71: #{tpu_custom_call.1} parent=11 // pred_region
          %s688 = ssub.s32 32, 32
          %689 = vsyncadd [#allocation30], %s688
          %s691 = sshll.u32 [#allocation29], 4
          %s692 = int_to_ptr.vmem [resolvable:$true] %s691
          %694 = dma.hbm_to_vmem [thread:$0]  %s17, 32, %s692, [#allocation30]
        $region72: #{tpu_custom_call.1} parent=11 // pred_fallthru
          _
      $region12: #{tpu_custom_call.1} parent=5 // pred_fallthru
        _
      %p695 = scmp.lt.s32.totalorder %s46, 2
      // Predicated region
      $region73: #{tpu_custom_call.1} parent=5 // pred_check
        %p696 = pneg %p695
      $region74: #{tpu_custom_call.1} parent=5 // pred_check_branch
        %698 = sbr.rel (%p696) target = $region76
      $region75: #{tpu_custom_call.1} parent=5 // pred_region
        // Predicated region
        $region77: #{tpu_custom_call.1} parent=75 // pred_check
          %p699 = pneg %p66
        $region78: #{tpu_custom_call.1} parent=75 // pred_check_branch
          %701 = sbr.rel (%p699) target = $region80
        $region79: #{tpu_custom_call.1} parent=75 // pred_region
          %s702 = sand.u32 %s56, 1
          %s703 = scalar_lea.sflag [#allocation3], %s702
          %s704 = sand.u32 %s56, 1
          %s705 = smul.addr %s704, 128
          %s706 = scalar_lea.vmem [#allocation2], %s705
          %s708 = ssub.s32 2048, 2048
          %709 = vsyncadd %s703, %s708
          %s710 = smul.addr %s46, 16
          %s711 = smul.addr %s710, 128
          %s712 = scalar_lea.hbm %s0, %s711
          %s713 = sshll.u32 %s706, 4
          %s714 = int_to_ptr.vmem [resolvable:$true] %s713
          %719 = dma.hbm_to_vmem [thread:$0]  %s712, 2048, %s714, %s703, 256, 256, 16
        $region80: #{tpu_custom_call.1} parent=75 // pred_fallthru
          _
        // Predicated region
        $region81: #{tpu_custom_call.1} parent=75 // pred_check
          %p720 = pneg %p92
        $region82: #{tpu_custom_call.1} parent=75 // pred_check_branch
          %722 = sbr.rel (%p720) target = $region84
        $region83: #{tpu_custom_call.1} parent=75 // pred_region
          %s723 = sand.u32 %s46, 1
          %s724 = scalar_lea.sflag [#allocation6], %s723
          %s725 = sand.u32 %s82, 1
          %s726 = smul.addr %s725, 128
          %s727 = scalar_lea.vmem [#allocation5], %s726
          %s729 = ssub.s32 2048, 2048
          %730 = vsyncadd %s724, %s729
          %s731 = smul.addr %s46, 16
          %s732 = smul.addr %s731, 128
          %s733 = scalar_lea.hbm %s1, %s732
          %s734 = sshll.u32 %s727, 4
          %s735 = int_to_ptr.vmem [resolvable:$true] %s734
          %740 = dma.hbm_to_vmem [thread:$0]  %s733, 2048, %s735, %s724, 128, 128, 8
        $region84: #{tpu_custom_call.1} parent=75 // pred_fallthru
          _
        // Predicated region
        $region85: #{tpu_custom_call.1} parent=75 // pred_check
          %p741 = pneg %p118
        $region86: #{tpu_custom_call.1} parent=75 // pred_check_branch
          %743 = sbr.rel (%p741) target = $region88
        $region87: #{tpu_custom_call.1} parent=75 // pred_region
          %s744 = sand.u32 %s46, 1
          %s745 = scalar_lea.sflag [#allocation6], %s744
          %s746 = sand.u32 %s108, 1
          %s747 = smul.addr %s746, 256
          %s748 = scalar_lea.vmem [#allocation7], %s747
          %s750 = ssub.s32 4096, 4096
          %751 = vsyncadd %s745, %s750
          %s752 = smul.addr %s46, 32
          %s753 = smul.addr %s752, 128
          %s754 = scalar_lea.hbm %s2, %s753
          %s755 = sshll.u32 %s748, 4
          %s756 = int_to_ptr.vmem [resolvable:$true] %s755
          %761 = dma.hbm_to_vmem [thread:$0]  %s754, 4096, %s756, %s745, 128, 128, 8
        $region88: #{tpu_custom_call.1} parent=75 // pred_fallthru
          _
      $region76: #{tpu_custom_call.1} parent=5 // pred_fallthru
        _
      %p762 = scmp.le.s32.totalorder 1, %s46
      %p763 = scmp.lt.s32.totalorder %s46, 3
      %p764 = pnand %p762, %p763
      %p765 = pneg %p764
      // Predicated region
      $region89: #{tpu_custom_call.1} parent=5 // pred_check
        _
      $region90: #{tpu_custom_call.1} parent=5 // pred_check_branch
        %767 = sbr.rel (%p764) target = $region92
      $region91: #{tpu_custom_call.1} parent=5 // pred_region
        %s768 = ssub.s32 %s46, 1
        %s769 = sand.u32 %s59, 1
        %s770 = scalar_lea.sflag [#allocation3], %s769
        %s771 = sand.u32 %s59, 1
        %s772 = smul.addr %s771, 128
        %s773 = scalar_lea.vmem [#allocation2], %s772
        // Predicated region
        $region93: #{tpu_custom_call.1} parent=91 // pred_check
          %p774 = pneg %p72
        $region94: #{tpu_custom_call.1} parent=91 // pred_check_branch
          %776 = sbr.rel (%p774) target = $region96
        $region95: #{tpu_custom_call.1} parent=91 // pred_region
          %777 = dma.done %s770, 2048
        $region96: #{tpu_custom_call.1} parent=91 // pred_fallthru
          _
        %s778 = sand.u32 %s51, 1
        %s779 = scalar_lea.sflag [#allocation6], %s778
        %s780 = sand.u32 %s85, 1
        %s781 = smul.addr %s780, 128
        %s782 = scalar_lea.vmem [#allocation5], %s781
        // Predicated region
        $region97: #{tpu_custom_call.1} parent=91 // pred_check
          %p783 = pneg %p98
        $region98: #{tpu_custom_call.1} parent=91 // pred_check_branch
          %785 = sbr.rel (%p783) target = $region100
        $region99: #{tpu_custom_call.1} parent=91 // pred_region
          %786 = dma.done %s779, 2048
        $region100: #{tpu_custom_call.1} parent=91 // pred_fallthru
          _
        %s787 = sand.u32 %s51, 1
        %s788 = scalar_lea.sflag [#allocation6], %s787
        %s789 = sand.u32 %s111, 1
        %s790 = smul.addr %s789, 256
        %s791 = scalar_lea.vmem [#allocation7], %s790
        // Predicated region
        $region101: #{tpu_custom_call.1} parent=91 // pred_check
          %p792 = pneg %p124
        $region102: #{tpu_custom_call.1} parent=91 // pred_check_branch
          %794 = sbr.rel (%p792) target = $region104
        $region103: #{tpu_custom_call.1} parent=91 // pred_region
          %795 = dma.done %s788, 4096
        $region104: #{tpu_custom_call.1} parent=91 // pred_fallthru
          _
        // Predicated region
        $region105: #{tpu_custom_call.1} parent=91 // pred_check
          %p796 = pneg %p145
        $region106: #{tpu_custom_call.1} parent=91 // pred_check_branch
          %798 = sbr.rel (%p796) target = $region108
        $region107: #{tpu_custom_call.1} parent=91 // pred_region
          %799 = dma.done [#allocation9], 512
        $region108: #{tpu_custom_call.1} parent=91 // pred_fallthru
          _
        // Predicated region
        $region109: #{tpu_custom_call.1} parent=91 // pred_check
          %p800 = pneg %p166
        $region110: #{tpu_custom_call.1} parent=91 // pred_check_branch
          %802 = sbr.rel (%p800) target = $region112
        $region111: #{tpu_custom_call.1} parent=91 // pred_region
          %803 = dma.done [#allocation9], 1024
        $region112: #{tpu_custom_call.1} parent=91 // pred_fallthru
          _
        // Predicated region
        $region113: #{tpu_custom_call.1} parent=91 // pred_check
          %p804 = pneg %p187
        $region114: #{tpu_custom_call.1} parent=91 // pred_check_branch
          %806 = sbr.rel (%p804) target = $region116
        $region115: #{tpu_custom_call.1} parent=91 // pred_region
          %807 = dma.done [#allocation12], 1024
        $region116: #{tpu_custom_call.1} parent=91 // pred_fallthru
          _
        // Predicated region
        $region117: #{tpu_custom_call.1} parent=91 // pred_check
          %p808 = pneg %p208
        $region118: #{tpu_custom_call.1} parent=91 // pred_check_branch
          %810 = sbr.rel (%p808) target = $region120
        $region119: #{tpu_custom_call.1} parent=91 // pred_region
          %811 = dma.done [#allocation12], 512
        $region120: #{tpu_custom_call.1} parent=91 // pred_fallthru
          _
        // Predicated region
        $region121: #{tpu_custom_call.1} parent=91 // pred_check
          %p812 = pneg %p229
        $region122: #{tpu_custom_call.1} parent=91 // pred_check_branch
          %814 = sbr.rel (%p812) target = $region124
        $region123: #{tpu_custom_call.1} parent=91 // pred_region
          %815 = dma.done [#allocation15], 1024
        $region124: #{tpu_custom_call.1} parent=91 // pred_fallthru
          _
        // Predicated region
        $region125: #{tpu_custom_call.1} parent=91 // pred_check
          %p816 = pneg %p250
        $region126: #{tpu_custom_call.1} parent=91 // pred_check_branch
          %818 = sbr.rel (%p816) target = $region128
        $region127: #{tpu_custom_call.1} parent=91 // pred_region
          %819 = dma.done [#allocation15], 1024
        $region128: #{tpu_custom_call.1} parent=91 // pred_fallthru
          _
        // Predicated region
        $region129: #{tpu_custom_call.1} parent=91 // pred_check
          %p820 = pneg %p271
        $region130: #{tpu_custom_call.1} parent=91 // pred_check_branch
          %822 = sbr.rel (%p820) target = $region132
        $region131: #{tpu_custom_call.1} parent=91 // pred_region
          %823 = dma.done [#allocation18], 1024
        $region132: #{tpu_custom_call.1} parent=91 // pred_fallthru
          _
        // Predicated region
        $region133: #{tpu_custom_call.1} parent=91 // pred_check
          %p824 = pneg %p292
        $region134: #{tpu_custom_call.1} parent=91 // pred_check_branch
          %826 = sbr.rel (%p824) target = $region136
        $region135: #{tpu_custom_call.1} parent=91 // pred_region
          %827 = dma.done [#allocation18], 1024
        $region136: #{tpu_custom_call.1} parent=91 // pred_fallthru
          _
        // Predicated region
        $region137: #{tpu_custom_call.1} parent=91 // pred_check
          %p828 = pneg %p313
        $region138: #{tpu_custom_call.1} parent=91 // pred_check_branch
          %830 = sbr.rel (%p828) target = $region140
        $region139: #{tpu_custom_call.1} parent=91 // pred_region
          %831 = dma.done [#allocation21], 1024
        $region140: #{tpu_custom_call.1} parent=91 // pred_fallthru
          _
        // Predicated region
        $region141: #{tpu_custom_call.1} parent=91 // pred_check
          %p832 = pneg %p334
        $region142: #{tpu_custom_call.1} parent=91 // pred_check_branch
          %834 = sbr.rel (%p832) target = $region144
        $region143: #{tpu_custom_call.1} parent=91 // pred_region
          %835 = dma.done [#allocation21], 192
        $region144: #{tpu_custom_call.1} parent=91 // pred_fallthru
          _
        // Predicated region
        $region145: #{tpu_custom_call.1} parent=91 // pred_check
          %p836 = pneg %p355
        $region146: #{tpu_custom_call.1} parent=91 // pred_check_branch
          %838 = sbr.rel (%p836) target = $region148
        $region147: #{tpu_custom_call.1} parent=91 // pred_region
          %839 = dma.done [#allocation24], 192
        $region148: #{tpu_custom_call.1} parent=91 // pred_fallthru
          _
        // Predicated region
        $region149: #{tpu_custom_call.1} parent=91 // pred_check
          %p840 = pneg %p376
        $region150: #{tpu_custom_call.1} parent=91 // pred_check_branch
          %842 = sbr.rel (%p840) target = $region152
        $region151: #{tpu_custom_call.1} parent=91 // pred_region
          %843 = dma.done [#allocation24], 192
        $region152: #{tpu_custom_call.1} parent=91 // pred_fallthru
          _
        // Predicated region
        $region153: #{tpu_custom_call.1} parent=91 // pred_check
          %p844 = pneg %p397
        $region154: #{tpu_custom_call.1} parent=91 // pred_check_branch
          %846 = sbr.rel (%p844) target = $region156
        $region155: #{tpu_custom_call.1} parent=91 // pred_region
          %847 = dma.done [#allocation27], 64
        $region156: #{tpu_custom_call.1} parent=91 // pred_fallthru
          _
        // Predicated region
        $region157: #{tpu_custom_call.1} parent=91 // pred_check
          %p848 = pneg %p418
        $region158: #{tpu_custom_call.1} parent=91 // pred_check_branch
          %850 = sbr.rel (%p848) target = $region160
        $region159: #{tpu_custom_call.1} parent=91 // pred_region
          %851 = dma.done [#allocation27], 32
        $region160: #{tpu_custom_call.1} parent=91 // pred_fallthru
          _
        // Predicated region
        $region161: #{tpu_custom_call.1} parent=91 // pred_check
          %p852 = pneg %p439
        $region162: #{tpu_custom_call.1} parent=91 // pred_check_branch
          %854 = sbr.rel (%p852) target = $region164
        $region163: #{tpu_custom_call.1} parent=91 // pred_region
          %855 = dma.done [#allocation30], 32
        $region164: #{tpu_custom_call.1} parent=91 // pred_fallthru
          _
        %s856 = sand.u32 %s59, 1
        %s857 = scalar_lea.sflag [#allocation3], %s856
        %s858 = sand.u32 %s59, 1
        %s859 = smul.addr %s858, 128
        %s860 = scalar_lea.vmem [#allocation2], %s859
        %p861 = pneg %p72
        %p862 = pneg %p69
        %s863 = sand.u32 %s51, 1
        %s864 = scalar_lea.sflag [#allocation6], %s863
        %s865 = sand.u32 %s85, 1
        %s866 = smul.addr %s865, 128
        %s867 = scalar_lea.vmem [#allocation5], %s866
        %p868 = pneg %p98
        %p869 = pneg %p95
        %s870 = sand.u32 %s51, 1
        %s871 = scalar_lea.sflag [#allocation6], %s870
        %s872 = sand.u32 %s111, 1
        %s873 = smul.addr %s872, 256
        %s874 = scalar_lea.vmem [#allocation7], %s873
        %p875 = pneg %p124
        %p876 = pneg %p121
        %p877 = pneg %p145
        %p878 = pneg %p142
        %p879 = pneg %p166
        %p880 = pneg %p163
        %p881 = pneg %p187
        %p882 = pneg %p184
        %p883 = pneg %p208
        %p884 = pneg %p205
        %p885 = pneg %p229
        %p886 = pneg %p226
        %p887 = pneg %p250
        %p888 = pneg %p247
        %p889 = pneg %p271
        %p890 = pneg %p268
        %p891 = pneg %p292
        %p892 = pneg %p289
        %p893 = pneg %p313
        %p894 = pneg %p310
        %p895 = pneg %p334
        %p896 = pneg %p331
        %p897 = pneg %p355
        %p898 = pneg %p352
        %p899 = pneg %p376
        %p900 = pneg %p373
        %p901 = pneg %p397
        %p902 = pneg %p394
        %p903 = pneg %p418
        %p904 = pneg %p415
        %p905 = pneg %p439
        %p906 = pneg %p436
        %p907 = pneg %p465
        %p908 = pneg %p462
        %s909 = sand.u32 %s452, 1
        %s910 = scalar_lea.sflag [#allocation4], %s909
        %s911 = sand.u32 %s452, 1
        %s912 = smul.addr %s911, 384
        %s913 = scalar_lea.vmem [#allocation31], %s912
        %p914 = pneg %p491
        %p915 = pneg %p488
        %s916 = sand.u32 %s478, 1
        %s917 = scalar_lea.sflag [#allocation33], %s916
        %s918 = sand.u32 %s478, 1
        %s919 = smul.addr %s918, 4
        %s920 = scalar_lea.vmem [#allocation32], %s919
        %v922 = vld [vmem:[%s773] sm:$0xff]
        %v923 = vld [vmem:[%s773 + $0x8] sm:$0xff]
        %v924 = vld [vmem:[%s773 + $0x10] sm:$0xff]
        %v925 = vld [vmem:[%s773 + $0x18] sm:$0xff]
        %v926 = vld [vmem:[%s773 + $0x20] sm:$0xff]
        %v927 = vld [vmem:[%s773 + $0x28] sm:$0xff]
        %v928 = vld [vmem:[%s773 + $0x30] sm:$0xff]
        %v929 = vld [vmem:[%s773 + $0x38] sm:$0xff]
        %v930 = vld [vmem:[%s773 + $0x40] sm:$0xff]
        %v931 = vld [vmem:[%s773 + $0x48] sm:$0xff]
        %v932 = vld [vmem:[%s773 + $0x50] sm:$0xff]
        %v933 = vld [vmem:[%s773 + $0x58] sm:$0xff]
        %v934 = vld [vmem:[%s773 + $0x60] sm:$0xff]
        %v935 = vld [vmem:[%s773 + $0x68] sm:$0xff]
        %v936 = vld [vmem:[%s773 + $0x70] sm:$0xff]
        %v937 = vld [vmem:[%s773 + $0x78] sm:$0xff]
        %v938 = vpack.c.bf16 %v924, %v922
        %v939 = vpack.c.bf16 %v925, %v923
        %v940 = vpack.c.bf16 %v928, %v926
        %v941 = vpack.c.bf16 %v929, %v927
        %v942 = vpack.c.bf16 %v932, %v930
        %v943 = vpack.c.bf16 %v933, %v931
        %v944 = vpack.c.bf16 %v936, %v934
        %v945 = vpack.c.bf16 %v937, %v935
        %v946 = vld [vmem:[#allocation8] sm:$0xf]
        %v947 = vld [vmem:[#allocation8 + $0x4] sm:$0xf]
        %v948 = vld [vmem:[#allocation8 + $0x8] sm:$0xf]
        %v949 = vld [vmem:[#allocation8 + $0xc] sm:$0xf]
        %v950 = vld [vmem:[#allocation8 + $0x10] sm:$0xf]
        %v951 = vld [vmem:[#allocation8 + $0x14] sm:$0xf]
        %v952 = vld [vmem:[#allocation8 + $0x18] sm:$0xf]
        %v953 = vld [vmem:[#allocation8 + $0x1c] sm:$0xf]
        %v962 = vunpack.c.l.b16 %v946
        %v963 = vunpack.c.l.b16 %v947
        %v964 = vunpack.c.l.b16 %v948
        %v965 = vunpack.c.l.b16 %v949
        %v966 = vunpack.c.l.b16 %v950
        %v967 = vunpack.c.l.b16 %v951
        %v968 = vunpack.c.l.b16 %v952
        %v969 = vunpack.c.l.b16 %v953
        %v970 = vpack.c.b16 %v963, %v962
        %v971 = vpack.c.b16 %v965, %v964
        %v972 = vpack.c.b16 %v967, %v966
        %v973 = vpack.c.b16 %v969, %v968
        %vm974 = vcmask 523264
        %v976 = vsel %vm974, %v970, 0
        %v979 = vsel %vm974, %v971, 0
        %v982 = vsel %vm974, %v972, 0
        %v985 = vsel %vm974, %v973, 0
        %987 = vmatprep.subr.bf16.mxu0 %v939
        %988 = vmatpush1.bf16.msra.mxu0 %v938
        %989 = vmatprep.subr.bf16.mxu0 %v941
        %990 = vmatpush1.bf16.msra.mxu0 %v940
        %991 = vmatprep.subr.bf16.mxu0 %v943
        %992 = vmatpush1.bf16.msra.mxu0 %v942
        %993 = vmatprep.subr.bf16.mxu0 %v945
        %994 = vmatpush1.bf16.msra.mxu0 %v944
        %995 = vmatprep.subr.bf16.mxu0 0
        %996 = vmatpush1.bf16.msra.mxu0 0
        %997 = vmatprep.subr.bf16.mxu0 0
        %998 = vmatpush1.bf16.msra.mxu0 0
        %999 = vmatprep.subr.bf16.mxu0 0
        %1000 = vmatpush1.bf16.msra.mxu0 0
        %1001 = vmatprep.subr.bf16.mxu0 0
        %1002 = vmatpush1.bf16.msra.mxu0 0
        %1003 = vmatprep.subr.bf16.mxu0 0
        %1004 = vmatpush1.bf16.msra.mxu0 0
        %1005 = vmatprep.subr.bf16.mxu0 0
        %1006 = vmatpush1.bf16.msra.mxu0 0
        %1007 = vmatprep.subr.bf16.mxu0 0
        %1008 = vmatpush1.bf16.msra.mxu0 0
        %1009 = vmatprep.subr.bf16.mxu0 0
        %1010 = vmatpush1.bf16.msra.mxu0 0
        %1011 = vmatprep.subr.bf16.mxu0 0
        %1012 = vmatpush1.bf16.msra.mxu0 0
        %1013 = vmatprep.subr.bf16.mxu0 0
        %1014 = vmatpush1.bf16.msra.mxu0 0
        %1015 = vmatprep.subr.bf16.mxu0 0
        %1016 = vmatpush1.bf16.msra.mxu0 0
        %1017 = vmatprep.subr.bf16.mxu0 0
        %1018 = vmatpush1.bf16.msra.mxu0 0
        %1019 = vmatprep.mubr.bf16.mxu0 0
        %1020 = vmatmul.mubr.bf16.gmra.mrb[0].mxu0 %v976
        %v1021 = vpop.f32.mrb[0].mxu0
        %v1022 = vadd.f32 0.0, %v1021
        %v1023 = vpop.f32.mrb[0].mxu0
        %v1024 = vadd.f32 0.0, %v1023
        %v1025 = vpop.f32.mrb[0].mxu0
        %v1026 = vadd.f32 0.0, %v1025
        %v1027 = vpop.f32.mrb[0].mxu0
        %v1028 = vadd.f32 0.0, %v1027
        %1029 = vmatprep.mubr.bf16.mxu0 0
        %1030 = vmatmul.mubr.bf16.gmra.mrb[0].mxu0 %v979
        %v1031 = vpop.f32.mrb[0].mxu0
        %v1032 = vadd.f32 0.0, %v1031
        %v1033 = vpop.f32.mrb[0].mxu0
        %v1034 = vadd.f32 0.0, %v1033
        %v1035 = vpop.f32.mrb[0].mxu0
        %v1036 = vadd.f32 0.0, %v1035
        %v1037 = vpop.f32.mrb[0].mxu0
        %v1038 = vadd.f32 0.0, %v1037
        %1039 = vmatprep.mubr.bf16.mxu0 0
        %1040 = vmatmul.mubr.bf16.gmra.mrb[0].mxu0 %v982
        %v1041 = vpop.f32.mrb[0].mxu0
        %v1042 = vadd.f32 0.0, %v1041
        %v1043 = vpop.f32.mrb[0].mxu0
        %v1044 = vadd.f32 0.0, %v1043
        %v1045 = vpop.f32.mrb[0].mxu0
        %v1046 = vadd.f32 0.0, %v1045
        %v1047 = vpop.f32.mrb[0].mxu0
        %v1048 = vadd.f32 0.0, %v1047
        %1049 = vmatprep.mubr.bf16.mxu0 0
        %1050 = vmatmul.mubr.bf16.gmra.mrb[0].mxu0 %v985
        %v1051 = vpop.f32.mrb[0].mxu0
        %v1052 = vadd.f32 0.0, %v1051
        %v1053 = vpop.f32.mrb[0].mxu0
        %v1054 = vadd.f32 0.0, %v1053
        %v1055 = vpop.f32.mrb[0].mxu0
        %v1056 = vadd.f32 0.0, %v1055
        %v1057 = vpop.f32.mrb[0].mxu0
        %v1058 = vadd.f32 0.0, %v1057
        %1059 = vdwg.mxu0
        %v1060 = vld [vmem:[#allocation10] sm:$0xff]
        %v1061 = vld [vmem:[#allocation10 + $0x8] sm:$0xff]
        %v1062 = vld [vmem:[#allocation10 + $0x10] sm:$0xff]
        %v1063 = vld [vmem:[#allocation10 + $0x18] sm:$0xff]
        %v1064 = vld [vmem:[#allocation10 + $0x20] sm:$0xff]
        %v1065 = vld [vmem:[#allocation10 + $0x28] sm:$0xff]
        %v1066 = vld [vmem:[#allocation10 + $0x30] sm:$0xff]
        %v1067 = vld [vmem:[#allocation10 + $0x38] sm:$0xff]
        %1069 = vset.pattern.permute.xlu0 0
        %1070 = vperm.xlu0 %1069, %v1060
        %v1071 = vpop.permute.xlu0 %1070
        %1074 = vset.pattern.permute.xlu0 0
        %1075 = vperm.xlu0 %1074, %v1061
        %v1076 = vpop.permute.xlu0 %1075
        %1079 = vset.pattern.permute.xlu0 0
        %1080 = vperm.xlu0 %1079, %v1062
        %v1081 = vpop.permute.xlu0 %1080
        %1084 = vset.pattern.permute.xlu0 0
        %1085 = vperm.xlu0 %1084, %v1063
        %v1086 = vpop.permute.xlu0 %1085
        %1089 = vset.pattern.permute.xlu0 0
        %1090 = vperm.xlu0 %1089, %v1064
        %v1091 = vpop.permute.xlu0 %1090
        %1094 = vset.pattern.permute.xlu0 0
        %1095 = vperm.xlu0 %1094, %v1065
        %v1096 = vpop.permute.xlu0 %1095
        %1099 = vset.pattern.permute.xlu0 0
        %1100 = vperm.xlu0 %1099, %v1066
        %v1101 = vpop.permute.xlu0 %1100
        %1104 = vset.pattern.permute.xlu0 0
        %1105 = vperm.xlu0 %1104, %v1067
        %v1106 = vpop.permute.xlu0 %1105
        %v1108 = vmul.f32 %v1022, %v1071
        %v1109 = vmul.f32 %v1024, %v1071
        %v1110 = vmul.f32 %v1026, %v1076
        %v1111 = vmul.f32 %v1028, %v1076
        %v1112 = vmul.f32 %v1032, %v1081
        %v1113 = vmul.f32 %v1034, %v1081
        %v1114 = vmul.f32 %v1036, %v1086
        %v1115 = vmul.f32 %v1038, %v1086
        %v1116 = vmul.f32 %v1042, %v1091
        %v1117 = vmul.f32 %v1044, %v1091
        %v1118 = vmul.f32 %v1046, %v1096
        %v1119 = vmul.f32 %v1048, %v1096
        %v1120 = vmul.f32 %v1052, %v1101
        %v1121 = vmul.f32 %v1054, %v1101
        %v1122 = vmul.f32 %v1056, %v1106
        %v1123 = vmul.f32 %v1058, %v1106
        %v1124 = vld [vmem:[#allocation11] sm:$0xff]
        %v1125 = vld [vmem:[#allocation11 + $0x8] sm:$0xff]
        %v1126 = vld [vmem:[#allocation11 + $0x10] sm:$0xff]
        %v1127 = vld [vmem:[#allocation11 + $0x18] sm:$0xff]
        %v1128 = vld [vmem:[#allocation11 + $0x20] sm:$0xff]
        %v1129 = vld [vmem:[#allocation11 + $0x28] sm:$0xff]
        %v1130 = vld [vmem:[#allocation11 + $0x30] sm:$0xff]
        %v1131 = vld [vmem:[#allocation11 + $0x38] sm:$0xff]
        %1133 = vset.pattern.permute.xlu0 0
        %1134 = vperm.xlu0 %1133, %v1124
        %v1135 = vpop.permute.xlu0 %1134
        %1138 = vset.pattern.permute.xlu0 0
        %1139 = vperm.xlu0 %1138, %v1125
        %v1140 = vpop.permute.xlu0 %1139
        %1143 = vset.pattern.permute.xlu0 0
        %1144 = vperm.xlu0 %1143, %v1126
        %v1145 = vpop.permute.xlu0 %1144
        %1148 = vset.pattern.permute.xlu0 0
        %1149 = vperm.xlu0 %1148, %v1127
        %v1150 = vpop.permute.xlu0 %1149
        %1153 = vset.pattern.permute.xlu0 0
        %1154 = vperm.xlu0 %1153, %v1128
        %v1155 = vpop.permute.xlu0 %1154
        %1158 = vset.pattern.permute.xlu0 0
        %1159 = vperm.xlu0 %1158, %v1129
        %v1160 = vpop.permute.xlu0 %1159
        %1163 = vset.pattern.permute.xlu0 0
        %1164 = vperm.xlu0 %1163, %v1130
        %v1165 = vpop.permute.xlu0 %1164
        %1168 = vset.pattern.permute.xlu0 0
        %1169 = vperm.xlu0 %1168, %v1131
        %v1170 = vpop.permute.xlu0 %1169
        %v1172 = vadd.f32 %v1108, %v1135
        %v1173 = vadd.f32 %v1109, %v1135
        %v1174 = vadd.f32 %v1110, %v1140
        %v1175 = vadd.f32 %v1111, %v1140
        %v1176 = vadd.f32 %v1112, %v1145
        %v1177 = vadd.f32 %v1113, %v1145
        %v1178 = vadd.f32 %v1114, %v1150
        %v1179 = vadd.f32 %v1115, %v1150
        %v1180 = vadd.f32 %v1116, %v1155
        %v1181 = vadd.f32 %v1117, %v1155
        %v1182 = vadd.f32 %v1118, %v1160
        %v1183 = vadd.f32 %v1119, %v1160
        %v1184 = vadd.f32 %v1120, %v1165
        %v1185 = vadd.f32 %v1121, %v1165
        %v1186 = vadd.f32 %v1122, %v1170
        %v1187 = vadd.f32 %v1123, %v1170
        %v1188 = vpack.c.bf16 %v1174, %v1172
        %v1189 = vpack.c.bf16 %v1175, %v1173
        %v1190 = vpack.c.bf16 %v1178, %v1176
        %v1191 = vpack.c.bf16 %v1179, %v1177
        %v1192 = vpack.c.bf16 %v1182, %v1180
        %v1193 = vpack.c.bf16 %v1183, %v1181
        %v1194 = vpack.c.bf16 %v1186, %v1184
        %v1195 = vpack.c.bf16 %v1187, %v1185
        %v1196 = vld [vmem:[#allocation22] sm:$0xf]
        %v1197 = vld [vmem:[#allocation22 + $0x4] sm:$0xf]
        %v1198 = vld [vmem:[#allocation22 + $0x8] sm:$0x1]
        %v1202 = vunpack.c.l.b16 %v1196
        %v1203 = vunpack.c.l.b16 %v1197
        %v1204 = vunpack.c.l.b16 %v1198
        %v1205 = vpack.c.b16 %v1203, %v1202
        %v1206 = vpack.c.b16 %v1204, %v1204
        %v1208 = vsel %vm974, %v1205, 0
        %v1211 = vsel %vm974, %v1206, 0
        %1213 = vmatprep.subr.bf16.mxu0 %v1189
        %1214 = vmatpush1.bf16.msra.mxu0 %v1188
        %1215 = vmatprep.subr.bf16.mxu0 %v1191
        %1216 = vmatpush1.bf16.msra.mxu0 %v1190
        %1217 = vmatprep.subr.bf16.mxu0 %v1193
        %1218 = vmatpush1.bf16.msra.mxu0 %v1192
        %1219 = vmatprep.subr.bf16.mxu0 %v1195
        %1220 = vmatpush1.bf16.msra.mxu0 %v1194
        %1221 = vmatprep.subr.bf16.mxu0 0
        %1222 = vmatpush1.bf16.msra.mxu0 0
        %1223 = vmatprep.subr.bf16.mxu0 0
        %1224 = vmatpush1.bf16.msra.mxu0 0
        %1225 = vmatprep.subr.bf16.mxu0 0
        %1226 = vmatpush1.bf16.msra.mxu0 0
        %1227 = vmatprep.subr.bf16.mxu0 0
        %1228 = vmatpush1.bf16.msra.mxu0 0
        %1229 = vmatprep.subr.bf16.mxu0 0
        %1230 = vmatpush1.bf16.msra.mxu0 0
        %1231 = vmatprep.subr.bf16.mxu0 0
        %1232 = vmatpush1.bf16.msra.mxu0 0
        %1233 = vmatprep.subr.bf16.mxu0 0
        %1234 = vmatpush1.bf16.msra.mxu0 0
        %1235 = vmatprep.subr.bf16.mxu0 0
        %1236 = vmatpush1.bf16.msra.mxu0 0
        %1237 = vmatprep.subr.bf16.mxu0 0
        %1238 = vmatpush1.bf16.msra.mxu0 0
        %1239 = vmatprep.subr.bf16.mxu0 0
        %1240 = vmatpush1.bf16.msra.mxu0 0
        %1241 = vmatprep.subr.bf16.mxu0 0
        %1242 = vmatpush1.bf16.msra.mxu0 0
        %1243 = vmatprep.subr.bf16.mxu0 0
        %1244 = vmatpush1.bf16.msra.mxu0 0
        %1245 = vmatprep.mubr.bf16.mxu0 0
        %1246 = vmatmul.mubr.bf16.gmra.mrb[0].mxu0 %v1208
        %v1247 = vpop.f32.mrb[0].mxu0
        %v1248 = vadd.f32 0.0, %v1247
        %v1249 = vpop.f32.mrb[0].mxu0
        %v1250 = vadd.f32 0.0, %v1249
        %v1251 = vpop.f32.mrb[0].mxu0
        %v1252 = vadd.f32 0.0, %v1251
        %v1253 = vpop.f32.mrb[0].mxu0
        %v1254 = vadd.f32 0.0, %v1253
        %1255 = vmatprep.mubr.bf16.mxu0 0
        %1256 = vmatmul.mubr.bf16.gmra.mrb[0].mxu0 %v1211
        %v1257 = vpop.f32.mrb[0].mxu0
        %v1258 = vadd.f32 0.0, %v1257
        %v1259 = vpop.f32.mrb[0].mxu0
        %v1260 = vadd.f32 0.0, %v1259
        %v1261 = vpop.f32.mrb[0].mxu0
        %v1262 = vpop.f32.mrb[0].mxu0
        %1263 = vdwg.mxu0
        %1270 = vrot.lane.b32.xlu0 %v1248, 17
        %v1271 = vpop.permute.xlu0 %1270
        %1272 = vrot.lane.b32.xlu0 %v1250, 17
        %v1273 = vpop.permute.xlu0 %1272
        %1274 = vrot.lane.b32.xlu0 %v1252, 17
        %v1275 = vpop.permute.xlu0 %1274
        %1276 = vrot.lane.b32.xlu0 %v1254, 17
        %v1277 = vpop.permute.xlu0 %1276
        %1278 = vrot.lane.b32.xlu0 %v1258, 17
        %v1279 = vpop.permute.xlu0 %1278
        %1280 = vrot.lane.b32.xlu0 %v1260, 17
        %v1281 = vpop.permute.xlu0 %1280
        %vm1282 = vcmask 138240
        %v1283 = vsel %vm1282, %v1271, %v1273
        %v1284 = vsel %vm1282, %v1275, %v1277
        %v1285 = vsel %vm1282, %v1279, %v1281
        %v1295 = vsel %vm1282, 0.0, %v1271
        %v1296 = vsel %vm1282, 0.0, %v1275
        %v1297 = vsel %vm1282, 0.0, %v1279
        %v1298 = vsel %vm1282, %v1273, 0.0
        %v1299 = vsel %vm1282, %v1277, 0.0
        %v1300 = vsel %vm1282, %v1281, 0.0
        %v1301 = vlaneseq
        %v1302 = vand.u32 %v1301, 127
        %v1303 = vadd.s32 %v1302, 128
        %vm1304 = vcmp.lt.s32.totalorder %v1302, 0
        %v1305 = vsub.s32 0, %v1302
        %v1306 = vsel %vm1304, %v1305, %v1302
        %v1307 = vshrl.u32 %v1306, 4
        %v1308 = vand.u32 %v1306, 15
        %v1309 = vsub.s32 0, %v1308
        %v1310 = vsel %vm1304, %v1309, %v1308
        %vm1311 = vcmp.lt.s32.totalorder %v1303, 0
        %v1312 = vsub.s32 0, %v1303
        %v1313 = vsel %vm1311, %v1312, %v1303
        %v1314 = vshrl.u32 %v1313, 4
        %v1315 = vand.u32 %v1313, 15
        %v1316 = vsub.s32 0, %v1315
        %v1317 = vsel %vm1311, %v1316, %v1315
        %vm1318 = vcmp.ne.s32.totalorder %v1310, 0
        %vm1319 = vcmp.ne.s32.totalorder %v1317, 0
        %vm1320 = vcmp.lt.s32.totalorder %v1310, 0
        %vm1321 = vcmp.lt.s32.totalorder %v1317, 0
        %vm1322 = vmand %vm1320, %vm1318
        %vm1323 = vmand %vm1321, %vm1319
        %v1324 = vadd.s32 %v1310, 16
        %v1325 = vadd.s32 %v1317, 16
        %v1326 = vsel %vm1322, %v1324, %v1310
        %v1327 = vsel %vm1323, %v1325, %v1317
        %vm1328 = vcmp.ge.s32.totalorder %v1326, 1
        %vm1329 = vcmp.ge.s32.totalorder %v1327, 1
        %v1330 = vsel %vm1328, 1, 0
        %v1331 = vsel %vm1329, 1, 0
        %v1332 = vcvt.s32.f32 %v1330
        %v1333 = vcvt.s32.f32 %v1331
        %vm1334 = vcmp.lt.s32.totalorder %v1326, 15
        %vm1335 = vcmp.lt.s32.totalorder %v1327, 15
        %v1336 = vsel %vm1334, 1, 0
        %v1337 = vsel %vm1335, 1, 0
        %v1338 = vcvt.s32.f32 %v1336
        %v1339 = vcvt.s32.f32 %v1337
        %v1340 = vmul.f32 %v1295, %v1332
        %v1341 = vmul.f32 %v1283, %v1333
        %v1342 = vadd.f32 %v1340, 0.0
        %v1343 = vadd.f32 %v1341, 0.0
        %v1346 = vrot.slane %v1295, 2
        %v1347 = vrot.slane %v1283, 2
        %v1348 = vrot.slane %v1298, 2
        %1349 = vrot.lane.b32.xlu0 %v1346, 127
        %v1350 = vpop.permute.xlu0 %1349
        %1351 = vrot.lane.b32.xlu0 %v1347, 127
        %v1352 = vpop.permute.xlu0 %1351
        %1353 = vrot.lane.b32.xlu0 %v1348, 127
        %v1354 = vpop.permute.xlu0 %1353
        %vm1355 = vcmask 1039360
        %v1356 = vsel %vm1355, %v1350, %v1352
        %v1357 = vsel %vm1355, %v1352, %v1354
        %v1360 = vadd.f32 %v1342, %v1356
        %v1361 = vadd.f32 %v1343, %v1357
        %1364 = vrot.lane.b32.xlu0 %v1338, 2
        %v1365 = vpop.permute.xlu0 %1364
        %1366 = vrot.lane.b32.xlu0 %v1339, 2
        %v1367 = vpop.permute.xlu0 %1366
        %vm1368 = vcmask 15360
        %v1369 = vsel %vm1368, %v1365, %v1367
        %v1373 = vmul.f32 %v1295, %v1365
        %v1374 = vmul.f32 %v1283, %v1369
        %v1375 = vmul.f32 %v1298, %v1367
        %v1379 = vrot.slane %v1373, 4
        %v1380 = vrot.slane %v1374, 4
        %v1381 = vrot.slane %v1375, 4
        %1382 = vrot.lane.b32.xlu0 %v1379, 126
        %v1383 = vpop.permute.xlu0 %1382
        %1384 = vrot.lane.b32.xlu0 %v1380, 126
        %v1385 = vpop.permute.xlu0 %1384
        %1386 = vrot.lane.b32.xlu0 %v1381, 126
        %v1387 = vpop.permute.xlu0 %1386
        %vm1388 = vcmask 1031168
        %v1389 = vsel %vm1388, %v1383, %v1385
        %v1390 = vsel %vm1388, %v1385, %v1387
        %v1393 = vadd.f32 %v1360, %v1389
        %v1394 = vadd.f32 %v1361, %v1390
        %1397 = vrot.lane.b32.xlu0 %v1332, 16
        %v1398 = vpop.permute.xlu0 %1397
        %1399 = vrot.lane.b32.xlu0 %v1333, 16
        %v1400 = vpop.permute.xlu0 %1399
        %vm1401 = vcmask 130048
        %v1402 = vsel %vm1401, %v1398, %v1400
        %v1406 = vmul.f32 %v1295, %v1398
        %v1407 = vmul.f32 %v1283, %v1402
        %v1408 = vmul.f32 %v1298, %v1400
        %v1412 = vrot.slane %v1406, 6
        %v1413 = vrot.slane %v1407, 6
        %v1414 = vrot.slane %v1408, 6
        %1415 = vrot.lane.b32.xlu0 %v1412, 112
        %v1416 = vpop.permute.xlu0 %1415
        %1417 = vrot.lane.b32.xlu0 %v1413, 112
        %v1418 = vpop.permute.xlu0 %1417
        %1419 = vrot.lane.b32.xlu0 %v1414, 112
        %v1420 = vpop.permute.xlu0 %1419
        %vm1421 = vcmask 916480
        %v1422 = vsel %vm1421, %v1416, %v1418
        %v1423 = vsel %vm1421, %v1418, %v1420
        %v1426 = vadd.f32 %v1393, %v1422
        %v1427 = vadd.f32 %v1394, %v1423
        %1430 = vrot.lane.b32.xlu0 %v1296, 111
        %v1431 = vpop.permute.xlu0 %1430
        %1432 = vrot.lane.b32.xlu0 %v1284, 111
        %v1433 = vpop.permute.xlu0 %1432
        %1434 = vrot.lane.b32.xlu0 %v1299, 111
        %v1435 = vpop.permute.xlu0 %1434
        %vm1436 = vcmask 908288
        %v1437 = vsel %vm1436, %v1431, %v1433
        %v1438 = vsel %vm1436, %v1433, %v1435
        %v1441 = vadd.f32 %v1426, %v1437
        %v1442 = vadd.f32 %v1427, %v1438
        %1443 = vrot.lane.b32.xlu0 %v1338, 18
        %v1444 = vpop.permute.xlu0 %1443
        %1445 = vrot.lane.b32.xlu0 %v1339, 18
        %v1446 = vpop.permute.xlu0 %1445
        %vm1447 = vcmask 146432
        %v1448 = vsel %vm1447, %v1444, %v1446
        %v1452 = vmul.f32 %v1296, %v1444
        %v1453 = vmul.f32 %v1284, %v1448
        %v1454 = vmul.f32 %v1299, %v1446
        %v1458 = vrot.slane %v1452, 2
        %v1459 = vrot.slane %v1453, 2
        %v1460 = vrot.slane %v1454, 2
        %1461 = vrot.lane.b32.xlu0 %v1458, 110
        %v1462 = vpop.permute.xlu0 %1461
        %1463 = vrot.lane.b32.xlu0 %v1459, 110
        %v1464 = vpop.permute.xlu0 %1463
        %1465 = vrot.lane.b32.xlu0 %v1460, 110
        %v1466 = vpop.permute.xlu0 %1465
        %vm1467 = vcmask 900096
        %v1468 = vsel %vm1467, %v1462, %v1464
        %v1469 = vsel %vm1467, %v1464, %v1466
        %v1472 = vadd.f32 %v1441, %v1468
        %v1473 = vadd.f32 %v1442, %v1469
        %1474 = vrot.lane.b32.xlu0 %v1332, 32
        %v1475 = vpop.permute.xlu0 %1474
        %1476 = vrot.lane.b32.xlu0 %v1333, 32
        %v1477 = vpop.permute.xlu0 %1476
        %vm1478 = vcmask 261120
        %v1479 = vsel %vm1478, %v1475, %v1477
        %v1483 = vmul.f32 %v1296, %v1475
        %v1484 = vmul.f32 %v1284, %v1479
        %v1485 = vmul.f32 %v1299, %v1477
        %v1489 = vrot.slane %v1483, 4
        %v1490 = vrot.slane %v1484, 4
        %v1491 = vrot.slane %v1485, 4
        %1492 = vrot.lane.b32.xlu0 %v1489, 96
        %v1493 = vpop.permute.xlu0 %1492
        %1494 = vrot.lane.b32.xlu0 %v1490, 96
        %v1495 = vpop.permute.xlu0 %1494
        %1496 = vrot.lane.b32.xlu0 %v1491, 96
        %v1497 = vpop.permute.xlu0 %1496
        %vm1498 = vcmask 785408
        %v1499 = vsel %vm1498, %v1493, %v1495
        %v1500 = vsel %vm1498, %v1495, %v1497
        %v1503 = vadd.f32 %v1472, %v1499
        %v1504 = vadd.f32 %v1473, %v1500
        %v1505 = vrot.slane %v1296, 6
        %v1506 = vrot.slane %v1284, 6
        %v1507 = vrot.slane %v1299, 6
        %1508 = vrot.lane.b32.xlu0 %v1505, 95
        %v1509 = vpop.permute.xlu0 %1508
        %1510 = vrot.lane.b32.xlu0 %v1506, 95
        %v1511 = vpop.permute.xlu0 %1510
        %1512 = vrot.lane.b32.xlu0 %v1507, 95
        %v1513 = vpop.permute.xlu0 %1512
        %vm1514 = vcmask 777216
        %v1515 = vsel %vm1514, %v1509, %v1511
        %v1516 = vsel %vm1514, %v1511, %v1513
        %v1519 = vadd.f32 %v1503, %v1515
        %v1520 = vadd.f32 %v1504, %v1516
        %1521 = vrot.lane.b32.xlu0 %v1338, 34
        %v1522 = vpop.permute.xlu0 %1521
        %1523 = vrot.lane.b32.xlu0 %v1339, 34
        %v1524 = vpop.permute.xlu0 %1523
        %vm1525 = vcmask 277504
        %v1526 = vsel %vm1525, %v1522, %v1524
        %v1530 = vmul.f32 %v1297, %v1522
        %v1531 = vmul.f32 %v1285, %v1526
        %v1532 = vmul.f32 %v1300, %v1524
        %1536 = vrot.lane.b32.xlu0 %v1530, 94
        %v1537 = vpop.permute.xlu0 %1536
        %1538 = vrot.lane.b32.xlu0 %v1531, 94
        %v1539 = vpop.permute.xlu0 %1538
        %1540 = vrot.lane.b32.xlu0 %v1532, 94
        %v1541 = vpop.permute.xlu0 %1540
        %vm1542 = vcmask 769024
        %v1543 = vsel %vm1542, %v1537, %v1539
        %v1544 = vsel %vm1542, %v1539, %v1541
        %v1547 = vadd.f32 %v1519, %v1543
        %v1548 = vadd.f32 %v1520, %v1544
        %v1549 = vld [vmem:[%s782] sm:$0xff]
        %v1550 = vld [vmem:[%s782 + $0x8] sm:$0xff]
        %v1551 = vld [vmem:[%s782 + $0x10] sm:$0xff]
        %v1552 = vld [vmem:[%s782 + $0x18] sm:$0xff]
        %v1553 = vld [vmem:[%s782 + $0x20] sm:$0xff]
        %v1554 = vld [vmem:[%s782 + $0x28] sm:$0xff]
        %v1555 = vld [vmem:[%s782 + $0x30] sm:$0xff]
        %v1556 = vld [vmem:[%s782 + $0x38] sm:$0xff]
        %v1557 = vld [vmem:[%s782 + $0x40] sm:$0xff]
        %v1558 = vld [vmem:[%s782 + $0x48] sm:$0xff]
        %v1559 = vld [vmem:[%s782 + $0x50] sm:$0xff]
        %v1560 = vld [vmem:[%s782 + $0x58] sm:$0xff]
        %v1561 = vld [vmem:[%s782 + $0x60] sm:$0xff]
        %v1562 = vld [vmem:[%s782 + $0x68] sm:$0xff]
        %v1563 = vld [vmem:[%s782 + $0x70] sm:$0xff]
        %v1564 = vld [vmem:[%s782 + $0x78] sm:$0xff]
        %v1565 = vpack.c.bf16 %v1550, %v1549
        %v1566 = vpack.c.bf16 %v1552, %v1551
        %v1567 = vpack.c.bf16 %v1554, %v1553
        %v1568 = vpack.c.bf16 %v1556, %v1555
        %v1569 = vpack.c.bf16 %v1558, %v1557
        %v1570 = vpack.c.bf16 %v1560, %v1559
        %v1571 = vpack.c.bf16 %v1562, %v1561
        %v1572 = vpack.c.bf16 %v1564, %v1563
        %v1573 = vld [vmem:[#allocation13] sm:$0xf]
        %v1574 = vld [vmem:[#allocation13 + $0x4] sm:$0xf]
        %v1575 = vld [vmem:[#allocation13 + $0x8] sm:$0xf]
        %v1576 = vld [vmem:[#allocation13 + $0xc] sm:$0xf]
        %v1577 = vld [vmem:[#allocation13 + $0x10] sm:$0xf]
        %v1578 = vld [vmem:[#allocation13 + $0x14] sm:$0xf]
        %v1579 = vld [vmem:[#allocation13 + $0x18] sm:$0xf]
        %v1580 = vld [vmem:[#allocation13 + $0x1c] sm:$0xf]
        %v1589 = vunpack.c.l.b16 %v1573
        %v1590 = vunpack.c.l.b16 %v1574
        %v1591 = vunpack.c.l.b16 %v1575
        %v1592 = vunpack.c.l.b16 %v1576
        %v1593 = vunpack.c.l.b16 %v1577
        %v1594 = vunpack.c.l.b16 %v1578
        %v1595 = vunpack.c.l.b16 %v1579
        %v1596 = vunpack.c.l.b16 %v1580
        %v1597 = vpack.c.b16 %v1590, %v1589
        %v1598 = vpack.c.b16 %v1592, %v1591
        %v1599 = vpack.c.b16 %v1594, %v1593
        %v1600 = vpack.c.b16 %v1596, %v1595
        %1605 = vmatprep.subr.bf16.mxu0 0
        %1606 = vmatpush1.bf16.msra.mxu0 %v1565
        %1607 = vmatprep.subr.bf16.mxu0 0
        %1608 = vmatpush1.bf16.msra.mxu0 %v1566
        %1609 = vmatprep.subr.bf16.mxu0 0
        %1610 = vmatpush1.bf16.msra.mxu0 %v1567
        %1611 = vmatprep.subr.bf16.mxu0 0
        %1612 = vmatpush1.bf16.msra.mxu0 %v1568
        %1613 = vmatprep.subr.bf16.mxu0 0
        %1614 = vmatpush1.bf16.msra.mxu0 %v1569
        %1615 = vmatprep.subr.bf16.mxu0 0
        %1616 = vmatpush1.bf16.msra.mxu0 %v1570
        %1617 = vmatprep.subr.bf16.mxu0 0
        %1618 = vmatpush1.bf16.msra.mxu0 %v1571
        %1619 = vmatprep.subr.bf16.mxu0 0
        %1620 = vmatpush1.bf16.msra.mxu0 %v1572
        %1621 = vmatprep.subr.bf16.mxu0 0
        %1622 = vmatpush1.bf16.msra.mxu0 0
        %1623 = vmatprep.subr.bf16.mxu0 0
        %1624 = vmatpush1.bf16.msra.mxu0 0
        %1625 = vmatprep.subr.bf16.mxu0 0
        %1626 = vmatpush1.bf16.msra.mxu0 0
        %1627 = vmatprep.subr.bf16.mxu0 0
        %1628 = vmatpush1.bf16.msra.mxu0 0
        %1629 = vmatprep.subr.bf16.mxu0 0
        %1630 = vmatpush1.bf16.msra.mxu0 0
        %1631 = vmatprep.subr.bf16.mxu0 0
        %1632 = vmatpush1.bf16.msra.mxu0 0
        %1633 = vmatprep.subr.bf16.mxu0 0
        %1634 = vmatpush1.bf16.msra.mxu0 0
        %1635 = vmatprep.subr.bf16.mxu0 0
        %1636 = vmatpush1.bf16.msra.mxu0 0
        %1637 = vmatprep.mubr.bf16.mxu0 0
        %1638 = vmatmul.mubr.bf16.gmra.mrb[0].mxu0 %v1597
        %v1639 = vpop.f32.mrb[0].mxu0
        %v1640 = vadd.f32 0.0, %v1639
        %v1641 = vpop.f32.mrb[0].mxu0
        %v1642 = vpop.f32.mrb[0].mxu0
        %v1643 = vadd.f32 0.0, %v1642
        %v1644 = vpop.f32.mrb[0].mxu0
        %1645 = vmatprep.mubr.bf16.mxu0 0
        %1646 = vmatmul.mubr.bf16.gmra.mrb[0].mxu0 %v1598
        %v1647 = vpop.f32.mrb[0].mxu0
        %v1648 = vadd.f32 0.0, %v1647
        %v1649 = vpop.f32.mrb[0].mxu0
        %v1650 = vpop.f32.mrb[0].mxu0
        %v1651 = vadd.f32 0.0, %v1650
        %v1652 = vpop.f32.mrb[0].mxu0
        %1653 = vmatprep.mubr.bf16.mxu0 0
        %1654 = vmatmul.mubr.bf16.gmra.mrb[0].mxu0 %v1599
        %v1655 = vpop.f32.mrb[0].mxu0
        %v1656 = vadd.f32 0.0, %v1655
        %v1657 = vpop.f32.mrb[0].mxu0
        %v1658 = vpop.f32.mrb[0].mxu0
        %v1659 = vadd.f32 0.0, %v1658
        %v1660 = vpop.f32.mrb[0].mxu0
        %1661 = vmatprep.mubr.bf16.mxu0 0
        %1662 = vmatmul.mubr.bf16.gmra.mrb[0].mxu0 %v1600
        %v1663 = vpop.f32.mrb[0].mxu0
        %v1664 = vadd.f32 0.0, %v1663
        %v1665 = vpop.f32.mrb[0].mxu0
        %v1666 = vpop.f32.mrb[0].mxu0
        %v1667 = vadd.f32 0.0, %v1666
        %v1668 = vpop.f32.mrb[0].mxu0
        %1669 = vdwg.mxu0
        %v1670 = vld [vmem:[#allocation14] sm:$0xff]
        %v1671 = vld [vmem:[#allocation14 + $0x8] sm:$0xff]
        %v1672 = vld [vmem:[#allocation14 + $0x10] sm:$0xff]
        %v1673 = vld [vmem:[#allocation14 + $0x18] sm:$0xff]
        %v1674 = vld [vmem:[#allocation14 + $0x20] sm:$0xff]
        %v1675 = vld [vmem:[#allocation14 + $0x28] sm:$0xff]
        %v1676 = vld [vmem:[#allocation14 + $0x30] sm:$0xff]
        %v1677 = vld [vmem:[#allocation14 + $0x38] sm:$0xff]
        %1679 = vset.pattern.permute.xlu0 0
        %1680 = vperm.xlu0 %1679, %v1670
        %v1681 = vpop.permute.xlu0 %1680
        %1684 = vset.pattern.permute.xlu0 0
        %1685 = vperm.xlu0 %1684, %v1671
        %v1686 = vpop.permute.xlu0 %1685
        %1689 = vset.pattern.permute.xlu0 0
        %1690 = vperm.xlu0 %1689, %v1672
        %v1691 = vpop.permute.xlu0 %1690
        %1694 = vset.pattern.permute.xlu0 0
        %1695 = vperm.xlu0 %1694, %v1673
        %v1696 = vpop.permute.xlu0 %1695
        %1699 = vset.pattern.permute.xlu0 0
        %1700 = vperm.xlu0 %1699, %v1674
        %v1701 = vpop.permute.xlu0 %1700
        %1704 = vset.pattern.permute.xlu0 0
        %1705 = vperm.xlu0 %1704, %v1675
        %v1706 = vpop.permute.xlu0 %1705
        %1709 = vset.pattern.permute.xlu0 0
        %1710 = vperm.xlu0 %1709, %v1676
        %v1711 = vpop.permute.xlu0 %1710
        %1714 = vset.pattern.permute.xlu0 0
        %1715 = vperm.xlu0 %1714, %v1677
        %v1716 = vpop.permute.xlu0 %1715
        %v1718 = vmul.f32 %v1640, %v1681
        %v1719 = vmul.f32 %v1643, %v1686
        %v1720 = vmul.f32 %v1648, %v1691
        %v1721 = vmul.f32 %v1651, %v1696
        %v1722 = vmul.f32 %v1656, %v1701
        %v1723 = vmul.f32 %v1659, %v1706
        %v1724 = vmul.f32 %v1664, %v1711
        %v1725 = vmul.f32 %v1667, %v1716
        %v1726 = vld [vmem:[#allocation16] sm:$0xff]
        %v1727 = vld [vmem:[#allocation16 + $0x8] sm:$0xff]
        %v1728 = vld [vmem:[#allocation16 + $0x10] sm:$0xff]
        %v1729 = vld [vmem:[#allocation16 + $0x18] sm:$0xff]
        %v1730 = vld [vmem:[#allocation16 + $0x20] sm:$0xff]
        %v1731 = vld [vmem:[#allocation16 + $0x28] sm:$0xff]
        %v1732 = vld [vmem:[#allocation16 + $0x30] sm:$0xff]
        %v1733 = vld [vmem:[#allocation16 + $0x38] sm:$0xff]
        %1735 = vset.pattern.permute.xlu0 0
        %1736 = vperm.xlu0 %1735, %v1726
        %v1737 = vpop.permute.xlu0 %1736
        %1740 = vset.pattern.permute.xlu0 0
        %1741 = vperm.xlu0 %1740, %v1727
        %v1742 = vpop.permute.xlu0 %1741
        %1745 = vset.pattern.permute.xlu0 0
        %1746 = vperm.xlu0 %1745, %v1728
        %v1747 = vpop.permute.xlu0 %1746
        %1750 = vset.pattern.permute.xlu0 0
        %1751 = vperm.xlu0 %1750, %v1729
        %v1752 = vpop.permute.xlu0 %1751
        %1755 = vset.pattern.permute.xlu0 0
        %1756 = vperm.xlu0 %1755, %v1730
        %v1757 = vpop.permute.xlu0 %1756
        %1760 = vset.pattern.permute.xlu0 0
        %1761 = vperm.xlu0 %1760, %v1731
        %v1762 = vpop.permute.xlu0 %1761
        %1765 = vset.pattern.permute.xlu0 0
        %1766 = vperm.xlu0 %1765, %v1732
        %v1767 = vpop.permute.xlu0 %1766
        %1770 = vset.pattern.permute.xlu0 0
        %1771 = vperm.xlu0 %1770, %v1733
        %v1772 = vpop.permute.xlu0 %1771
        %v1774 = vadd.f32 %v1718, %v1737
        %v1775 = vadd.f32 %v1719, %v1742
        %v1776 = vadd.f32 %v1720, %v1747
        %v1777 = vadd.f32 %v1721, %v1752
        %v1778 = vadd.f32 %v1722, %v1757
        %v1779 = vadd.f32 %v1723, %v1762
        %v1780 = vadd.f32 %v1724, %v1767
        %v1781 = vadd.f32 %v1725, %v1772
        %v1782 = vpack.c.bf16 %v1775, %v1774
        %v1783 = vpack.c.bf16 %v1777, %v1776
        %v1784 = vpack.c.bf16 %v1779, %v1778
        %v1785 = vpack.c.bf16 %v1781, %v1780
        %v1786 = vld [vmem:[#allocation23] sm:$0xf]
        %v1787 = vld [vmem:[#allocation23 + $0x4] sm:$0xf]
        %v1788 = vld [vmem:[#allocation23 + $0x8] sm:$0x1]
        %v1792 = vunpack.c.l.b16 %v1786
        %v1793 = vunpack.c.l.b16 %v1787
        %v1794 = vunpack.c.l.b16 %v1788
        %v1795 = vpack.c.b16 %v1793, %v1792
        %v1796 = vpack.c.b16 %v1794, %v1794
        %v1798 = vsel %vm974, %v1795, 0
        %v1801 = vsel %vm974, %v1796, 0
        %1803 = vmatprep.subr.bf16.mxu0 0
        %1804 = vmatpush1.bf16.msra.mxu0 %v1782
        %1805 = vmatprep.subr.bf16.mxu0 0
        %1806 = vmatpush1.bf16.msra.mxu0 %v1783
        %1807 = vmatprep.subr.bf16.mxu0 0
        %1808 = vmatpush1.bf16.msra.mxu0 %v1784
        %1809 = vmatprep.subr.bf16.mxu0 0
        %1810 = vmatpush1.bf16.msra.mxu0 %v1785
        %1811 = vmatprep.subr.bf16.mxu0 0
        %1812 = vmatpush1.bf16.msra.mxu0 0
        %1813 = vmatprep.subr.bf16.mxu0 0
        %1814 = vmatpush1.bf16.msra.mxu0 0
        %1815 = vmatprep.subr.bf16.mxu0 0
        %1816 = vmatpush1.bf16.msra.mxu0 0
        %1817 = vmatprep.subr.bf16.mxu0 0
        %1818 = vmatpush1.bf16.msra.mxu0 0
        %1819 = vmatprep.subr.bf16.mxu0 0
        %1820 = vmatpush1.bf16.msra.mxu0 0
        %1821 = vmatprep.subr.bf16.mxu0 0
        %1822 = vmatpush1.bf16.msra.mxu0 0
        %1823 = vmatprep.subr.bf16.mxu0 0
        %1824 = vmatpush1.bf16.msra.mxu0 0
        %1825 = vmatprep.subr.bf16.mxu0 0
        %1826 = vmatpush1.bf16.msra.mxu0 0
        %1827 = vmatprep.subr.bf16.mxu0 0
        %1828 = vmatpush1.bf16.msra.mxu0 0
        %1829 = vmatprep.subr.bf16.mxu0 0
        %1830 = vmatpush1.bf16.msra.mxu0 0
        %1831 = vmatprep.subr.bf16.mxu0 0
        %1832 = vmatpush1.bf16.msra.mxu0 0
        %1833 = vmatprep.subr.bf16.mxu0 0
        %1834 = vmatpush1.bf16.msra.mxu0 0
        %1835 = vmatprep.mubr.bf16.mxu0 0
        %1836 = vmatmul.mubr.bf16.gmra.mrb[0].mxu0 %v1798
        %v1837 = vpop.f32.mrb[0].mxu0
        %v1838 = vadd.f32 0.0, %v1837
        %v1839 = vpop.f32.mrb[0].mxu0
        %v1840 = vpop.f32.mrb[0].mxu0
        %v1841 = vadd.f32 0.0, %v1840
        %v1842 = vpop.f32.mrb[0].mxu0
        %1843 = vmatprep.mubr.bf16.mxu0 0
        %1844 = vmatmul.mubr.bf16.gmra.mrb[0].mxu0 %v1801
        %v1845 = vpop.f32.mrb[0].mxu0
        %v1846 = vadd.f32 0.0, %v1845
        %v1847 = vpop.f32.mrb[0].mxu0
        %v1848 = vpop.f32.mrb[0].mxu0
        %v1849 = vpop.f32.mrb[0].mxu0
        %1850 = vdwg.mxu0
        %1854 = vrot.lane.b32.xlu0 %v1838, 9
        %v1855 = vpop.permute.xlu0 %1854
        %1856 = vrot.lane.b32.xlu0 %v1841, 9
        %v1857 = vpop.permute.xlu0 %1856
        %1858 = vrot.lane.b32.xlu0 %v1846, 9
        %v1859 = vpop.permute.xlu0 %1858
        %vm1863 = vcmask 72704
        %v1864 = vsel %vm1863, 0.0, %v1855
        %v1865 = vsel %vm1863, 0.0, %v1857
        %v1866 = vsel %vm1863, 0.0, %v1859
        %vm1867 = vcmask 596992
        %v1868 = vsel %vm1867, %v1864, 0.0
        %v1869 = vsel %vm1867, %v1865, 0.0
        %v1870 = vsel %vm1867, %v1866, 0.0
        %vm1871 = vcmp.lt.s32.totalorder %v1302, 0
        %v1872 = vsub.s32 0, %v1302
        %v1873 = vsel %vm1871, %v1872, %v1302
        %v1874 = vshrl.u32 %v1873, 3
        %v1875 = vand.u32 %v1873, 7
        %v1876 = vsub.s32 0, %v1875
        %v1877 = vsel %vm1871, %v1876, %v1875
        %vm1878 = vcmp.ne.s32.totalorder %v1877, 0
        %vm1879 = vcmp.lt.s32.totalorder %v1877, 0
        %vm1880 = vmand %vm1879, %vm1878
        %v1881 = vadd.s32 %v1877, 8
        %v1882 = vsel %vm1880, %v1881, %v1877
        %vm1883 = vcmp.ge.s32.totalorder %v1882, 1
        %v1884 = vsel %vm1883, 1, 0
        %v1885 = vcvt.s32.f32 %v1884
        %vm1886 = vcmp.lt.s32.totalorder %v1882, 7
        %v1887 = vsel %vm1886, 1, 0
        %v1888 = vcvt.s32.f32 %v1887
        %v1889 = vmul.f32 %v1868, %v1885
        %v1890 = vadd.f32 %v1889, 0.0
        %v1892 = vrot.slane %v1868, 2
        %1893 = vrot.lane.b32.xlu0 %v1892, 127
        %v1894 = vpop.permute.xlu0 %1893
        %v1896 = vadd.f32 %v1890, %v1894
        %1898 = vrot.lane.b32.xlu0 %v1888, 2
        %v1899 = vpop.permute.xlu0 %1898
        %v1901 = vmul.f32 %v1868, %v1899
        %v1903 = vrot.slane %v1901, 4
        %1904 = vrot.lane.b32.xlu0 %v1903, 126
        %v1905 = vpop.permute.xlu0 %1904
        %v1907 = vadd.f32 %v1896, %v1905
        %1909 = vrot.lane.b32.xlu0 %v1885, 8
        %v1910 = vpop.permute.xlu0 %1909
        %v1912 = vmul.f32 %v1868, %v1910
        %v1914 = vrot.slane %v1912, 6
        %1915 = vrot.lane.b32.xlu0 %v1914, 120
        %v1916 = vpop.permute.xlu0 %1915
        %v1918 = vadd.f32 %v1907, %v1916
        %1920 = vrot.lane.b32.xlu0 %v1869, 119
        %v1921 = vpop.permute.xlu0 %1920
        %v1923 = vadd.f32 %v1918, %v1921
        %1924 = vrot.lane.b32.xlu0 %v1888, 10
        %v1925 = vpop.permute.xlu0 %1924
        %v1927 = vmul.f32 %v1869, %v1925
        %v1929 = vrot.slane %v1927, 2
        %1930 = vrot.lane.b32.xlu0 %v1929, 118
        %v1931 = vpop.permute.xlu0 %1930
        %v1933 = vadd.f32 %v1923, %v1931
        %1934 = vrot.lane.b32.xlu0 %v1885, 16
        %v1935 = vpop.permute.xlu0 %1934
        %v1937 = vmul.f32 %v1869, %v1935
        %v1939 = vrot.slane %v1937, 4
        %1940 = vrot.lane.b32.xlu0 %v1939, 112
        %v1941 = vpop.permute.xlu0 %1940
        %v1943 = vadd.f32 %v1933, %v1941
        %v1944 = vrot.slane %v1869, 6
        %1945 = vrot.lane.b32.xlu0 %v1944, 111
        %v1946 = vpop.permute.xlu0 %1945
        %v1948 = vadd.f32 %v1943, %v1946
        %1949 = vrot.lane.b32.xlu0 %v1888, 18
        %v1950 = vpop.permute.xlu0 %1949
        %v1952 = vmul.f32 %v1870, %v1950
        %1954 = vrot.lane.b32.xlu0 %v1952, 110
        %v1955 = vpop.permute.xlu0 %1954
        %v1957 = vadd.f32 %v1948, %v1955
        %v1958 = vld [vmem:[%s791] sm:$0xff]
        %v1959 = vld [vmem:[%s791 + $0x8] sm:$0xff]
        %v1960 = vld [vmem:[%s791 + $0x10] sm:$0xff]
        %v1961 = vld [vmem:[%s791 + $0x18] sm:$0xff]
        %v1962 = vld [vmem:[%s791 + $0x20] sm:$0xff]
        %v1963 = vld [vmem:[%s791 + $0x28] sm:$0xff]
        %v1964 = vld [vmem:[%s791 + $0x30] sm:$0xff]
        %v1965 = vld [vmem:[%s791 + $0x38] sm:$0xff]
        %v1966 = vld [vmem:[%s791 + $0x40] sm:$0xff]
        %v1967 = vld [vmem:[%s791 + $0x48] sm:$0xff]
        %v1968 = vld [vmem:[%s791 + $0x50] sm:$0xff]
        %v1969 = vld [vmem:[%s791 + $0x58] sm:$0xff]
        %v1970 = vld [vmem:[%s791 + $0x60] sm:$0xff]
        %v1971 = vld [vmem:[%s791 + $0x68] sm:$0xff]
        %v1972 = vld [vmem:[%s791 + $0x70] sm:$0xff]
        %v1973 = vld [vmem:[%s791 + $0x78] sm:$0xff]
        %v1974 = vld [vmem:[%s791 + $0x80] sm:$0xff]
        %v1975 = vld [vmem:[%s791 + $0x88] sm:$0xff]
        %v1976 = vld [vmem:[%s791 + $0x90] sm:$0xff]
        %v1977 = vld [vmem:[%s791 + $0x98] sm:$0xff]
        %v1978 = vld [vmem:[%s791 + $0xa0] sm:$0xff]
        %v1979 = vld [vmem:[%s791 + $0xa8] sm:$0xff]
        %v1980 = vld [vmem:[%s791 + $0xb0] sm:$0xff]
        %v1981 = vld [vmem:[%s791 + $0xb8] sm:$0xff]
        %v1982 = vld [vmem:[%s791 + $0xc0] sm:$0xff]
        %v1983 = vld [vmem:[%s791 + $0xc8] sm:$0xff]
        %v1984 = vld [vmem:[%s791 + $0xd0] sm:$0xff]
        %v1985 = vld [vmem:[%s791 + $0xd8] sm:$0xff]
        %v1986 = vld [vmem:[%s791 + $0xe0] sm:$0xff]
        %v1987 = vld [vmem:[%s791 + $0xe8] sm:$0xff]
        %v1988 = vld [vmem:[%s791 + $0xf0] sm:$0xff]
        %v1989 = vld [vmem:[%s791 + $0xf8] sm:$0xff]
        %v1990 = vpack.c.bf16 %v1959, %v1958
        %v1991 = vpack.c.bf16 %v1961, %v1960
        %v1992 = vpack.c.bf16 %v1963, %v1962
        %v1993 = vpack.c.bf16 %v1965, %v1964
        %v1994 = vpack.c.bf16 %v1967, %v1966
        %v1995 = vpack.c.bf16 %v1969, %v1968
        %v1996 = vpack.c.bf16 %v1971, %v1970
        %v1997 = vpack.c.bf16 %v1973, %v1972
        %v1998 = vpack.c.bf16 %v1975, %v1974
        %v1999 = vpack.c.bf16 %v1977, %v1976
        %v2000 = vpack.c.bf16 %v1979, %v1978
        %v2001 = vpack.c.bf16 %v1981, %v1980
        %v2002 = vpack.c.bf16 %v1983, %v1982
        %v2003 = vpack.c.bf16 %v1985, %v1984
        %v2004 = vpack.c.bf16 %v1987, %v1986
        %v2005 = vpack.c.bf16 %v1989, %v1988
        %v2006 = vld [vmem:[#allocation17] sm:$0xff]
        %v2007 = vld [vmem:[#allocation17 + $0x8] sm:$0xff]
        %v2008 = vld [vmem:[#allocation17 + $0x10] sm:$0xff]
        %v2009 = vld [vmem:[#allocation17 + $0x18] sm:$0xff]
        %v2010 = vld [vmem:[#allocation17 + $0x20] sm:$0xff]
        %v2011 = vld [vmem:[#allocation17 + $0x28] sm:$0xff]
        %v2012 = vld [vmem:[#allocation17 + $0x30] sm:$0xff]
        %v2013 = vld [vmem:[#allocation17 + $0x38] sm:$0xff]
        %v2022 = vunpack.c.l.b16 %v2006
        %v2023 = vunpack.c.h.b16 %v2006
        %v2024 = vunpack.c.l.b16 %v2007
        %v2025 = vunpack.c.h.b16 %v2007
        %v2026 = vunpack.c.l.b16 %v2008
        %v2027 = vunpack.c.h.b16 %v2008
        %v2028 = vunpack.c.l.b16 %v2009
        %v2029 = vunpack.c.h.b16 %v2009
        %v2030 = vunpack.c.l.b16 %v2010
        %v2031 = vunpack.c.h.b16 %v2010
        %v2032 = vunpack.c.l.b16 %v2011
        %v2033 = vunpack.c.h.b16 %v2011
        %v2034 = vunpack.c.l.b16 %v2012
        %v2035 = vunpack.c.h.b16 %v2012
        %v2036 = vunpack.c.l.b16 %v2013
        %v2037 = vunpack.c.h.b16 %v2013
        %v2038 = vpack.c.b16 %v2024, %v2022
        %v2039 = vpack.c.b16 %v2025, %v2023
        %v2040 = vpack.c.b16 %v2028, %v2026
        %v2041 = vpack.c.b16 %v2029, %v2027
        %v2042 = vpack.c.b16 %v2032, %v2030
        %v2043 = vpack.c.b16 %v2033, %v2031
        %v2044 = vpack.c.b16 %v2036, %v2034
        %v2045 = vpack.c.b16 %v2037, %v2035
        %2054 = vmatprep.subr.bf16.mxu0 0
        %2055 = vmatpush1.bf16.msra.mxu0 %v1990
        %2056 = vmatprep.subr.bf16.mxu0 0
        %2057 = vmatpush1.bf16.msra.mxu0 %v1991
        %2058 = vmatprep.subr.bf16.mxu0 0
        %2059 = vmatpush1.bf16.msra.mxu0 %v1992
        %2060 = vmatprep.subr.bf16.mxu0 0
        %2061 = vmatpush1.bf16.msra.mxu0 %v1993
        %2062 = vmatprep.subr.bf16.mxu0 0
        %2063 = vmatpush1.bf16.msra.mxu0 %v1994
        %2064 = vmatprep.subr.bf16.mxu0 0
        %2065 = vmatpush1.bf16.msra.mxu0 %v1995
        %2066 = vmatprep.subr.bf16.mxu0 0
        %2067 = vmatpush1.bf16.msra.mxu0 %v1996
        %2068 = vmatprep.subr.bf16.mxu0 0
        %2069 = vmatpush1.bf16.msra.mxu0 %v1997
        %2070 = vmatprep.subr.bf16.mxu0 0
        %2071 = vmatpush1.bf16.msra.mxu0 %v1998
        %2072 = vmatprep.subr.bf16.mxu0 0
        %2073 = vmatpush1.bf16.msra.mxu0 %v1999
        %2074 = vmatprep.subr.bf16.mxu0 0
        %2075 = vmatpush1.bf16.msra.mxu0 %v2000
        %2076 = vmatprep.subr.bf16.mxu0 0
        %2077 = vmatpush1.bf16.msra.mxu0 %v2001
        %2078 = vmatprep.subr.bf16.mxu0 0
        %2079 = vmatpush1.bf16.msra.mxu0 %v2002
        %2080 = vmatprep.subr.bf16.mxu0 0
        %2081 = vmatpush1.bf16.msra.mxu0 %v2003
        %2082 = vmatprep.subr.bf16.mxu0 0
        %2083 = vmatpush1.bf16.msra.mxu0 %v2004
        %2084 = vmatprep.subr.bf16.mxu0 0
        %2085 = vmatpush1.bf16.msra.mxu0 %v2005
        %2086 = vmatprep.mubr.bf16.mxu0 %v2039
        %2087 = vmatmul.mubr.bf16.gmra.mrb[0].mxu0 %v2038
        %v2088 = vpop.f32.mrb[0].mxu0
        %v2089 = vadd.f32 0.0, %v2088
        %v2090 = vpop.f32.mrb[0].mxu0
        %v2091 = vpop.f32.mrb[0].mxu0
        %v2092 = vadd.f32 0.0, %v2091
        %v2093 = vpop.f32.mrb[0].mxu0
        %2094 = vmatprep.mubr.bf16.mxu0 %v2041
        %2095 = vmatmul.mubr.bf16.gmra.mrb[0].mxu0 %v2040
        %v2096 = vpop.f32.mrb[0].mxu0
        %v2097 = vadd.f32 0.0, %v2096
        %v2098 = vpop.f32.mrb[0].mxu0
        %v2099 = vpop.f32.mrb[0].mxu0
        %v2100 = vadd.f32 0.0, %v2099
        %v2101 = vpop.f32.mrb[0].mxu0
        %2102 = vmatprep.mubr.bf16.mxu0 %v2043
        %2103 = vmatmul.mubr.bf16.gmra.mrb[0].mxu0 %v2042
        %v2104 = vpop.f32.mrb[0].mxu0
        %v2105 = vadd.f32 0.0, %v2104
        %v2106 = vpop.f32.mrb[0].mxu0
        %v2107 = vpop.f32.mrb[0].mxu0
        %v2108 = vadd.f32 0.0, %v2107
        %v2109 = vpop.f32.mrb[0].mxu0
        %2110 = vmatprep.mubr.bf16.mxu0 %v2045
        %2111 = vmatmul.mubr.bf16.gmra.mrb[0].mxu0 %v2044
        %v2112 = vpop.f32.mrb[0].mxu0
        %v2113 = vadd.f32 0.0, %v2112
        %v2114 = vpop.f32.mrb[0].mxu0
        %v2115 = vpop.f32.mrb[0].mxu0
        %v2116 = vadd.f32 0.0, %v2115
        %v2117 = vpop.f32.mrb[0].mxu0
        %2118 = vdwg.mxu0
        %v2119 = vld [vmem:[#allocation19] sm:$0xff]
        %v2120 = vld [vmem:[#allocation19 + $0x8] sm:$0xff]
        %v2121 = vld [vmem:[#allocation19 + $0x10] sm:$0xff]
        %v2122 = vld [vmem:[#allocation19 + $0x18] sm:$0xff]
        %v2123 = vld [vmem:[#allocation19 + $0x20] sm:$0xff]
        %v2124 = vld [vmem:[#allocation19 + $0x28] sm:$0xff]
        %v2125 = vld [vmem:[#allocation19 + $0x30] sm:$0xff]
        %v2126 = vld [vmem:[#allocation19 + $0x38] sm:$0xff]
        %2128 = vset.pattern.permute.xlu0 0
        %2129 = vperm.xlu0 %2128, %v2119
        %v2130 = vpop.permute.xlu0 %2129
        %2133 = vset.pattern.permute.xlu0 0
        %2134 = vperm.xlu0 %2133, %v2120
        %v2135 = vpop.permute.xlu0 %2134
        %2138 = vset.pattern.permute.xlu0 0
        %2139 = vperm.xlu0 %2138, %v2121
        %v2140 = vpop.permute.xlu0 %2139
        %2143 = vset.pattern.permute.xlu0 0
        %2144 = vperm.xlu0 %2143, %v2122
        %v2145 = vpop.permute.xlu0 %2144
        %2148 = vset.pattern.permute.xlu0 0
        %2149 = vperm.xlu0 %2148, %v2123
        %v2150 = vpop.permute.xlu0 %2149
        %2153 = vset.pattern.permute.xlu0 0
        %2154 = vperm.xlu0 %2153, %v2124
        %v2155 = vpop.permute.xlu0 %2154
        %2158 = vset.pattern.permute.xlu0 0
        %2159 = vperm.xlu0 %2158, %v2125
        %v2160 = vpop.permute.xlu0 %2159
        %2163 = vset.pattern.permute.xlu0 0
        %2164 = vperm.xlu0 %2163, %v2126
        %v2165 = vpop.permute.xlu0 %2164
        %v2167 = vmul.f32 %v2089, %v2130
        %v2168 = vmul.f32 %v2092, %v2135
        %v2169 = vmul.f32 %v2097, %v2140
        %v2170 = vmul.f32 %v2100, %v2145
        %v2171 = vmul.f32 %v2105, %v2150
        %v2172 = vmul.f32 %v2108, %v2155
        %v2173 = vmul.f32 %v2113, %v2160
        %v2174 = vmul.f32 %v2116, %v2165
        %v2175 = vld [vmem:[#allocation20] sm:$0xff]
        %v2176 = vld [vmem:[#allocation20 + $0x8] sm:$0xff]
        %v2177 = vld [vmem:[#allocation20 + $0x10] sm:$0xff]
        %v2178 = vld [vmem:[#allocation20 + $0x18] sm:$0xff]
        %v2179 = vld [vmem:[#allocation20 + $0x20] sm:$0xff]
        %v2180 = vld [vmem:[#allocation20 + $0x28] sm:$0xff]
        %v2181 = vld [vmem:[#allocation20 + $0x30] sm:$0xff]
        %v2182 = vld [vmem:[#allocation20 + $0x38] sm:$0xff]
        %2184 = vset.pattern.permute.xlu0 0
        %2185 = vperm.xlu0 %2184, %v2175
        %v2186 = vpop.permute.xlu0 %2185
        %2189 = vset.pattern.permute.xlu0 0
        %2190 = vperm.xlu0 %2189, %v2176
        %v2191 = vpop.permute.xlu0 %2190
        %2194 = vset.pattern.permute.xlu0 0
        %2195 = vperm.xlu0 %2194, %v2177
        %v2196 = vpop.permute.xlu0 %2195
        %2199 = vset.pattern.permute.xlu0 0
        %2200 = vperm.xlu0 %2199, %v2178
        %v2201 = vpop.permute.xlu0 %2200
        %2204 = vset.pattern.permute.xlu0 0
        %2205 = vperm.xlu0 %2204, %v2179
        %v2206 = vpop.permute.xlu0 %2205
        %2209 = vset.pattern.permute.xlu0 0
        %2210 = vperm.xlu0 %2209, %v2180
        %v2211 = vpop.permute.xlu0 %2210
        %2214 = vset.pattern.permute.xlu0 0
        %2215 = vperm.xlu0 %2214, %v2181
        %v2216 = vpop.permute.xlu0 %2215
        %2219 = vset.pattern.permute.xlu0 0
        %2220 = vperm.xlu0 %2219, %v2182
        %v2221 = vpop.permute.xlu0 %2220
        %v2223 = vadd.f32 %v2167, %v2186
        %v2224 = vadd.f32 %v2168, %v2191
        %v2225 = vadd.f32 %v2169, %v2196
        %v2226 = vadd.f32 %v2170, %v2201
        %v2227 = vadd.f32 %v2171, %v2206
        %v2228 = vadd.f32 %v2172, %v2211
        %v2229 = vadd.f32 %v2173, %v2216
        %v2230 = vadd.f32 %v2174, %v2221
        %v2231 = vpack.c.bf16 %v2224, %v2223
        %v2232 = vpack.c.bf16 %v2226, %v2225
        %v2233 = vpack.c.bf16 %v2228, %v2227
        %v2234 = vpack.c.bf16 %v2230, %v2229
        %v2235 = vld [vmem:[#allocation25] sm:$0xf]
        %v2236 = vld [vmem:[#allocation25 + $0x4] sm:$0xf]
        %v2237 = vld [vmem:[#allocation25 + $0x8] sm:$0x1]
        %v2241 = vunpack.c.l.b16 %v2235
        %v2242 = vunpack.c.l.b16 %v2236
        %v2243 = vunpack.c.l.b16 %v2237
        %v2244 = vpack.c.b16 %v2242, %v2241
        %v2245 = vpack.c.b16 %v2243, %v2243
        %v2247 = vsel %vm974, %v2244, 0
        %v2250 = vsel %vm974, %v2245, 0
        %2252 = vmatprep.subr.bf16.mxu0 0
        %2253 = vmatpush1.bf16.msra.mxu0 %v2231
        %2254 = vmatprep.subr.bf16.mxu0 0
        %2255 = vmatpush1.bf16.msra.mxu0 %v2232
        %2256 = vmatprep.subr.bf16.mxu0 0
        %2257 = vmatpush1.bf16.msra.mxu0 %v2233
        %2258 = vmatprep.subr.bf16.mxu0 0
        %2259 = vmatpush1.bf16.msra.mxu0 %v2234
        %2260 = vmatprep.subr.bf16.mxu0 0
        %2261 = vmatpush1.bf16.msra.mxu0 0
        %2262 = vmatprep.subr.bf16.mxu0 0
        %2263 = vmatpush1.bf16.msra.mxu0 0
        %2264 = vmatprep.subr.bf16.mxu0 0
        %2265 = vmatpush1.bf16.msra.mxu0 0
        %2266 = vmatprep.subr.bf16.mxu0 0
        %2267 = vmatpush1.bf16.msra.mxu0 0
        %2268 = vmatprep.subr.bf16.mxu0 0
        %2269 = vmatpush1.bf16.msra.mxu0 0
        %2270 = vmatprep.subr.bf16.mxu0 0
        %2271 = vmatpush1.bf16.msra.mxu0 0
        %2272 = vmatprep.subr.bf16.mxu0 0
        %2273 = vmatpush1.bf16.msra.mxu0 0
        %2274 = vmatprep.subr.bf16.mxu0 0
        %2275 = vmatpush1.bf16.msra.mxu0 0
        %2276 = vmatprep.subr.bf16.mxu0 0
        %2277 = vmatpush1.bf16.msra.mxu0 0
        %2278 = vmatprep.subr.bf16.mxu0 0
        %2279 = vmatpush1.bf16.msra.mxu0 0
        %2280 = vmatprep.subr.bf16.mxu0 0
        %2281 = vmatpush1.bf16.msra.mxu0 0
        %2282 = vmatprep.subr.bf16.mxu0 0
        %2283 = vmatpush1.bf16.msra.mxu0 0
        %2284 = vmatprep.mubr.bf16.mxu0 0
        %2285 = vmatmul.mubr.bf16.gmra.mrb[0].mxu0 %v2247
        %v2286 = vpop.f32.mrb[0].mxu0
        %v2287 = vadd.f32 0.0, %v2286
        %v2288 = vpop.f32.mrb[0].mxu0
        %v2289 = vpop.f32.mrb[0].mxu0
        %v2290 = vadd.f32 0.0, %v2289
        %v2291 = vpop.f32.mrb[0].mxu0
        %2292 = vmatprep.mubr.bf16.mxu0 0
        %2293 = vmatmul.mubr.bf16.gmra.mrb[0].mxu0 %v2250
        %v2294 = vpop.f32.mrb[0].mxu0
        %v2295 = vadd.f32 0.0, %v2294
        %v2296 = vpop.f32.mrb[0].mxu0
        %v2297 = vpop.f32.mrb[0].mxu0
        %v2298 = vpop.f32.mrb[0].mxu0
        %2299 = vdwg.mxu0
        %2303 = vrot.lane.b32.xlu0 %v2287, 5
        %v2304 = vpop.permute.xlu0 %2303
        %2305 = vrot.lane.b32.xlu0 %v2290, 5
        %v2306 = vpop.permute.xlu0 %2305
        %2307 = vrot.lane.b32.xlu0 %v2295, 5
        %v2308 = vpop.permute.xlu0 %2307
        %vm2312 = vcmask 39936
        %v2313 = vsel %vm2312, 0.0, %v2304
        %v2314 = vsel %vm2312, 0.0, %v2306
        %v2315 = vsel %vm2312, 0.0, %v2308
        %vm2316 = vcmask 171008
        %v2317 = vsel %vm2316, %v2313, 0.0
        %v2318 = vsel %vm2316, %v2314, 0.0
        %v2319 = vsel %vm2316, %v2315, 0.0
        %vm2320 = vcmp.lt.s32.totalorder %v1302, 0
        %v2321 = vsub.s32 0, %v1302
        %v2322 = vsel %vm2320, %v2321, %v1302
        %v2323 = vshrl.u32 %v2322, 2
        %v2324 = vand.u32 %v2322, 3
        %v2325 = vsub.s32 0, %v2324
        %v2326 = vsel %vm2320, %v2325, %v2324
        %vm2327 = vcmp.ne.s32.totalorder %v2326, 0
        %vm2328 = vcmp.lt.s32.totalorder %v2326, 0
        %vm2329 = vmand %vm2328, %vm2327
        %v2330 = vadd.s32 %v2326, 4
        %v2331 = vsel %vm2329, %v2330, %v2326
        %vm2332 = vcmp.ge.s32.totalorder %v2331, 1
        %v2333 = vsel %vm2332, 1, 0
        %v2334 = vcvt.s32.f32 %v2333
        %vm2335 = vcmp.lt.s32.totalorder %v2331, 3
        %v2336 = vsel %vm2335, 1, 0
        %v2337 = vcvt.s32.f32 %v2336
        %v2338 = vmul.f32 %v2317, %v2334
        %v2339 = vadd.f32 %v2338, 0.0
        %v2341 = vrot.slane %v2317, 2
        %2342 = vrot.lane.b32.xlu0 %v2341, 127
        %v2343 = vpop.permute.xlu0 %2342
        %v2345 = vadd.f32 %v2339, %v2343
        %2347 = vrot.lane.b32.xlu0 %v2337, 2
        %v2348 = vpop.permute.xlu0 %2347
        %v2350 = vmul.f32 %v2317, %v2348
        %v2352 = vrot.slane %v2350, 4
        %2353 = vrot.lane.b32.xlu0 %v2352, 126
        %v2354 = vpop.permute.xlu0 %2353
        %v2356 = vadd.f32 %v2345, %v2354
        %2358 = vrot.lane.b32.xlu0 %v2334, 4
        %v2359 = vpop.permute.xlu0 %2358
        %v2361 = vmul.f32 %v2317, %v2359
        %v2363 = vrot.slane %v2361, 6
        %2364 = vrot.lane.b32.xlu0 %v2363, 124
        %v2365 = vpop.permute.xlu0 %2364
        %v2367 = vadd.f32 %v2356, %v2365
        %2369 = vrot.lane.b32.xlu0 %v2318, 123
        %v2370 = vpop.permute.xlu0 %2369
        %v2372 = vadd.f32 %v2367, %v2370
        %2373 = vrot.lane.b32.xlu0 %v2337, 6
        %v2374 = vpop.permute.xlu0 %2373
        %v2376 = vmul.f32 %v2318, %v2374
        %v2378 = vrot.slane %v2376, 2
        %2379 = vrot.lane.b32.xlu0 %v2378, 122
        %v2380 = vpop.permute.xlu0 %2379
        %v2382 = vadd.f32 %v2372, %v2380
        %2383 = vrot.lane.b32.xlu0 %v2334, 8
        %v2384 = vpop.permute.xlu0 %2383
        %v2386 = vmul.f32 %v2318, %v2384
        %v2388 = vrot.slane %v2386, 4
        %2389 = vrot.lane.b32.xlu0 %v2388, 120
        %v2390 = vpop.permute.xlu0 %2389
        %v2392 = vadd.f32 %v2382, %v2390
        %v2393 = vrot.slane %v2318, 6
        %2394 = vrot.lane.b32.xlu0 %v2393, 119
        %v2395 = vpop.permute.xlu0 %2394
        %v2397 = vadd.f32 %v2392, %v2395
        %2398 = vrot.lane.b32.xlu0 %v2337, 10
        %v2399 = vpop.permute.xlu0 %2398
        %v2401 = vmul.f32 %v2319, %v2399
        %2403 = vrot.lane.b32.xlu0 %v2401, 118
        %v2404 = vpop.permute.xlu0 %2403
        %v2406 = vadd.f32 %v2397, %v2404
        %v2407 = vpack.c.bf16 %v1957, %v1957
        %v2408 = vpack.c.bf16 %v2406, %v2406
        %v2409 = vld [vmem:[#allocation26] sm:$0xf]
        %vm2410 = vcmask 64512
        %v2412 = vsel %vm2410, %v1782, 0
        %v2415 = vsel %vm2410, %v1783, 0
        %v2418 = vsel %vm2410, %v1784, 0
        %v2421 = vsel %vm2410, %v1785, 0
        %v2424 = vsel %vm2410, %v2407, 0
        %vm2426 = vcmask 1043456
        %v2428 = vsel %vm2426, %v2409, 0
        %2430 = vmatprep.subr.bf16.mxu0 0
        %2431 = vmatpush1.bf16.msra.mxu0 %v2428
        %2432 = vmatprep.subr.bf16.mxu0 0
        %2433 = vmatpush1.bf16.msra.mxu0 0
        %2434 = vmatprep.subr.bf16.mxu0 0
        %2435 = vmatpush1.bf16.msra.mxu0 0
        %2436 = vmatprep.subr.bf16.mxu0 0
        %2437 = vmatpush1.bf16.msra.mxu0 0
        %2438 = vmatprep.subr.bf16.mxu0 0
        %2439 = vmatpush1.bf16.msra.mxu0 0
        %2440 = vmatprep.subr.bf16.mxu0 0
        %2441 = vmatpush1.bf16.msra.mxu0 0
        %2442 = vmatprep.subr.bf16.mxu0 0
        %2443 = vmatpush1.bf16.msra.mxu0 0
        %2444 = vmatprep.subr.bf16.mxu0 0
        %2445 = vmatpush1.bf16.msra.mxu0 0
        %2446 = vmatprep.subr.bf16.mxu0 0
        %2447 = vmatpush1.bf16.msra.mxu0 0
        %2448 = vmatprep.subr.bf16.mxu0 0
        %2449 = vmatpush1.bf16.msra.mxu0 0
        %2450 = vmatprep.subr.bf16.mxu0 0
        %2451 = vmatpush1.bf16.msra.mxu0 0
        %2452 = vmatprep.subr.bf16.mxu0 0
        %2453 = vmatpush1.bf16.msra.mxu0 0
        %2454 = vmatprep.subr.bf16.mxu0 0
        %2455 = vmatpush1.bf16.msra.mxu0 0
        %2456 = vmatprep.subr.bf16.mxu0 0
        %2457 = vmatpush1.bf16.msra.mxu0 0
        %2458 = vmatprep.subr.bf16.mxu0 0
        %2459 = vmatpush1.bf16.msra.mxu0 0
        %2460 = vmatprep.subr.bf16.mxu0 0
        %2461 = vmatpush1.bf16.msra.mxu0 0
        %2462 = vmatprep.mubr.bf16.mxu0 0
        %2463 = vmatmul.mubr.bf16.gmra.mrb[0].mxu0 %v2412
        %v2464 = vpop.f32.mrb[0].mxu0
        %v2465 = vadd.f32 0.0, %v2464
        %v2466 = vpop.f32.mrb[0].mxu0
        %v2467 = vpop.f32.mrb[0].mxu0
        %v2468 = vadd.f32 0.0, %v2467
        %v2469 = vpop.f32.mrb[0].mxu0
        %2470 = vmatprep.mubr.bf16.mxu0 0
        %2471 = vmatmul.mubr.bf16.gmra.mrb[0].mxu0 %v2415
        %v2472 = vpop.f32.mrb[0].mxu0
        %v2473 = vadd.f32 0.0, %v2472
        %v2474 = vpop.f32.mrb[0].mxu0
        %v2475 = vpop.f32.mrb[0].mxu0
        %v2476 = vadd.f32 0.0, %v2475
        %v2477 = vpop.f32.mrb[0].mxu0
        %2478 = vmatprep.mubr.bf16.mxu0 0
        %2479 = vmatmul.mubr.bf16.gmra.mrb[0].mxu0 %v2418
        %v2480 = vpop.f32.mrb[0].mxu0
        %v2481 = vadd.f32 0.0, %v2480
        %v2482 = vpop.f32.mrb[0].mxu0
        %v2483 = vpop.f32.mrb[0].mxu0
        %v2484 = vadd.f32 0.0, %v2483
        %v2485 = vpop.f32.mrb[0].mxu0
        %2486 = vmatprep.mubr.bf16.mxu0 0
        %2487 = vmatmul.mubr.bf16.gmra.mrb[0].mxu0 %v2421
        %v2488 = vpop.f32.mrb[0].mxu0
        %v2489 = vadd.f32 0.0, %v2488
        %v2490 = vpop.f32.mrb[0].mxu0
        %v2491 = vpop.f32.mrb[0].mxu0
        %v2492 = vadd.f32 0.0, %v2491
        %v2493 = vpop.f32.mrb[0].mxu0
        %2494 = vmatprep.mubr.bf16.mxu0 0
        %2495 = vmatmul.mubr.bf16.gmra.mrb[0].mxu0 %v2424
        %v2496 = vpop.f32.mrb[0].mxu0
        %v2497 = vadd.f32 0.0, %v2496
        %v2498 = vpop.f32.mrb[0].mxu0
        %v2499 = vpop.f32.mrb[0].mxu0
        %v2500 = vpop.f32.mrb[0].mxu0
        %2501 = vdwg.mxu0
        %2507 = vrot.lane.b32.xlu0 %v1782, 120
        %v2508 = vpop.permute.xlu0 %2507
        %2509 = vrot.lane.b32.xlu0 %v1783, 120
        %v2510 = vpop.permute.xlu0 %2509
        %2511 = vrot.lane.b32.xlu0 %v1784, 120
        %v2512 = vpop.permute.xlu0 %2511
        %2513 = vrot.lane.b32.xlu0 %v1785, 120
        %v2514 = vpop.permute.xlu0 %2513
        %2515 = vrot.lane.b32.xlu0 %v2407, 120
        %v2516 = vpop.permute.xlu0 %2515
        %v2518 = vsel %vm2410, %v2508, 0
        %v2521 = vsel %vm2410, %v2510, 0
        %v2524 = vsel %vm2410, %v2512, 0
        %v2527 = vsel %vm2410, %v2514, 0
        %v2530 = vsel %vm2410, %v2516, 0
        %2532 = vmatprep.subr.bf16.mxu0 0
        %2533 = vmatpush1.bf16.msra.mxu0 %v2428
        %2534 = vmatprep.subr.bf16.mxu0 0
        %2535 = vmatpush1.bf16.msra.mxu0 0
        %2536 = vmatprep.subr.bf16.mxu0 0
        %2537 = vmatpush1.bf16.msra.mxu0 0
        %2538 = vmatprep.subr.bf16.mxu0 0
        %2539 = vmatpush1.bf16.msra.mxu0 0
        %2540 = vmatprep.subr.bf16.mxu0 0
        %2541 = vmatpush1.bf16.msra.mxu0 0
        %2542 = vmatprep.subr.bf16.mxu0 0
        %2543 = vmatpush1.bf16.msra.mxu0 0
        %2544 = vmatprep.subr.bf16.mxu0 0
        %2545 = vmatpush1.bf16.msra.mxu0 0
        %2546 = vmatprep.subr.bf16.mxu0 0
        %2547 = vmatpush1.bf16.msra.mxu0 0
        %2548 = vmatprep.subr.bf16.mxu0 0
        %2549 = vmatpush1.bf16.msra.mxu0 0
        %2550 = vmatprep.subr.bf16.mxu0 0
        %2551 = vmatpush1.bf16.msra.mxu0 0
        %2552 = vmatprep.subr.bf16.mxu0 0
        %2553 = vmatpush1.bf16.msra.mxu0 0
        %2554 = vmatprep.subr.bf16.mxu0 0
        %2555 = vmatpush1.bf16.msra.mxu0 0
        %2556 = vmatprep.subr.bf16.mxu0 0
        %2557 = vmatpush1.bf16.msra.mxu0 0
        %2558 = vmatprep.subr.bf16.mxu0 0
        %2559 = vmatpush1.bf16.msra.mxu0 0
        %2560 = vmatprep.subr.bf16.mxu0 0
        %2561 = vmatpush1.bf16.msra.mxu0 0
        %2562 = vmatprep.subr.bf16.mxu0 0
        %2563 = vmatpush1.bf16.msra.mxu0 0
        %2564 = vmatprep.mubr.bf16.mxu0 0
        %2565 = vmatmul.mubr.bf16.gmra.mrb[0].mxu0 %v2518
        %v2566 = vpop.f32.mrb[0].mxu0
        %v2567 = vadd.f32 0.0, %v2566
        %v2568 = vpop.f32.mrb[0].mxu0
        %v2569 = vpop.f32.mrb[0].mxu0
        %v2570 = vadd.f32 0.0, %v2569
        %v2571 = vpop.f32.mrb[0].mxu0
        %2572 = vmatprep.mubr.bf16.mxu0 0
        %2573 = vmatmul.mubr.bf16.gmra.mrb[0].mxu0 %v2521
        %v2574 = vpop.f32.mrb[0].mxu0
        %v2575 = vadd.f32 0.0, %v2574
        %v2576 = vpop.f32.mrb[0].mxu0
        %v2577 = vpop.f32.mrb[0].mxu0
        %v2578 = vadd.f32 0.0, %v2577
        %v2579 = vpop.f32.mrb[0].mxu0
        %2580 = vmatprep.mubr.bf16.mxu0 0
        %2581 = vmatmul.mubr.bf16.gmra.mrb[0].mxu0 %v2524
        %v2582 = vpop.f32.mrb[0].mxu0
        %v2583 = vadd.f32 0.0, %v2582
        %v2584 = vpop.f32.mrb[0].mxu0
        %v2585 = vpop.f32.mrb[0].mxu0
        %v2586 = vadd.f32 0.0, %v2585
        %v2587 = vpop.f32.mrb[0].mxu0
        %2588 = vmatprep.mubr.bf16.mxu0 0
        %2589 = vmatmul.mubr.bf16.gmra.mrb[0].mxu0 %v2527
        %v2590 = vpop.f32.mrb[0].mxu0
        %v2591 = vadd.f32 0.0, %v2590
        %v2592 = vpop.f32.mrb[0].mxu0
        %v2593 = vpop.f32.mrb[0].mxu0
        %v2594 = vadd.f32 0.0, %v2593
        %v2595 = vpop.f32.mrb[0].mxu0
        %2596 = vmatprep.mubr.bf16.mxu0 0
        %2597 = vmatmul.mubr.bf16.gmra.mrb[0].mxu0 %v2530
        %v2598 = vpop.f32.mrb[0].mxu0
        %v2599 = vadd.f32 0.0, %v2598
        %v2600 = vpop.f32.mrb[0].mxu0
        %v2601 = vpop.f32.mrb[0].mxu0
        %v2602 = vpop.f32.mrb[0].mxu0
        %2603 = vdwg.mxu0
        %2604 = vrot.lane.b32.xlu0 %v1782, 112
        %v2605 = vpop.permute.xlu0 %2604
        %2606 = vrot.lane.b32.xlu0 %v1783, 112
        %v2607 = vpop.permute.xlu0 %2606
        %2608 = vrot.lane.b32.xlu0 %v1784, 112
        %v2609 = vpop.permute.xlu0 %2608
        %2610 = vrot.lane.b32.xlu0 %v1785, 112
        %v2611 = vpop.permute.xlu0 %2610
        %2612 = vrot.lane.b32.xlu0 %v2407, 112
        %v2613 = vpop.permute.xlu0 %2612
        %v2615 = vsel %vm2410, %v2605, 0
        %v2618 = vsel %vm2410, %v2607, 0
        %v2621 = vsel %vm2410, %v2609, 0
        %v2624 = vsel %vm2410, %v2611, 0
        %v2627 = vsel %vm2410, %v2613, 0
        %2629 = vmatprep.subr.bf16.mxu0 0
        %2630 = vmatpush1.bf16.msra.mxu0 %v2428
        %2631 = vmatprep.subr.bf16.mxu0 0
        %2632 = vmatpush1.bf16.msra.mxu0 0
        %2633 = vmatprep.subr.bf16.mxu0 0
        %2634 = vmatpush1.bf16.msra.mxu0 0
        %2635 = vmatprep.subr.bf16.mxu0 0
        %2636 = vmatpush1.bf16.msra.mxu0 0
        %2637 = vmatprep.subr.bf16.mxu0 0
        %2638 = vmatpush1.bf16.msra.mxu0 0
        %2639 = vmatprep.subr.bf16.mxu0 0
        %2640 = vmatpush1.bf16.msra.mxu0 0
        %2641 = vmatprep.subr.bf16.mxu0 0
        %2642 = vmatpush1.bf16.msra.mxu0 0
        %2643 = vmatprep.subr.bf16.mxu0 0
        %2644 = vmatpush1.bf16.msra.mxu0 0
        %2645 = vmatprep.subr.bf16.mxu0 0
        %2646 = vmatpush1.bf16.msra.mxu0 0
        %2647 = vmatprep.subr.bf16.mxu0 0
        %2648 = vmatpush1.bf16.msra.mxu0 0
        %2649 = vmatprep.subr.bf16.mxu0 0
        %2650 = vmatpush1.bf16.msra.mxu0 0
        %2651 = vmatprep.subr.bf16.mxu0 0
        %2652 = vmatpush1.bf16.msra.mxu0 0
        %2653 = vmatprep.subr.bf16.mxu0 0
        %2654 = vmatpush1.bf16.msra.mxu0 0
        %2655 = vmatprep.subr.bf16.mxu0 0
        %2656 = vmatpush1.bf16.msra.mxu0 0
        %2657 = vmatprep.subr.bf16.mxu0 0
        %2658 = vmatpush1.bf16.msra.mxu0 0
        %2659 = vmatprep.subr.bf16.mxu0 0
        %2660 = vmatpush1.bf16.msra.mxu0 0
        %2661 = vmatprep.mubr.bf16.mxu0 0
        %2662 = vmatmul.mubr.bf16.gmra.mrb[0].mxu0 %v2615
        %v2663 = vpop.f32.mrb[0].mxu0
        %v2664 = vadd.f32 0.0, %v2663
        %v2665 = vpop.f32.mrb[0].mxu0
        %v2666 = vpop.f32.mrb[0].mxu0
        %v2667 = vadd.f32 0.0, %v2666
        %v2668 = vpop.f32.mrb[0].mxu0
        %2669 = vmatprep.mubr.bf16.mxu0 0
        %2670 = vmatmul.mubr.bf16.gmra.mrb[0].mxu0 %v2618
        %v2671 = vpop.f32.mrb[0].mxu0
        %v2672 = vadd.f32 0.0, %v2671
        %v2673 = vpop.f32.mrb[0].mxu0
        %v2674 = vpop.f32.mrb[0].mxu0
        %v2675 = vadd.f32 0.0, %v2674
        %v2676 = vpop.f32.mrb[0].mxu0
        %2677 = vmatprep.mubr.bf16.mxu0 0
        %2678 = vmatmul.mubr.bf16.gmra.mrb[0].mxu0 %v2621
        %v2679 = vpop.f32.mrb[0].mxu0
        %v2680 = vadd.f32 0.0, %v2679
        %v2681 = vpop.f32.mrb[0].mxu0
        %v2682 = vpop.f32.mrb[0].mxu0
        %v2683 = vadd.f32 0.0, %v2682
        %v2684 = vpop.f32.mrb[0].mxu0
        %2685 = vmatprep.mubr.bf16.mxu0 0
        %2686 = vmatmul.mubr.bf16.gmra.mrb[0].mxu0 %v2624
        %v2687 = vpop.f32.mrb[0].mxu0
        %v2688 = vadd.f32 0.0, %v2687
        %v2689 = vpop.f32.mrb[0].mxu0
        %v2690 = vpop.f32.mrb[0].mxu0
        %v2691 = vadd.f32 0.0, %v2690
        %v2692 = vpop.f32.mrb[0].mxu0
        %2693 = vmatprep.mubr.bf16.mxu0 0
        %2694 = vmatmul.mubr.bf16.gmra.mrb[0].mxu0 %v2627
        %v2695 = vpop.f32.mrb[0].mxu0
        %v2696 = vadd.f32 0.0, %v2695
        %v2697 = vpop.f32.mrb[0].mxu0
        %v2698 = vpop.f32.mrb[0].mxu0
        %v2699 = vpop.f32.mrb[0].mxu0
        %2700 = vdwg.mxu0
        %2701 = vrot.lane.b32.xlu0 %v1782, 104
        %v2702 = vpop.permute.xlu0 %2701
        %2703 = vrot.lane.b32.xlu0 %v1783, 104
        %v2704 = vpop.permute.xlu0 %2703
        %2705 = vrot.lane.b32.xlu0 %v1784, 104
        %v2706 = vpop.permute.xlu0 %2705
        %2707 = vrot.lane.b32.xlu0 %v1785, 104
        %v2708 = vpop.permute.xlu0 %2707
        %2709 = vrot.lane.b32.xlu0 %v2407, 104
        %v2710 = vpop.permute.xlu0 %2709
        %v2712 = vsel %vm2410, %v2702, 0
        %v2715 = vsel %vm2410, %v2704, 0
        %v2718 = vsel %vm2410, %v2706, 0
        %v2721 = vsel %vm2410, %v2708, 0
        %v2724 = vsel %vm2410, %v2710, 0
        %2726 = vmatprep.subr.bf16.mxu0 0
        %2727 = vmatpush1.bf16.msra.mxu0 %v2428
        %2728 = vmatprep.subr.bf16.mxu0 0
        %2729 = vmatpush1.bf16.msra.mxu0 0
        %2730 = vmatprep.subr.bf16.mxu0 0
        %2731 = vmatpush1.bf16.msra.mxu0 0
        %2732 = vmatprep.subr.bf16.mxu0 0
        %2733 = vmatpush1.bf16.msra.mxu0 0
        %2734 = vmatprep.subr.bf16.mxu0 0
        %2735 = vmatpush1.bf16.msra.mxu0 0
        %2736 = vmatprep.subr.bf16.mxu0 0
        %2737 = vmatpush1.bf16.msra.mxu0 0
        %2738 = vmatprep.subr.bf16.mxu0 0
        %2739 = vmatpush1.bf16.msra.mxu0 0
        %2740 = vmatprep.subr.bf16.mxu0 0
        %2741 = vmatpush1.bf16.msra.mxu0 0
        %2742 = vmatprep.subr.bf16.mxu0 0
        %2743 = vmatpush1.bf16.msra.mxu0 0
        %2744 = vmatprep.subr.bf16.mxu0 0
        %2745 = vmatpush1.bf16.msra.mxu0 0
        %2746 = vmatprep.subr.bf16.mxu0 0
        %2747 = vmatpush1.bf16.msra.mxu0 0
        %2748 = vmatprep.subr.bf16.mxu0 0
        %2749 = vmatpush1.bf16.msra.mxu0 0
        %2750 = vmatprep.subr.bf16.mxu0 0
        %2751 = vmatpush1.bf16.msra.mxu0 0
        %2752 = vmatprep.subr.bf16.mxu0 0
        %2753 = vmatpush1.bf16.msra.mxu0 0
        %2754 = vmatprep.subr.bf16.mxu0 0
        %2755 = vmatpush1.bf16.msra.mxu0 0
        %2756 = vmatprep.subr.bf16.mxu0 0
        %2757 = vmatpush1.bf16.msra.mxu0 0
        %2758 = vmatprep.mubr.bf16.mxu0 0
        %2759 = vmatmul.mubr.bf16.gmra.mrb[0].mxu0 %v2712
        %v2760 = vpop.f32.mrb[0].mxu0
        %v2761 = vadd.f32 0.0, %v2760
        %v2762 = vpop.f32.mrb[0].mxu0
        %v2763 = vpop.f32.mrb[0].mxu0
        %v2764 = vadd.f32 0.0, %v2763
        %v2765 = vpop.f32.mrb[0].mxu0
        %2766 = vmatprep.mubr.bf16.mxu0 0
        %2767 = vmatmul.mubr.bf16.gmra.mrb[0].mxu0 %v2715
        %v2768 = vpop.f32.mrb[0].mxu0
        %v2769 = vadd.f32 0.0, %v2768
        %v2770 = vpop.f32.mrb[0].mxu0
        %v2771 = vpop.f32.mrb[0].mxu0
        %v2772 = vadd.f32 0.0, %v2771
        %v2773 = vpop.f32.mrb[0].mxu0
        %2774 = vmatprep.mubr.bf16.mxu0 0
        %2775 = vmatmul.mubr.bf16.gmra.mrb[0].mxu0 %v2718
        %v2776 = vpop.f32.mrb[0].mxu0
        %v2777 = vadd.f32 0.0, %v2776
        %v2778 = vpop.f32.mrb[0].mxu0
        %v2779 = vpop.f32.mrb[0].mxu0
        %v2780 = vadd.f32 0.0, %v2779
        %v2781 = vpop.f32.mrb[0].mxu0
        %2782 = vmatprep.mubr.bf16.mxu0 0
        %2783 = vmatmul.mubr.bf16.gmra.mrb[0].mxu0 %v2721
        %v2784 = vpop.f32.mrb[0].mxu0
        %v2785 = vadd.f32 0.0, %v2784
        %v2786 = vpop.f32.mrb[0].mxu0
        %v2787 = vpop.f32.mrb[0].mxu0
        %v2788 = vadd.f32 0.0, %v2787
        %v2789 = vpop.f32.mrb[0].mxu0
        %2790 = vmatprep.mubr.bf16.mxu0 0
        %2791 = vmatmul.mubr.bf16.gmra.mrb[0].mxu0 %v2724
        %v2792 = vpop.f32.mrb[0].mxu0
        %v2793 = vadd.f32 0.0, %v2792
        %v2794 = vpop.f32.mrb[0].mxu0
        %v2795 = vpop.f32.mrb[0].mxu0
        %v2796 = vpop.f32.mrb[0].mxu0
        %2797 = vdwg.mxu0
        %2798 = vrot.lane.b32.xlu0 %v1782, 96
        %v2799 = vpop.permute.xlu0 %2798
        %2800 = vrot.lane.b32.xlu0 %v1783, 96
        %v2801 = vpop.permute.xlu0 %2800
        %2802 = vrot.lane.b32.xlu0 %v1784, 96
        %v2803 = vpop.permute.xlu0 %2802
        %2804 = vrot.lane.b32.xlu0 %v1785, 96
        %v2805 = vpop.permute.xlu0 %2804
        %2806 = vrot.lane.b32.xlu0 %v2407, 96
        %v2807 = vpop.permute.xlu0 %2806
        %v2809 = vsel %vm2410, %v2799, 0
        %v2812 = vsel %vm2410, %v2801, 0
        %v2815 = vsel %vm2410, %v2803, 0
        %v2818 = vsel %vm2410, %v2805, 0
        %v2821 = vsel %vm2410, %v2807, 0
        %2823 = vmatprep.subr.bf16.mxu0 0
        %2824 = vmatpush1.bf16.msra.mxu0 %v2428
        %2825 = vmatprep.subr.bf16.mxu0 0
        %2826 = vmatpush1.bf16.msra.mxu0 0
        %2827 = vmatprep.subr.bf16.mxu0 0
        %2828 = vmatpush1.bf16.msra.mxu0 0
        %2829 = vmatprep.subr.bf16.mxu0 0
        %2830 = vmatpush1.bf16.msra.mxu0 0
        %2831 = vmatprep.subr.bf16.mxu0 0
        %2832 = vmatpush1.bf16.msra.mxu0 0
        %2833 = vmatprep.subr.bf16.mxu0 0
        %2834 = vmatpush1.bf16.msra.mxu0 0
        %2835 = vmatprep.subr.bf16.mxu0 0
        %2836 = vmatpush1.bf16.msra.mxu0 0
        %2837 = vmatprep.subr.bf16.mxu0 0
        %2838 = vmatpush1.bf16.msra.mxu0 0
        %2839 = vmatprep.subr.bf16.mxu0 0
        %2840 = vmatpush1.bf16.msra.mxu0 0
        %2841 = vmatprep.subr.bf16.mxu0 0
        %2842 = vmatpush1.bf16.msra.mxu0 0
        %2843 = vmatprep.subr.bf16.mxu0 0
        %2844 = vmatpush1.bf16.msra.mxu0 0
        %2845 = vmatprep.subr.bf16.mxu0 0
        %2846 = vmatpush1.bf16.msra.mxu0 0
        %2847 = vmatprep.subr.bf16.mxu0 0
        %2848 = vmatpush1.bf16.msra.mxu0 0
        %2849 = vmatprep.subr.bf16.mxu0 0
        %2850 = vmatpush1.bf16.msra.mxu0 0
        %2851 = vmatprep.subr.bf16.mxu0 0
        %2852 = vmatpush1.bf16.msra.mxu0 0
        %2853 = vmatprep.subr.bf16.mxu0 0
        %2854 = vmatpush1.bf16.msra.mxu0 0
        %2855 = vmatprep.mubr.bf16.mxu0 0
        %2856 = vmatmul.mubr.bf16.gmra.mrb[0].mxu0 %v2809
        %v2857 = vpop.f32.mrb[0].mxu0
        %v2858 = vadd.f32 0.0, %v2857
        %v2859 = vpop.f32.mrb[0].mxu0
        %v2860 = vpop.f32.mrb[0].mxu0
        %v2861 = vadd.f32 0.0, %v2860
        %v2862 = vpop.f32.mrb[0].mxu0
        %2863 = vmatprep.mubr.bf16.mxu0 0
        %2864 = vmatmul.mubr.bf16.gmra.mrb[0].mxu0 %v2812
        %v2865 = vpop.f32.mrb[0].mxu0
        %v2866 = vadd.f32 0.0, %v2865
        %v2867 = vpop.f32.mrb[0].mxu0
        %v2868 = vpop.f32.mrb[0].mxu0
        %v2869 = vadd.f32 0.0, %v2868
        %v2870 = vpop.f32.mrb[0].mxu0
        %2871 = vmatprep.mubr.bf16.mxu0 0
        %2872 = vmatmul.mubr.bf16.gmra.mrb[0].mxu0 %v2815
        %v2873 = vpop.f32.mrb[0].mxu0
        %v2874 = vadd.f32 0.0, %v2873
        %v2875 = vpop.f32.mrb[0].mxu0
        %v2876 = vpop.f32.mrb[0].mxu0
        %v2877 = vadd.f32 0.0, %v2876
        %v2878 = vpop.f32.mrb[0].mxu0
        %2879 = vmatprep.mubr.bf16.mxu0 0
        %2880 = vmatmul.mubr.bf16.gmra.mrb[0].mxu0 %v2818
        %v2881 = vpop.f32.mrb[0].mxu0
        %v2882 = vadd.f32 0.0, %v2881
        %v2883 = vpop.f32.mrb[0].mxu0
        %v2884 = vpop.f32.mrb[0].mxu0
        %v2885 = vadd.f32 0.0, %v2884
        %v2886 = vpop.f32.mrb[0].mxu0
        %2887 = vmatprep.mubr.bf16.mxu0 0
        %2888 = vmatmul.mubr.bf16.gmra.mrb[0].mxu0 %v2821
        %v2889 = vpop.f32.mrb[0].mxu0
        %v2890 = vadd.f32 0.0, %v2889
        %v2891 = vpop.f32.mrb[0].mxu0
        %v2892 = vpop.f32.mrb[0].mxu0
        %v2893 = vpop.f32.mrb[0].mxu0
        %2894 = vdwg.mxu0
        %2895 = vrot.lane.b32.xlu0 %v1782, 88
        %v2896 = vpop.permute.xlu0 %2895
        %2897 = vrot.lane.b32.xlu0 %v1783, 88
        %v2898 = vpop.permute.xlu0 %2897
        %2899 = vrot.lane.b32.xlu0 %v1784, 88
        %v2900 = vpop.permute.xlu0 %2899
        %2901 = vrot.lane.b32.xlu0 %v1785, 88
        %v2902 = vpop.permute.xlu0 %2901
        %2903 = vrot.lane.b32.xlu0 %v2407, 88
        %v2904 = vpop.permute.xlu0 %2903
        %v2906 = vsel %vm2410, %v2896, 0
        %v2909 = vsel %vm2410, %v2898, 0
        %v2912 = vsel %vm2410, %v2900, 0
        %v2915 = vsel %vm2410, %v2902, 0
        %v2918 = vsel %vm2410, %v2904, 0
        %2920 = vmatprep.subr.bf16.mxu0 0
        %2921 = vmatpush1.bf16.msra.mxu0 %v2428
        %2922 = vmatprep.subr.bf16.mxu0 0
        %2923 = vmatpush1.bf16.msra.mxu0 0
        %2924 = vmatprep.subr.bf16.mxu0 0
        %2925 = vmatpush1.bf16.msra.mxu0 0
        %2926 = vmatprep.subr.bf16.mxu0 0
        %2927 = vmatpush1.bf16.msra.mxu0 0
        %2928 = vmatprep.subr.bf16.mxu0 0
        %2929 = vmatpush1.bf16.msra.mxu0 0
        %2930 = vmatprep.subr.bf16.mxu0 0
        %2931 = vmatpush1.bf16.msra.mxu0 0
        %2932 = vmatprep.subr.bf16.mxu0 0
        %2933 = vmatpush1.bf16.msra.mxu0 0
        %2934 = vmatprep.subr.bf16.mxu0 0
        %2935 = vmatpush1.bf16.msra.mxu0 0
        %2936 = vmatprep.subr.bf16.mxu0 0
        %2937 = vmatpush1.bf16.msra.mxu0 0
        %2938 = vmatprep.subr.bf16.mxu0 0
        %2939 = vmatpush1.bf16.msra.mxu0 0
        %2940 = vmatprep.subr.bf16.mxu0 0
        %2941 = vmatpush1.bf16.msra.mxu0 0
        %2942 = vmatprep.subr.bf16.mxu0 0
        %2943 = vmatpush1.bf16.msra.mxu0 0
        %2944 = vmatprep.subr.bf16.mxu0 0
        %2945 = vmatpush1.bf16.msra.mxu0 0
        %2946 = vmatprep.subr.bf16.mxu0 0
        %2947 = vmatpush1.bf16.msra.mxu0 0
        %2948 = vmatprep.subr.bf16.mxu0 0
        %2949 = vmatpush1.bf16.msra.mxu0 0
        %2950 = vmatprep.subr.bf16.mxu0 0
        %2951 = vmatpush1.bf16.msra.mxu0 0
        %2952 = vmatprep.mubr.bf16.mxu0 0
        %2953 = vmatmul.mubr.bf16.gmra.mrb[0].mxu0 %v2906
        %v2954 = vpop.f32.mrb[0].mxu0
        %v2955 = vadd.f32 0.0, %v2954
        %v2956 = vpop.f32.mrb[0].mxu0
        %v2957 = vpop.f32.mrb[0].mxu0
        %v2958 = vadd.f32 0.0, %v2957
        %v2959 = vpop.f32.mrb[0].mxu0
        %2960 = vmatprep.mubr.bf16.mxu0 0
        %2961 = vmatmul.mubr.bf16.gmra.mrb[0].mxu0 %v2909
        %v2962 = vpop.f32.mrb[0].mxu0
        %v2963 = vadd.f32 0.0, %v2962
        %v2964 = vpop.f32.mrb[0].mxu0
        %v2965 = vpop.f32.mrb[0].mxu0
        %v2966 = vadd.f32 0.0, %v2965
        %v2967 = vpop.f32.mrb[0].mxu0
        %2968 = vmatprep.mubr.bf16.mxu0 0
        %2969 = vmatmul.mubr.bf16.gmra.mrb[0].mxu0 %v2912
        %v2970 = vpop.f32.mrb[0].mxu0
        %v2971 = vadd.f32 0.0, %v2970
        %v2972 = vpop.f32.mrb[0].mxu0
        %v2973 = vpop.f32.mrb[0].mxu0
        %v2974 = vadd.f32 0.0, %v2973
        %v2975 = vpop.f32.mrb[0].mxu0
        %2976 = vmatprep.mubr.bf16.mxu0 0
        %2977 = vmatmul.mubr.bf16.gmra.mrb[0].mxu0 %v2915
        %v2978 = vpop.f32.mrb[0].mxu0
        %v2979 = vadd.f32 0.0, %v2978
        %v2980 = vpop.f32.mrb[0].mxu0
        %v2981 = vpop.f32.mrb[0].mxu0
        %v2982 = vadd.f32 0.0, %v2981
        %v2983 = vpop.f32.mrb[0].mxu0
        %2984 = vmatprep.mubr.bf16.mxu0 0
        %2985 = vmatmul.mubr.bf16.gmra.mrb[0].mxu0 %v2918
        %v2986 = vpop.f32.mrb[0].mxu0
        %v2987 = vadd.f32 0.0, %v2986
        %v2988 = vpop.f32.mrb[0].mxu0
        %v2989 = vpop.f32.mrb[0].mxu0
        %v2990 = vpop.f32.mrb[0].mxu0
        %2991 = vdwg.mxu0
        %2992 = vrot.lane.b32.xlu0 %v1782, 80
        %v2993 = vpop.permute.xlu0 %2992
        %2994 = vrot.lane.b32.xlu0 %v1783, 80
        %v2995 = vpop.permute.xlu0 %2994
        %2996 = vrot.lane.b32.xlu0 %v1784, 80
        %v2997 = vpop.permute.xlu0 %2996
        %2998 = vrot.lane.b32.xlu0 %v1785, 80
        %v2999 = vpop.permute.xlu0 %2998
        %3000 = vrot.lane.b32.xlu0 %v2407, 80
        %v3001 = vpop.permute.xlu0 %3000
        %v3003 = vsel %vm2410, %v2993, 0
        %v3006 = vsel %vm2410, %v2995, 0
        %v3009 = vsel %vm2410, %v2997, 0
        %v3012 = vsel %vm2410, %v2999, 0
        %v3015 = vsel %vm2410, %v3001, 0
        %3017 = vmatprep.subr.bf16.mxu0 0
        %3018 = vmatpush1.bf16.msra.mxu0 %v2428
        %3019 = vmatprep.subr.bf16.mxu0 0
        %3020 = vmatpush1.bf16.msra.mxu0 0
        %3021 = vmatprep.subr.bf16.mxu0 0
        %3022 = vmatpush1.bf16.msra.mxu0 0
        %3023 = vmatprep.subr.bf16.mxu0 0
        %3024 = vmatpush1.bf16.msra.mxu0 0
        %3025 = vmatprep.subr.bf16.mxu0 0
        %3026 = vmatpush1.bf16.msra.mxu0 0
        %3027 = vmatprep.subr.bf16.mxu0 0
        %3028 = vmatpush1.bf16.msra.mxu0 0
        %3029 = vmatprep.subr.bf16.mxu0 0
        %3030 = vmatpush1.bf16.msra.mxu0 0
        %3031 = vmatprep.subr.bf16.mxu0 0
        %3032 = vmatpush1.bf16.msra.mxu0 0
        %3033 = vmatprep.subr.bf16.mxu0 0
        %3034 = vmatpush1.bf16.msra.mxu0 0
        %3035 = vmatprep.subr.bf16.mxu0 0
        %3036 = vmatpush1.bf16.msra.mxu0 0
        %3037 = vmatprep.subr.bf16.mxu0 0
        %3038 = vmatpush1.bf16.msra.mxu0 0
        %3039 = vmatprep.subr.bf16.mxu0 0
        %3040 = vmatpush1.bf16.msra.mxu0 0
        %3041 = vmatprep.subr.bf16.mxu0 0
        %3042 = vmatpush1.bf16.msra.mxu0 0
        %3043 = vmatprep.subr.bf16.mxu0 0
        %3044 = vmatpush1.bf16.msra.mxu0 0
        %3045 = vmatprep.subr.bf16.mxu0 0
        %3046 = vmatpush1.bf16.msra.mxu0 0
        %3047 = vmatprep.subr.bf16.mxu0 0
        %3048 = vmatpush1.bf16.msra.mxu0 0
        %3049 = vmatprep.mubr.bf16.mxu0 0
        %3050 = vmatmul.mubr.bf16.gmra.mrb[0].mxu0 %v3003
        %v3051 = vpop.f32.mrb[0].mxu0
        %v3052 = vadd.f32 0.0, %v3051
        %v3053 = vpop.f32.mrb[0].mxu0
        %v3054 = vpop.f32.mrb[0].mxu0
        %v3055 = vadd.f32 0.0, %v3054
        %v3056 = vpop.f32.mrb[0].mxu0
        %3057 = vmatprep.mubr.bf16.mxu0 0
        %3058 = vmatmul.mubr.bf16.gmra.mrb[0].mxu0 %v3006
        %v3059 = vpop.f32.mrb[0].mxu0
        %v3060 = vadd.f32 0.0, %v3059
        %v3061 = vpop.f32.mrb[0].mxu0
        %v3062 = vpop.f32.mrb[0].mxu0
        %v3063 = vadd.f32 0.0, %v3062
        %v3064 = vpop.f32.mrb[0].mxu0
        %3065 = vmatprep.mubr.bf16.mxu0 0
        %3066 = vmatmul.mubr.bf16.gmra.mrb[0].mxu0 %v3009
        %v3067 = vpop.f32.mrb[0].mxu0
        %v3068 = vadd.f32 0.0, %v3067
        %v3069 = vpop.f32.mrb[0].mxu0
        %v3070 = vpop.f32.mrb[0].mxu0
        %v3071 = vadd.f32 0.0, %v3070
        %v3072 = vpop.f32.mrb[0].mxu0
        %3073 = vmatprep.mubr.bf16.mxu0 0
        %3074 = vmatmul.mubr.bf16.gmra.mrb[0].mxu0 %v3012
        %v3075 = vpop.f32.mrb[0].mxu0
        %v3076 = vadd.f32 0.0, %v3075
        %v3077 = vpop.f32.mrb[0].mxu0
        %v3078 = vpop.f32.mrb[0].mxu0
        %v3079 = vadd.f32 0.0, %v3078
        %v3080 = vpop.f32.mrb[0].mxu0
        %3081 = vmatprep.mubr.bf16.mxu0 0
        %3082 = vmatmul.mubr.bf16.gmra.mrb[0].mxu0 %v3015
        %v3083 = vpop.f32.mrb[0].mxu0
        %v3084 = vadd.f32 0.0, %v3083
        %v3085 = vpop.f32.mrb[0].mxu0
        %v3086 = vpop.f32.mrb[0].mxu0
        %v3087 = vpop.f32.mrb[0].mxu0
        %3088 = vdwg.mxu0
        %3089 = vrot.lane.b32.xlu0 %v1782, 72
        %v3090 = vpop.permute.xlu0 %3089
        %3091 = vrot.lane.b32.xlu0 %v1783, 72
        %v3092 = vpop.permute.xlu0 %3091
        %3093 = vrot.lane.b32.xlu0 %v1784, 72
        %v3094 = vpop.permute.xlu0 %3093
        %3095 = vrot.lane.b32.xlu0 %v1785, 72
        %v3096 = vpop.permute.xlu0 %3095
        %3097 = vrot.lane.b32.xlu0 %v2407, 72
        %v3098 = vpop.permute.xlu0 %3097
        %v3100 = vsel %vm2410, %v3090, 0
        %v3103 = vsel %vm2410, %v3092, 0
        %v3106 = vsel %vm2410, %v3094, 0
        %v3109 = vsel %vm2410, %v3096, 0
        %v3112 = vsel %vm2410, %v3098, 0
        %3114 = vmatprep.subr.bf16.mxu0 0
        %3115 = vmatpush1.bf16.msra.mxu0 %v2428
        %3116 = vmatprep.subr.bf16.mxu0 0
        %3117 = vmatpush1.bf16.msra.mxu0 0
        %3118 = vmatprep.subr.bf16.mxu0 0
        %3119 = vmatpush1.bf16.msra.mxu0 0
        %3120 = vmatprep.subr.bf16.mxu0 0
        %3121 = vmatpush1.bf16.msra.mxu0 0
        %3122 = vmatprep.subr.bf16.mxu0 0
        %3123 = vmatpush1.bf16.msra.mxu0 0
        %3124 = vmatprep.subr.bf16.mxu0 0
        %3125 = vmatpush1.bf16.msra.mxu0 0
        %3126 = vmatprep.subr.bf16.mxu0 0
        %3127 = vmatpush1.bf16.msra.mxu0 0
        %3128 = vmatprep.subr.bf16.mxu0 0
        %3129 = vmatpush1.bf16.msra.mxu0 0
        %3130 = vmatprep.subr.bf16.mxu0 0
        %3131 = vmatpush1.bf16.msra.mxu0 0
        %3132 = vmatprep.subr.bf16.mxu0 0
        %3133 = vmatpush1.bf16.msra.mxu0 0
        %3134 = vmatprep.subr.bf16.mxu0 0
        %3135 = vmatpush1.bf16.msra.mxu0 0
        %3136 = vmatprep.subr.bf16.mxu0 0
        %3137 = vmatpush1.bf16.msra.mxu0 0
        %3138 = vmatprep.subr.bf16.mxu0 0
        %3139 = vmatpush1.bf16.msra.mxu0 0
        %3140 = vmatprep.subr.bf16.mxu0 0
        %3141 = vmatpush1.bf16.msra.mxu0 0
        %3142 = vmatprep.subr.bf16.mxu0 0
        %3143 = vmatpush1.bf16.msra.mxu0 0
        %3144 = vmatprep.subr.bf16.mxu0 0
        %3145 = vmatpush1.bf16.msra.mxu0 0
        %3146 = vmatprep.mubr.bf16.mxu0 0
        %3147 = vmatmul.mubr.bf16.gmra.mrb[0].mxu0 %v3100
        %v3148 = vpop.f32.mrb[0].mxu0
        %v3149 = vadd.f32 0.0, %v3148
        %v3150 = vpop.f32.mrb[0].mxu0
        %v3151 = vpop.f32.mrb[0].mxu0
        %v3152 = vadd.f32 0.0, %v3151
        %v3153 = vpop.f32.mrb[0].mxu0
        %3154 = vmatprep.mubr.bf16.mxu0 0
        %3155 = vmatmul.mubr.bf16.gmra.mrb[0].mxu0 %v3103
        %v3156 = vpop.f32.mrb[0].mxu0
        %v3157 = vadd.f32 0.0, %v3156
        %v3158 = vpop.f32.mrb[0].mxu0
        %v3159 = vpop.f32.mrb[0].mxu0
        %v3160 = vadd.f32 0.0, %v3159
        %v3161 = vpop.f32.mrb[0].mxu0
        %3162 = vmatprep.mubr.bf16.mxu0 0
        %3163 = vmatmul.mubr.bf16.gmra.mrb[0].mxu0 %v3106
        %v3164 = vpop.f32.mrb[0].mxu0
        %v3165 = vadd.f32 0.0, %v3164
        %v3166 = vpop.f32.mrb[0].mxu0
        %v3167 = vpop.f32.mrb[0].mxu0
        %v3168 = vadd.f32 0.0, %v3167
        %v3169 = vpop.f32.mrb[0].mxu0
        %3170 = vmatprep.mubr.bf16.mxu0 0
        %3171 = vmatmul.mubr.bf16.gmra.mrb[0].mxu0 %v3109
        %v3172 = vpop.f32.mrb[0].mxu0
        %v3173 = vadd.f32 0.0, %v3172
        %v3174 = vpop.f32.mrb[0].mxu0
        %v3175 = vpop.f32.mrb[0].mxu0
        %v3176 = vadd.f32 0.0, %v3175
        %v3177 = vpop.f32.mrb[0].mxu0
        %3178 = vmatprep.mubr.bf16.mxu0 0
        %3179 = vmatmul.mubr.bf16.gmra.mrb[0].mxu0 %v3112
        %v3180 = vpop.f32.mrb[0].mxu0
        %v3181 = vadd.f32 0.0, %v3180
        %v3182 = vpop.f32.mrb[0].mxu0
        %v3183 = vpop.f32.mrb[0].mxu0
        %v3184 = vpop.f32.mrb[0].mxu0
        %3185 = vdwg.mxu0
        %v3186 = vmul.f32 %v2465, 0.53333336
        %v3187 = vmul.f32 %v2468, 0.53333336
        %v3188 = vmul.f32 %v2473, 0.53333336
        %v3189 = vmul.f32 %v2476, 0.53333336
        %v3190 = vmul.f32 %v2481, 0.53333336
        %v3191 = vmul.f32 %v2484, 0.53333336
        %v3192 = vmul.f32 %v2489, 0.53333336
        %v3193 = vmul.f32 %v2492, 0.53333336
        %v3194 = vmul.f32 %v2497, 0.53333336
        %v3195 = vmul.f32 %v2567, 0.46666667
        %v3196 = vmul.f32 %v2570, 0.46666667
        %v3197 = vmul.f32 %v2575, 0.46666667
        %v3198 = vmul.f32 %v2578, 0.46666667
        %v3199 = vmul.f32 %v2583, 0.46666667
        %v3200 = vmul.f32 %v2586, 0.46666667
        %v3201 = vmul.f32 %v2591, 0.46666667
        %v3202 = vmul.f32 %v2594, 0.46666667
        %v3203 = vmul.f32 %v2599, 0.46666667
        %v3204 = vadd.f32 %v3186, %v3195
        %v3205 = vadd.f32 %v3187, %v3196
        %v3206 = vadd.f32 %v3188, %v3197
        %v3207 = vadd.f32 %v3189, %v3198
        %v3208 = vadd.f32 %v3190, %v3199
        %v3209 = vadd.f32 %v3191, %v3200
        %v3210 = vadd.f32 %v3192, %v3201
        %v3211 = vadd.f32 %v3193, %v3202
        %v3212 = vadd.f32 %v3194, %v3203
        %v3213 = vmul.f32 %v2465, 0.06666667
        %v3214 = vmul.f32 %v2468, 0.06666667
        %v3215 = vmul.f32 %v2473, 0.06666667
        %v3216 = vmul.f32 %v2476, 0.06666667
        %v3217 = vmul.f32 %v2481, 0.06666667
        %v3218 = vmul.f32 %v2484, 0.06666667
        %v3219 = vmul.f32 %v2489, 0.06666667
        %v3220 = vmul.f32 %v2492, 0.06666667
        %v3221 = vmul.f32 %v2497, 0.06666667
        %v3222 = vmul.f32 %v2567, 0.93333334
        %v3223 = vmul.f32 %v2570, 0.93333334
        %v3224 = vmul.f32 %v2575, 0.93333334
        %v3225 = vmul.f32 %v2578, 0.93333334
        %v3226 = vmul.f32 %v2583, 0.93333334
        %v3227 = vmul.f32 %v2586, 0.93333334
        %v3228 = vmul.f32 %v2591, 0.93333334
        %v3229 = vmul.f32 %v2594, 0.93333334
        %v3230 = vmul.f32 %v2599, 0.93333334
        %v3231 = vadd.f32 %v3213, %v3222
        %v3232 = vadd.f32 %v3214, %v3223
        %v3233 = vadd.f32 %v3215, %v3224
        %v3234 = vadd.f32 %v3216, %v3225
        %v3235 = vadd.f32 %v3217, %v3226
        %v3236 = vadd.f32 %v3218, %v3227
        %v3237 = vadd.f32 %v3219, %v3228
        %v3238 = vadd.f32 %v3220, %v3229
        %v3239 = vadd.f32 %v3221, %v3230
        %v3240 = vmul.f32 %v2567, 0.6
        %v3241 = vmul.f32 %v2570, 0.6
        %v3242 = vmul.f32 %v2575, 0.6
        %v3243 = vmul.f32 %v2578, 0.6
        %v3244 = vmul.f32 %v2583, 0.6
        %v3245 = vmul.f32 %v2586, 0.6
        %v3246 = vmul.f32 %v2591, 0.6
        %v3247 = vmul.f32 %v2594, 0.6
        %v3248 = vmul.f32 %v2599, 0.6
        %v3249 = vmul.f32 %v2664, 0.4
        %v3250 = vmul.f32 %v2667, 0.4
        %v3251 = vmul.f32 %v2672, 0.4
        %v3252 = vmul.f32 %v2675, 0.4
        %v3253 = vmul.f32 %v2680, 0.4
        %v3254 = vmul.f32 %v2683, 0.4
        %v3255 = vmul.f32 %v2688, 0.4
        %v3256 = vmul.f32 %v2691, 0.4
        %v3257 = vmul.f32 %v2696, 0.4
        %v3258 = vadd.f32 %v3240, %v3249
        %v3259 = vadd.f32 %v3241, %v3250
        %v3260 = vadd.f32 %v3242, %v3251
        %v3261 = vadd.f32 %v3243, %v3252
        %v3262 = vadd.f32 %v3244, %v3253
        %v3263 = vadd.f32 %v3245, %v3254
        %v3264 = vadd.f32 %v3246, %v3255
        %v3265 = vadd.f32 %v3247, %v3256
        %v3266 = vadd.f32 %v3248, %v3257
        %v3267 = vmul.f32 %v2567, 0.13333334
        %v3268 = vmul.f32 %v2570, 0.13333334
        %v3269 = vmul.f32 %v2575, 0.13333334
        %v3270 = vmul.f32 %v2578, 0.13333334
        %v3271 = vmul.f32 %v2583, 0.13333334
        %v3272 = vmul.f32 %v2586, 0.13333334
        %v3273 = vmul.f32 %v2591, 0.13333334
        %v3274 = vmul.f32 %v2594, 0.13333334
        %v3275 = vmul.f32 %v2599, 0.13333334
        %v3276 = vmul.f32 %v2664, 0.8666667
        %v3277 = vmul.f32 %v2667, 0.8666667
        %v3278 = vmul.f32 %v2672, 0.8666667
        %v3279 = vmul.f32 %v2675, 0.8666667
        %v3280 = vmul.f32 %v2680, 0.8666667
        %v3281 = vmul.f32 %v2683, 0.8666667
        %v3282 = vmul.f32 %v2688, 0.8666667
        %v3283 = vmul.f32 %v2691, 0.8666667
        %v3284 = vmul.f32 %v2696, 0.8666667
        %v3285 = vadd.f32 %v3267, %v3276
        %v3286 = vadd.f32 %v3268, %v3277
        %v3287 = vadd.f32 %v3269, %v3278
        %v3288 = vadd.f32 %v3270, %v3279
        %v3289 = vadd.f32 %v3271, %v3280
        %v3290 = vadd.f32 %v3272, %v3281
        %v3291 = vadd.f32 %v3273, %v3282
        %v3292 = vadd.f32 %v3274, %v3283
        %v3293 = vadd.f32 %v3275, %v3284
        %v3294 = vmul.f32 %v2664, 0.6666667
        %v3295 = vmul.f32 %v2667, 0.6666667
        %v3296 = vmul.f32 %v2672, 0.6666667
        %v3297 = vmul.f32 %v2675, 0.6666667
        %v3298 = vmul.f32 %v2680, 0.6666667
        %v3299 = vmul.f32 %v2683, 0.6666667
        %v3300 = vmul.f32 %v2688, 0.6666667
        %v3301 = vmul.f32 %v2691, 0.6666667
        %v3302 = vmul.f32 %v2696, 0.6666667
        %v3303 = vmul.f32 %v2761, 0.33333334
        %v3304 = vmul.f32 %v2764, 0.33333334
        %v3305 = vmul.f32 %v2769, 0.33333334
        %v3306 = vmul.f32 %v2772, 0.33333334
        %v3307 = vmul.f32 %v2777, 0.33333334
        %v3308 = vmul.f32 %v2780, 0.33333334
        %v3309 = vmul.f32 %v2785, 0.33333334
        %v3310 = vmul.f32 %v2788, 0.33333334
        %v3311 = vmul.f32 %v2793, 0.33333334
        %v3312 = vadd.f32 %v3294, %v3303
        %v3313 = vadd.f32 %v3295, %v3304
        %v3314 = vadd.f32 %v3296, %v3305
        %v3315 = vadd.f32 %v3297, %v3306
        %v3316 = vadd.f32 %v3298, %v3307
        %v3317 = vadd.f32 %v3299, %v3308
        %v3318 = vadd.f32 %v3300, %v3309
        %v3319 = vadd.f32 %v3301, %v3310
        %v3320 = vadd.f32 %v3302, %v3311
        %v3321 = vmul.f32 %v2664, 0.2
        %v3322 = vmul.f32 %v2667, 0.2
        %v3323 = vmul.f32 %v2672, 0.2
        %v3324 = vmul.f32 %v2675, 0.2
        %v3325 = vmul.f32 %v2680, 0.2
        %v3326 = vmul.f32 %v2683, 0.2
        %v3327 = vmul.f32 %v2688, 0.2
        %v3328 = vmul.f32 %v2691, 0.2
        %v3329 = vmul.f32 %v2696, 0.2
        %v3330 = vmul.f32 %v2761, 0.8
        %v3331 = vmul.f32 %v2764, 0.8
        %v3332 = vmul.f32 %v2769, 0.8
        %v3333 = vmul.f32 %v2772, 0.8
        %v3334 = vmul.f32 %v2777, 0.8
        %v3335 = vmul.f32 %v2780, 0.8
        %v3336 = vmul.f32 %v2785, 0.8
        %v3337 = vmul.f32 %v2788, 0.8
        %v3338 = vmul.f32 %v2793, 0.8
        %v3339 = vadd.f32 %v3321, %v3330
        %v3340 = vadd.f32 %v3322, %v3331
        %v3341 = vadd.f32 %v3323, %v3332
        %v3342 = vadd.f32 %v3324, %v3333
        %v3343 = vadd.f32 %v3325, %v3334
        %v3344 = vadd.f32 %v3326, %v3335
        %v3345 = vadd.f32 %v3327, %v3336
        %v3346 = vadd.f32 %v3328, %v3337
        %v3347 = vadd.f32 %v3329, %v3338
        %v3348 = vmul.f32 %v2761, 0.73333335
        %v3349 = vmul.f32 %v2764, 0.73333335
        %v3350 = vmul.f32 %v2769, 0.73333335
        %v3351 = vmul.f32 %v2772, 0.73333335
        %v3352 = vmul.f32 %v2777, 0.73333335
        %v3353 = vmul.f32 %v2780, 0.73333335
        %v3354 = vmul.f32 %v2785, 0.73333335
        %v3355 = vmul.f32 %v2788, 0.73333335
        %v3356 = vmul.f32 %v2793, 0.73333335
        %v3357 = vmul.f32 %v2858, 0.26666668
        %v3358 = vmul.f32 %v2861, 0.26666668
        %v3359 = vmul.f32 %v2866, 0.26666668
        %v3360 = vmul.f32 %v2869, 0.26666668
        %v3361 = vmul.f32 %v2874, 0.26666668
        %v3362 = vmul.f32 %v2877, 0.26666668
        %v3363 = vmul.f32 %v2882, 0.26666668
        %v3364 = vmul.f32 %v2885, 0.26666668
        %v3365 = vmul.f32 %v2890, 0.26666668
        %v3366 = vadd.f32 %v3348, %v3357
        %v3367 = vadd.f32 %v3349, %v3358
        %v3368 = vadd.f32 %v3350, %v3359
        %v3369 = vadd.f32 %v3351, %v3360
        %v3370 = vadd.f32 %v3352, %v3361
        %v3371 = vadd.f32 %v3353, %v3362
        %v3372 = vadd.f32 %v3354, %v3363
        %v3373 = vadd.f32 %v3355, %v3364
        %v3374 = vadd.f32 %v3356, %v3365
        %v3375 = vmul.f32 %v2761, 0.26666668
        %v3376 = vmul.f32 %v2764, 0.26666668
        %v3377 = vmul.f32 %v2769, 0.26666668
        %v3378 = vmul.f32 %v2772, 0.26666668
        %v3379 = vmul.f32 %v2777, 0.26666668
        %v3380 = vmul.f32 %v2780, 0.26666668
        %v3381 = vmul.f32 %v2785, 0.26666668
        %v3382 = vmul.f32 %v2788, 0.26666668
        %v3383 = vmul.f32 %v2793, 0.26666668
        %v3384 = vmul.f32 %v2858, 0.73333335
        %v3385 = vmul.f32 %v2861, 0.73333335
        %v3386 = vmul.f32 %v2866, 0.73333335
        %v3387 = vmul.f32 %v2869, 0.73333335
        %v3388 = vmul.f32 %v2874, 0.73333335
        %v3389 = vmul.f32 %v2877, 0.73333335
        %v3390 = vmul.f32 %v2882, 0.73333335
        %v3391 = vmul.f32 %v2885, 0.73333335
        %v3392 = vmul.f32 %v2890, 0.73333335
        %v3393 = vadd.f32 %v3375, %v3384
        %v3394 = vadd.f32 %v3376, %v3385
        %v3395 = vadd.f32 %v3377, %v3386
        %v3396 = vadd.f32 %v3378, %v3387
        %v3397 = vadd.f32 %v3379, %v3388
        %v3398 = vadd.f32 %v3380, %v3389
        %v3399 = vadd.f32 %v3381, %v3390
        %v3400 = vadd.f32 %v3382, %v3391
        %v3401 = vadd.f32 %v3383, %v3392
        %v3402 = vmul.f32 %v2858, 0.8
        %v3403 = vmul.f32 %v2861, 0.8
        %v3404 = vmul.f32 %v2866, 0.8
        %v3405 = vmul.f32 %v2869, 0.8
        %v3406 = vmul.f32 %v2874, 0.8
        %v3407 = vmul.f32 %v2877, 0.8
        %v3408 = vmul.f32 %v2882, 0.8
        %v3409 = vmul.f32 %v2885, 0.8
        %v3410 = vmul.f32 %v2890, 0.8
        %v3411 = vmul.f32 %v2955, 0.2
        %v3412 = vmul.f32 %v2958, 0.2
        %v3413 = vmul.f32 %v2963, 0.2
        %v3414 = vmul.f32 %v2966, 0.2
        %v3415 = vmul.f32 %v2971, 0.2
        %v3416 = vmul.f32 %v2974, 0.2
        %v3417 = vmul.f32 %v2979, 0.2
        %v3418 = vmul.f32 %v2982, 0.2
        %v3419 = vmul.f32 %v2987, 0.2
        %v3420 = vadd.f32 %v3402, %v3411
        %v3421 = vadd.f32 %v3403, %v3412
        %v3422 = vadd.f32 %v3404, %v3413
        %v3423 = vadd.f32 %v3405, %v3414
        %v3424 = vadd.f32 %v3406, %v3415
        %v3425 = vadd.f32 %v3407, %v3416
        %v3426 = vadd.f32 %v3408, %v3417
        %v3427 = vadd.f32 %v3409, %v3418
        %v3428 = vadd.f32 %v3410, %v3419
        %v3429 = vmul.f32 %v2858, 0.33333334
        %v3430 = vmul.f32 %v2861, 0.33333334
        %v3431 = vmul.f32 %v2866, 0.33333334
        %v3432 = vmul.f32 %v2869, 0.33333334
        %v3433 = vmul.f32 %v2874, 0.33333334
        %v3434 = vmul.f32 %v2877, 0.33333334
        %v3435 = vmul.f32 %v2882, 0.33333334
        %v3436 = vmul.f32 %v2885, 0.33333334
        %v3437 = vmul.f32 %v2890, 0.33333334
        %v3438 = vmul.f32 %v2955, 0.6666667
        %v3439 = vmul.f32 %v2958, 0.6666667
        %v3440 = vmul.f32 %v2963, 0.6666667
        %v3441 = vmul.f32 %v2966, 0.6666667
        %v3442 = vmul.f32 %v2971, 0.6666667
        %v3443 = vmul.f32 %v2974, 0.6666667
        %v3444 = vmul.f32 %v2979, 0.6666667
        %v3445 = vmul.f32 %v2982, 0.6666667
        %v3446 = vmul.f32 %v2987, 0.6666667
        %v3447 = vadd.f32 %v3429, %v3438
        %v3448 = vadd.f32 %v3430, %v3439
        %v3449 = vadd.f32 %v3431, %v3440
        %v3450 = vadd.f32 %v3432, %v3441
        %v3451 = vadd.f32 %v3433, %v3442
        %v3452 = vadd.f32 %v3434, %v3443
        %v3453 = vadd.f32 %v3435, %v3444
        %v3454 = vadd.f32 %v3436, %v3445
        %v3455 = vadd.f32 %v3437, %v3446
        %v3456 = vmul.f32 %v2955, 0.8666667
        %v3457 = vmul.f32 %v2958, 0.8666667
        %v3458 = vmul.f32 %v2963, 0.8666667
        %v3459 = vmul.f32 %v2966, 0.8666667
        %v3460 = vmul.f32 %v2971, 0.8666667
        %v3461 = vmul.f32 %v2974, 0.8666667
        %v3462 = vmul.f32 %v2979, 0.8666667
        %v3463 = vmul.f32 %v2982, 0.8666667
        %v3464 = vmul.f32 %v2987, 0.8666667
        %v3465 = vmul.f32 %v3052, 0.13333334
        %v3466 = vmul.f32 %v3055, 0.13333334
        %v3467 = vmul.f32 %v3060, 0.13333334
        %v3468 = vmul.f32 %v3063, 0.13333334
        %v3469 = vmul.f32 %v3068, 0.13333334
        %v3470 = vmul.f32 %v3071, 0.13333334
        %v3471 = vmul.f32 %v3076, 0.13333334
        %v3472 = vmul.f32 %v3079, 0.13333334
        %v3473 = vmul.f32 %v3084, 0.13333334
        %v3474 = vadd.f32 %v3456, %v3465
        %v3475 = vadd.f32 %v3457, %v3466
        %v3476 = vadd.f32 %v3458, %v3467
        %v3477 = vadd.f32 %v3459, %v3468
        %v3478 = vadd.f32 %v3460, %v3469
        %v3479 = vadd.f32 %v3461, %v3470
        %v3480 = vadd.f32 %v3462, %v3471
        %v3481 = vadd.f32 %v3463, %v3472
        %v3482 = vadd.f32 %v3464, %v3473
        %v3483 = vmul.f32 %v2955, 0.4
        %v3484 = vmul.f32 %v2958, 0.4
        %v3485 = vmul.f32 %v2963, 0.4
        %v3486 = vmul.f32 %v2966, 0.4
        %v3487 = vmul.f32 %v2971, 0.4
        %v3488 = vmul.f32 %v2974, 0.4
        %v3489 = vmul.f32 %v2979, 0.4
        %v3490 = vmul.f32 %v2982, 0.4
        %v3491 = vmul.f32 %v2987, 0.4
        %v3492 = vmul.f32 %v3052, 0.6
        %v3493 = vmul.f32 %v3055, 0.6
        %v3494 = vmul.f32 %v3060, 0.6
        %v3495 = vmul.f32 %v3063, 0.6
        %v3496 = vmul.f32 %v3068, 0.6
        %v3497 = vmul.f32 %v3071, 0.6
        %v3498 = vmul.f32 %v3076, 0.6
        %v3499 = vmul.f32 %v3079, 0.6
        %v3500 = vmul.f32 %v3084, 0.6
        %v3501 = vadd.f32 %v3483, %v3492
        %v3502 = vadd.f32 %v3484, %v3493
        %v3503 = vadd.f32 %v3485, %v3494
        %v3504 = vadd.f32 %v3486, %v3495
        %v3505 = vadd.f32 %v3487, %v3496
        %v3506 = vadd.f32 %v3488, %v3497
        %v3507 = vadd.f32 %v3489, %v3498
        %v3508 = vadd.f32 %v3490, %v3499
        %v3509 = vadd.f32 %v3491, %v3500
        %v3510 = vmul.f32 %v3052, 0.93333334
        %v3511 = vmul.f32 %v3055, 0.93333334
        %v3512 = vmul.f32 %v3060, 0.93333334
        %v3513 = vmul.f32 %v3063, 0.93333334
        %v3514 = vmul.f32 %v3068, 0.93333334
        %v3515 = vmul.f32 %v3071, 0.93333334
        %v3516 = vmul.f32 %v3076, 0.93333334
        %v3517 = vmul.f32 %v3079, 0.93333334
        %v3518 = vmul.f32 %v3084, 0.93333334
        %v3519 = vmul.f32 %v3149, 0.06666667
        %v3520 = vmul.f32 %v3152, 0.06666667
        %v3521 = vmul.f32 %v3157, 0.06666667
        %v3522 = vmul.f32 %v3160, 0.06666667
        %v3523 = vmul.f32 %v3165, 0.06666667
        %v3524 = vmul.f32 %v3168, 0.06666667
        %v3525 = vmul.f32 %v3173, 0.06666667
        %v3526 = vmul.f32 %v3176, 0.06666667
        %v3527 = vmul.f32 %v3181, 0.06666667
        %v3528 = vadd.f32 %v3510, %v3519
        %v3529 = vadd.f32 %v3511, %v3520
        %v3530 = vadd.f32 %v3512, %v3521
        %v3531 = vadd.f32 %v3513, %v3522
        %v3532 = vadd.f32 %v3514, %v3523
        %v3533 = vadd.f32 %v3515, %v3524
        %v3534 = vadd.f32 %v3516, %v3525
        %v3535 = vadd.f32 %v3517, %v3526
        %v3536 = vadd.f32 %v3518, %v3527
        %v3537 = vmul.f32 %v3052, 0.46666667
        %v3538 = vmul.f32 %v3055, 0.46666667
        %v3539 = vmul.f32 %v3060, 0.46666667
        %v3540 = vmul.f32 %v3063, 0.46666667
        %v3541 = vmul.f32 %v3068, 0.46666667
        %v3542 = vmul.f32 %v3071, 0.46666667
        %v3543 = vmul.f32 %v3076, 0.46666667
        %v3544 = vmul.f32 %v3079, 0.46666667
        %v3545 = vmul.f32 %v3084, 0.46666667
        %v3546 = vmul.f32 %v3149, 0.53333336
        %v3547 = vmul.f32 %v3152, 0.53333336
        %v3548 = vmul.f32 %v3157, 0.53333336
        %v3549 = vmul.f32 %v3160, 0.53333336
        %v3550 = vmul.f32 %v3165, 0.53333336
        %v3551 = vmul.f32 %v3168, 0.53333336
        %v3552 = vmul.f32 %v3173, 0.53333336
        %v3553 = vmul.f32 %v3176, 0.53333336
        %v3554 = vmul.f32 %v3181, 0.53333336
        %v3555 = vadd.f32 %v3537, %v3546
        %v3556 = vadd.f32 %v3538, %v3547
        %v3557 = vadd.f32 %v3539, %v3548
        %v3558 = vadd.f32 %v3540, %v3549
        %v3559 = vadd.f32 %v3541, %v3550
        %v3560 = vadd.f32 %v3542, %v3551
        %v3561 = vadd.f32 %v3543, %v3552
        %v3562 = vadd.f32 %v3544, %v3553
        %v3563 = vadd.f32 %v3545, %v3554
        %3573 = vrot.lane.b32.xlu0 %v3204, 16
        %v3574 = vpop.permute.xlu0 %3573
        %3575 = vrot.lane.b32.xlu0 %v3205, 16
        %v3576 = vpop.permute.xlu0 %3575
        %3577 = vrot.lane.b32.xlu0 %v3206, 16
        %v3578 = vpop.permute.xlu0 %3577
        %3579 = vrot.lane.b32.xlu0 %v3207, 16
        %v3580 = vpop.permute.xlu0 %3579
        %3581 = vrot.lane.b32.xlu0 %v3208, 16
        %v3582 = vpop.permute.xlu0 %3581
        %3583 = vrot.lane.b32.xlu0 %v3209, 16
        %v3584 = vpop.permute.xlu0 %3583
        %3585 = vrot.lane.b32.xlu0 %v3210, 16
        %v3586 = vpop.permute.xlu0 %3585
        %3587 = vrot.lane.b32.xlu0 %v3211, 16
        %v3588 = vpop.permute.xlu0 %3587
        %3589 = vrot.lane.b32.xlu0 %v3212, 16
        %v3590 = vpop.permute.xlu0 %3589
        %3609 = vrot.lane.b32.xlu0 %v3231, 32
        %v3610 = vpop.permute.xlu0 %3609
        %3611 = vrot.lane.b32.xlu0 %v3232, 32
        %v3612 = vpop.permute.xlu0 %3611
        %3613 = vrot.lane.b32.xlu0 %v3233, 32
        %v3614 = vpop.permute.xlu0 %3613
        %3615 = vrot.lane.b32.xlu0 %v3234, 32
        %v3616 = vpop.permute.xlu0 %3615
        %3617 = vrot.lane.b32.xlu0 %v3235, 32
        %v3618 = vpop.permute.xlu0 %3617
        %3619 = vrot.lane.b32.xlu0 %v3236, 32
        %v3620 = vpop.permute.xlu0 %3619
        %3621 = vrot.lane.b32.xlu0 %v3237, 32
        %v3622 = vpop.permute.xlu0 %3621
        %3623 = vrot.lane.b32.xlu0 %v3238, 32
        %v3624 = vpop.permute.xlu0 %3623
        %3625 = vrot.lane.b32.xlu0 %v3239, 32
        %v3626 = vpop.permute.xlu0 %3625
        %3645 = vrot.lane.b32.xlu0 %v3258, 48
        %v3646 = vpop.permute.xlu0 %3645
        %3647 = vrot.lane.b32.xlu0 %v3259, 48
        %v3648 = vpop.permute.xlu0 %3647
        %3649 = vrot.lane.b32.xlu0 %v3260, 48
        %v3650 = vpop.permute.xlu0 %3649
        %3651 = vrot.lane.b32.xlu0 %v3261, 48
        %v3652 = vpop.permute.xlu0 %3651
        %3653 = vrot.lane.b32.xlu0 %v3262, 48
        %v3654 = vpop.permute.xlu0 %3653
        %3655 = vrot.lane.b32.xlu0 %v3263, 48
        %v3656 = vpop.permute.xlu0 %3655
        %3657 = vrot.lane.b32.xlu0 %v3264, 48
        %v3658 = vpop.permute.xlu0 %3657
        %3659 = vrot.lane.b32.xlu0 %v3265, 48
        %v3660 = vpop.permute.xlu0 %3659
        %3661 = vrot.lane.b32.xlu0 %v3266, 48
        %v3662 = vpop.permute.xlu0 %3661
        %3681 = vrot.lane.b32.xlu0 %v3285, 64
        %v3682 = vpop.permute.xlu0 %3681
        %3683 = vrot.lane.b32.xlu0 %v3286, 64
        %v3684 = vpop.permute.xlu0 %3683
        %3685 = vrot.lane.b32.xlu0 %v3287, 64
        %v3686 = vpop.permute.xlu0 %3685
        %3687 = vrot.lane.b32.xlu0 %v3288, 64
        %v3688 = vpop.permute.xlu0 %3687
        %3689 = vrot.lane.b32.xlu0 %v3289, 64
        %v3690 = vpop.permute.xlu0 %3689
        %3691 = vrot.lane.b32.xlu0 %v3290, 64
        %v3692 = vpop.permute.xlu0 %3691
        %3693 = vrot.lane.b32.xlu0 %v3291, 64
        %v3694 = vpop.permute.xlu0 %3693
        %3695 = vrot.lane.b32.xlu0 %v3292, 64
        %v3696 = vpop.permute.xlu0 %3695
        %3697 = vrot.lane.b32.xlu0 %v3293, 64
        %v3698 = vpop.permute.xlu0 %3697
        %3717 = vrot.lane.b32.xlu0 %v3312, 80
        %v3718 = vpop.permute.xlu0 %3717
        %3719 = vrot.lane.b32.xlu0 %v3313, 80
        %v3720 = vpop.permute.xlu0 %3719
        %3721 = vrot.lane.b32.xlu0 %v3314, 80
        %v3722 = vpop.permute.xlu0 %3721
        %3723 = vrot.lane.b32.xlu0 %v3315, 80
        %v3724 = vpop.permute.xlu0 %3723
        %3725 = vrot.lane.b32.xlu0 %v3316, 80
        %v3726 = vpop.permute.xlu0 %3725
        %3727 = vrot.lane.b32.xlu0 %v3317, 80
        %v3728 = vpop.permute.xlu0 %3727
        %3729 = vrot.lane.b32.xlu0 %v3318, 80
        %v3730 = vpop.permute.xlu0 %3729
        %3731 = vrot.lane.b32.xlu0 %v3319, 80
        %v3732 = vpop.permute.xlu0 %3731
        %3733 = vrot.lane.b32.xlu0 %v3320, 80
        %v3734 = vpop.permute.xlu0 %3733
        %3753 = vrot.lane.b32.xlu0 %v3339, 96
        %v3754 = vpop.permute.xlu0 %3753
        %3755 = vrot.lane.b32.xlu0 %v3340, 96
        %v3756 = vpop.permute.xlu0 %3755
        %3757 = vrot.lane.b32.xlu0 %v3341, 96
        %v3758 = vpop.permute.xlu0 %3757
        %3759 = vrot.lane.b32.xlu0 %v3342, 96
        %v3760 = vpop.permute.xlu0 %3759
        %3761 = vrot.lane.b32.xlu0 %v3343, 96
        %v3762 = vpop.permute.xlu0 %3761
        %3763 = vrot.lane.b32.xlu0 %v3344, 96
        %v3764 = vpop.permute.xlu0 %3763
        %3765 = vrot.lane.b32.xlu0 %v3345, 96
        %v3766 = vpop.permute.xlu0 %3765
        %3767 = vrot.lane.b32.xlu0 %v3346, 96
        %v3768 = vpop.permute.xlu0 %3767
        %3769 = vrot.lane.b32.xlu0 %v3347, 96
        %v3770 = vpop.permute.xlu0 %3769
        %3789 = vrot.lane.b32.xlu0 %v3366, 112
        %v3790 = vpop.permute.xlu0 %3789
        %3791 = vrot.lane.b32.xlu0 %v3367, 112
        %v3792 = vpop.permute.xlu0 %3791
        %3793 = vrot.lane.b32.xlu0 %v3368, 112
        %v3794 = vpop.permute.xlu0 %3793
        %3795 = vrot.lane.b32.xlu0 %v3369, 112
        %v3796 = vpop.permute.xlu0 %3795
        %3797 = vrot.lane.b32.xlu0 %v3370, 112
        %v3798 = vpop.permute.xlu0 %3797
        %3799 = vrot.lane.b32.xlu0 %v3371, 112
        %v3800 = vpop.permute.xlu0 %3799
        %3801 = vrot.lane.b32.xlu0 %v3372, 112
        %v3802 = vpop.permute.xlu0 %3801
        %3803 = vrot.lane.b32.xlu0 %v3373, 112
        %v3804 = vpop.permute.xlu0 %3803
        %3805 = vrot.lane.b32.xlu0 %v3374, 112
        %v3806 = vpop.permute.xlu0 %3805
        %3825 = vrot.lane.b32.xlu0 %v3420, 16
        %v3826 = vpop.permute.xlu0 %3825
        %3827 = vrot.lane.b32.xlu0 %v3421, 16
        %v3828 = vpop.permute.xlu0 %3827
        %3829 = vrot.lane.b32.xlu0 %v3422, 16
        %v3830 = vpop.permute.xlu0 %3829
        %3831 = vrot.lane.b32.xlu0 %v3423, 16
        %v3832 = vpop.permute.xlu0 %3831
        %3833 = vrot.lane.b32.xlu0 %v3424, 16
        %v3834 = vpop.permute.xlu0 %3833
        %3835 = vrot.lane.b32.xlu0 %v3425, 16
        %v3836 = vpop.permute.xlu0 %3835
        %3837 = vrot.lane.b32.xlu0 %v3426, 16
        %v3838 = vpop.permute.xlu0 %3837
        %3839 = vrot.lane.b32.xlu0 %v3427, 16
        %v3840 = vpop.permute.xlu0 %3839
        %3841 = vrot.lane.b32.xlu0 %v3428, 16
        %v3842 = vpop.permute.xlu0 %3841
        %3861 = vrot.lane.b32.xlu0 %v3447, 32
        %v3862 = vpop.permute.xlu0 %3861
        %3863 = vrot.lane.b32.xlu0 %v3448, 32
        %v3864 = vpop.permute.xlu0 %3863
        %3865 = vrot.lane.b32.xlu0 %v3449, 32
        %v3866 = vpop.permute.xlu0 %3865
        %3867 = vrot.lane.b32.xlu0 %v3450, 32
        %v3868 = vpop.permute.xlu0 %3867
        %3869 = vrot.lane.b32.xlu0 %v3451, 32
        %v3870 = vpop.permute.xlu0 %3869
        %3871 = vrot.lane.b32.xlu0 %v3452, 32
        %v3872 = vpop.permute.xlu0 %3871
        %3873 = vrot.lane.b32.xlu0 %v3453, 32
        %v3874 = vpop.permute.xlu0 %3873
        %3875 = vrot.lane.b32.xlu0 %v3454, 32
        %v3876 = vpop.permute.xlu0 %3875
        %3877 = vrot.lane.b32.xlu0 %v3455, 32
        %v3878 = vpop.permute.xlu0 %3877
        %3897 = vrot.lane.b32.xlu0 %v3474, 48
        %v3898 = vpop.permute.xlu0 %3897
        %3899 = vrot.lane.b32.xlu0 %v3475, 48
        %v3900 = vpop.permute.xlu0 %3899
        %3901 = vrot.lane.b32.xlu0 %v3476, 48
        %v3902 = vpop.permute.xlu0 %3901
        %3903 = vrot.lane.b32.xlu0 %v3477, 48
        %v3904 = vpop.permute.xlu0 %3903
        %3905 = vrot.lane.b32.xlu0 %v3478, 48
        %v3906 = vpop.permute.xlu0 %3905
        %3907 = vrot.lane.b32.xlu0 %v3479, 48
        %v3908 = vpop.permute.xlu0 %3907
        %3909 = vrot.lane.b32.xlu0 %v3480, 48
        %v3910 = vpop.permute.xlu0 %3909
        %3911 = vrot.lane.b32.xlu0 %v3481, 48
        %v3912 = vpop.permute.xlu0 %3911
        %3913 = vrot.lane.b32.xlu0 %v3482, 48
        %v3914 = vpop.permute.xlu0 %3913
        %3933 = vrot.lane.b32.xlu0 %v3501, 64
        %v3934 = vpop.permute.xlu0 %3933
        %3935 = vrot.lane.b32.xlu0 %v3502, 64
        %v3936 = vpop.permute.xlu0 %3935
        %3937 = vrot.lane.b32.xlu0 %v3503, 64
        %v3938 = vpop.permute.xlu0 %3937
        %3939 = vrot.lane.b32.xlu0 %v3504, 64
        %v3940 = vpop.permute.xlu0 %3939
        %3941 = vrot.lane.b32.xlu0 %v3505, 64
        %v3942 = vpop.permute.xlu0 %3941
        %3943 = vrot.lane.b32.xlu0 %v3506, 64
        %v3944 = vpop.permute.xlu0 %3943
        %3945 = vrot.lane.b32.xlu0 %v3507, 64
        %v3946 = vpop.permute.xlu0 %3945
        %3947 = vrot.lane.b32.xlu0 %v3508, 64
        %v3948 = vpop.permute.xlu0 %3947
        %3949 = vrot.lane.b32.xlu0 %v3509, 64
        %v3950 = vpop.permute.xlu0 %3949
        %3969 = vrot.lane.b32.xlu0 %v3528, 80
        %v3970 = vpop.permute.xlu0 %3969
        %3971 = vrot.lane.b32.xlu0 %v3529, 80
        %v3972 = vpop.permute.xlu0 %3971
        %3973 = vrot.lane.b32.xlu0 %v3530, 80
        %v3974 = vpop.permute.xlu0 %3973
        %3975 = vrot.lane.b32.xlu0 %v3531, 80
        %v3976 = vpop.permute.xlu0 %3975
        %3977 = vrot.lane.b32.xlu0 %v3532, 80
        %v3978 = vpop.permute.xlu0 %3977
        %3979 = vrot.lane.b32.xlu0 %v3533, 80
        %v3980 = vpop.permute.xlu0 %3979
        %3981 = vrot.lane.b32.xlu0 %v3534, 80
        %v3982 = vpop.permute.xlu0 %3981
        %3983 = vrot.lane.b32.xlu0 %v3535, 80
        %v3984 = vpop.permute.xlu0 %3983
        %3985 = vrot.lane.b32.xlu0 %v3536, 80
        %v3986 = vpop.permute.xlu0 %3985
        %4005 = vrot.lane.b32.xlu0 %v3555, 96
        %v4006 = vpop.permute.xlu0 %4005
        %4007 = vrot.lane.b32.xlu0 %v3556, 96
        %v4008 = vpop.permute.xlu0 %4007
        %4009 = vrot.lane.b32.xlu0 %v3557, 96
        %v4010 = vpop.permute.xlu0 %4009
        %4011 = vrot.lane.b32.xlu0 %v3558, 96
        %v4012 = vpop.permute.xlu0 %4011
        %4013 = vrot.lane.b32.xlu0 %v3559, 96
        %v4014 = vpop.permute.xlu0 %4013
        %4015 = vrot.lane.b32.xlu0 %v3560, 96
        %v4016 = vpop.permute.xlu0 %4015
        %4017 = vrot.lane.b32.xlu0 %v3561, 96
        %v4018 = vpop.permute.xlu0 %4017
        %4019 = vrot.lane.b32.xlu0 %v3562, 96
        %v4020 = vpop.permute.xlu0 %4019
        %4021 = vrot.lane.b32.xlu0 %v3563, 96
        %v4022 = vpop.permute.xlu0 %4021
        %4041 = vrot.lane.b32.xlu0 %v3149, 112
        %v4042 = vpop.permute.xlu0 %4041
        %4043 = vrot.lane.b32.xlu0 %v3152, 112
        %v4044 = vpop.permute.xlu0 %4043
        %4045 = vrot.lane.b32.xlu0 %v3157, 112
        %v4046 = vpop.permute.xlu0 %4045
        %4047 = vrot.lane.b32.xlu0 %v3160, 112
        %v4048 = vpop.permute.xlu0 %4047
        %4049 = vrot.lane.b32.xlu0 %v3165, 112
        %v4050 = vpop.permute.xlu0 %4049
        %4051 = vrot.lane.b32.xlu0 %v3168, 112
        %v4052 = vpop.permute.xlu0 %4051
        %4053 = vrot.lane.b32.xlu0 %v3173, 112
        %v4054 = vpop.permute.xlu0 %4053
        %4055 = vrot.lane.b32.xlu0 %v3176, 112
        %v4056 = vpop.permute.xlu0 %4055
        %4057 = vrot.lane.b32.xlu0 %v3181, 112
        %v4058 = vpop.permute.xlu0 %4057
        %v4068 = vsel %vm1401, %v2465, %v3574
        %v4069 = vsel %vm1401, %v2468, %v3576
        %v4070 = vsel %vm1401, %v2473, %v3578
        %v4071 = vsel %vm1401, %v2476, %v3580
        %v4072 = vsel %vm1401, %v2481, %v3582
        %v4073 = vsel %vm1401, %v2484, %v3584
        %v4074 = vsel %vm1401, %v2489, %v3586
        %v4075 = vsel %vm1401, %v2492, %v3588
        %v4076 = vsel %vm1401, %v2497, %v3590
        %v4077 = vsel %vm1478, %v4068, %v3610
        %v4078 = vsel %vm1478, %v4069, %v3612
        %v4079 = vsel %vm1478, %v4070, %v3614
        %v4080 = vsel %vm1478, %v4071, %v3616
        %v4081 = vsel %vm1478, %v4072, %v3618
        %v4082 = vsel %vm1478, %v4073, %v3620
        %v4083 = vsel %vm1478, %v4074, %v3622
        %v4084 = vsel %vm1478, %v4075, %v3624
        %v4085 = vsel %vm1478, %v4076, %v3626
        %vm4086 = vcmask 392192
        %v4087 = vsel %vm4086, %v4077, %v3646
        %v4088 = vsel %vm4086, %v4078, %v3648
        %v4089 = vsel %vm4086, %v4079, %v3650
        %v4090 = vsel %vm4086, %v4080, %v3652
        %v4091 = vsel %vm4086, %v4081, %v3654
        %v4092 = vsel %vm4086, %v4082, %v3656
        %v4093 = vsel %vm4086, %v4083, %v3658
        %v4094 = vsel %vm4086, %v4084, %v3660
        %v4095 = vsel %vm4086, %v4085, %v3662
        %v4096 = vsel %vm974, %v4087, %v3682
        %v4097 = vsel %vm974, %v4088, %v3684
        %v4098 = vsel %vm974, %v4089, %v3686
        %v4099 = vsel %vm974, %v4090, %v3688
        %v4100 = vsel %vm974, %v4091, %v3690
        %v4101 = vsel %vm974, %v4092, %v3692
        %v4102 = vsel %vm974, %v4093, %v3694
        %v4103 = vsel %vm974, %v4094, %v3696
        %v4104 = vsel %vm974, %v4095, %v3698
        %vm4105 = vcmask 654336
        %v4106 = vsel %vm4105, %v4096, %v3718
        %v4107 = vsel %vm4105, %v4097, %v3720
        %v4108 = vsel %vm4105, %v4098, %v3722
        %v4109 = vsel %vm4105, %v4099, %v3724
        %v4110 = vsel %vm4105, %v4100, %v3726
        %v4111 = vsel %vm4105, %v4101, %v3728
        %v4112 = vsel %vm4105, %v4102, %v3730
        %v4113 = vsel %vm4105, %v4103, %v3732
        %v4114 = vsel %vm4105, %v4104, %v3734
        %v4115 = vsel %vm1498, %v4106, %v3754
        %v4116 = vsel %vm1498, %v4107, %v3756
        %v4117 = vsel %vm1498, %v4108, %v3758
        %v4118 = vsel %vm1498, %v4109, %v3760
        %v4119 = vsel %vm1498, %v4110, %v3762
        %v4120 = vsel %vm1498, %v4111, %v3764
        %v4121 = vsel %vm1498, %v4112, %v3766
        %v4122 = vsel %vm1498, %v4113, %v3768
        %v4123 = vsel %vm1498, %v4114, %v3770
        %v4124 = vsel %vm1421, %v4115, %v3790
        %v4125 = vsel %vm1421, %v4116, %v3792
        %v4126 = vsel %vm1421, %v4117, %v3794
        %v4127 = vsel %vm1421, %v4118, %v3796
        %v4128 = vsel %vm1421, %v4119, %v3798
        %v4129 = vsel %vm1421, %v4120, %v3800
        %v4130 = vsel %vm1421, %v4121, %v3802
        %v4131 = vsel %vm1421, %v4122, %v3804
        %v4132 = vsel %vm1421, %v4123, %v3806
        %v4133 = vsel %vm1401, %v3393, %v3826
        %v4134 = vsel %vm1401, %v3394, %v3828
        %v4135 = vsel %vm1401, %v3395, %v3830
        %v4136 = vsel %vm1401, %v3396, %v3832
        %v4137 = vsel %vm1401, %v3397, %v3834
        %v4138 = vsel %vm1401, %v3398, %v3836
        %v4139 = vsel %vm1401, %v3399, %v3838
        %v4140 = vsel %vm1401, %v3400, %v3840
        %v4141 = vsel %vm1401, %v3401, %v3842
        %v4142 = vsel %vm1478, %v4133, %v3862
        %v4143 = vsel %vm1478, %v4134, %v3864
        %v4144 = vsel %vm1478, %v4135, %v3866
        %v4145 = vsel %vm1478, %v4136, %v3868
        %v4146 = vsel %vm1478, %v4137, %v3870
        %v4147 = vsel %vm1478, %v4138, %v3872
        %v4148 = vsel %vm1478, %v4139, %v3874
        %v4149 = vsel %vm1478, %v4140, %v3876
        %v4150 = vsel %vm1478, %v4141, %v3878
        %v4151 = vsel %vm4086, %v4142, %v3898
        %v4152 = vsel %vm4086, %v4143, %v3900
        %v4153 = vsel %vm4086, %v4144, %v3902
        %v4154 = vsel %vm4086, %v4145, %v3904
        %v4155 = vsel %vm4086, %v4146, %v3906
        %v4156 = vsel %vm4086, %v4147, %v3908
        %v4157 = vsel %vm4086, %v4148, %v3910
        %v4158 = vsel %vm4086, %v4149, %v3912
        %v4159 = vsel %vm4086, %v4150, %v3914
        %v4160 = vsel %vm974, %v4151, %v3934
        %v4161 = vsel %vm974, %v4152, %v3936
        %v4162 = vsel %vm974, %v4153, %v3938
        %v4163 = vsel %vm974, %v4154, %v3940
        %v4164 = vsel %vm974, %v4155, %v3942
        %v4165 = vsel %vm974, %v4156, %v3944
        %v4166 = vsel %vm974, %v4157, %v3946
        %v4167 = vsel %vm974, %v4158, %v3948
        %v4168 = vsel %vm974, %v4159, %v3950
        %v4169 = vsel %vm4105, %v4160, %v3970
        %v4170 = vsel %vm4105, %v4161, %v3972
        %v4171 = vsel %vm4105, %v4162, %v3974
        %v4172 = vsel %vm4105, %v4163, %v3976
        %v4173 = vsel %vm4105, %v4164, %v3978
        %v4174 = vsel %vm4105, %v4165, %v3980
        %v4175 = vsel %vm4105, %v4166, %v3982
        %v4176 = vsel %vm4105, %v4167, %v3984
        %v4177 = vsel %vm4105, %v4168, %v3986
        %v4178 = vsel %vm1498, %v4169, %v4006
        %v4179 = vsel %vm1498, %v4170, %v4008
        %v4180 = vsel %vm1498, %v4171, %v4010
        %v4181 = vsel %vm1498, %v4172, %v4012
        %v4182 = vsel %vm1498, %v4173, %v4014
        %v4183 = vsel %vm1498, %v4174, %v4016
        %v4184 = vsel %vm1498, %v4175, %v4018
        %v4185 = vsel %vm1498, %v4176, %v4020
        %v4186 = vsel %vm1498, %v4177, %v4022
        %v4187 = vsel %vm1421, %v4178, %v4042
        %v4188 = vsel %vm1421, %v4179, %v4044
        %v4189 = vsel %vm1421, %v4180, %v4046
        %v4190 = vsel %vm1421, %v4181, %v4048
        %v4191 = vsel %vm1421, %v4182, %v4050
        %v4192 = vsel %vm1421, %v4183, %v4052
        %v4193 = vsel %vm1421, %v4184, %v4054
        %v4194 = vsel %vm1421, %v4185, %v4056
        %v4195 = vsel %vm1421, %v4186, %v4058
        %v4196 = vld [vmem:[#allocation28] sm:$0x3]
        %vm4197 = vcmask 31744
        %v4199 = vsel %vm4197, %v2231, 0
        %v4202 = vsel %vm4197, %v2232, 0
        %v4205 = vsel %vm4197, %v2233, 0
        %v4208 = vsel %vm4197, %v2234, 0
        %v4211 = vsel %vm4197, %v2408, 0
        %vm4213 = vcmask 1041408
        %v4215 = vsel %vm4213, %v4196, 0
        %4217 = vmatprep.subr.bf16.mxu0 0
        %4218 = vmatpush1.bf16.msra.mxu0 %v4215
        %4219 = vmatprep.subr.bf16.mxu0 0
        %4220 = vmatpush1.bf16.msra.mxu0 0
        %4221 = vmatprep.subr.bf16.mxu0 0
        %4222 = vmatpush1.bf16.msra.mxu0 0
        %4223 = vmatprep.subr.bf16.mxu0 0
        %4224 = vmatpush1.bf16.msra.mxu0 0
        %4225 = vmatprep.subr.bf16.mxu0 0
        %4226 = vmatpush1.bf16.msra.mxu0 0
        %4227 = vmatprep.subr.bf16.mxu0 0
        %4228 = vmatpush1.bf16.msra.mxu0 0
        %4229 = vmatprep.subr.bf16.mxu0 0
        %4230 = vmatpush1.bf16.msra.mxu0 0
        %4231 = vmatprep.subr.bf16.mxu0 0
        %4232 = vmatpush1.bf16.msra.mxu0 0
        %4233 = vmatprep.subr.bf16.mxu0 0
        %4234 = vmatpush1.bf16.msra.mxu0 0
        %4235 = vmatprep.subr.bf16.mxu0 0
        %4236 = vmatpush1.bf16.msra.mxu0 0
        %4237 = vmatprep.subr.bf16.mxu0 0
        %4238 = vmatpush1.bf16.msra.mxu0 0
        %4239 = vmatprep.subr.bf16.mxu0 0
        %4240 = vmatpush1.bf16.msra.mxu0 0
        %4241 = vmatprep.subr.bf16.mxu0 0
        %4242 = vmatpush1.bf16.msra.mxu0 0
        %4243 = vmatprep.subr.bf16.mxu0 0
        %4244 = vmatpush1.bf16.msra.mxu0 0
        %4245 = vmatprep.subr.bf16.mxu0 0
        %4246 = vmatpush1.bf16.msra.mxu0 0
        %4247 = vmatprep.subr.bf16.mxu0 0
        %4248 = vmatpush1.bf16.msra.mxu0 0
        %4249 = vmatprep.mubr.bf16.mxu0 0
        %4250 = vmatmul.mubr.bf16.gmra.mrb[0].mxu0 %v4199
        %v4251 = vpop.f32.mrb[0].mxu0
        %v4252 = vadd.f32 0.0, %v4251
        %v4253 = vpop.f32.mrb[0].mxu0
        %v4254 = vpop.f32.mrb[0].mxu0
        %v4255 = vadd.f32 0.0, %v4254
        %v4256 = vpop.f32.mrb[0].mxu0
        %4257 = vmatprep.mubr.bf16.mxu0 0
        %4258 = vmatmul.mubr.bf16.gmra.mrb[0].mxu0 %v4202
        %v4259 = vpop.f32.mrb[0].mxu0
        %v4260 = vadd.f32 0.0, %v4259
        %v4261 = vpop.f32.mrb[0].mxu0
        %v4262 = vpop.f32.mrb[0].mxu0
        %v4263 = vadd.f32 0.0, %v4262
        %v4264 = vpop.f32.mrb[0].mxu0
        %4265 = vmatprep.mubr.bf16.mxu0 0
        %4266 = vmatmul.mubr.bf16.gmra.mrb[0].mxu0 %v4205
        %v4267 = vpop.f32.mrb[0].mxu0
        %v4268 = vadd.f32 0.0, %v4267
        %v4269 = vpop.f32.mrb[0].mxu0
        %v4270 = vpop.f32.mrb[0].mxu0
        %v4271 = vadd.f32 0.0, %v4270
        %v4272 = vpop.f32.mrb[0].mxu0
        %4273 = vmatprep.mubr.bf16.mxu0 0
        %4274 = vmatmul.mubr.bf16.gmra.mrb[0].mxu0 %v4208
        %v4275 = vpop.f32.mrb[0].mxu0
        %v4276 = vadd.f32 0.0, %v4275
        %v4277 = vpop.f32.mrb[0].mxu0
        %v4278 = vpop.f32.mrb[0].mxu0
        %v4279 = vadd.f32 0.0, %v4278
        %v4280 = vpop.f32.mrb[0].mxu0
        %4281 = vmatprep.mubr.bf16.mxu0 0
        %4282 = vmatmul.mubr.bf16.gmra.mrb[0].mxu0 %v4211
        %v4283 = vpop.f32.mrb[0].mxu0
        %v4284 = vadd.f32 0.0, %v4283
        %v4285 = vpop.f32.mrb[0].mxu0
        %v4286 = vpop.f32.mrb[0].mxu0
        %v4287 = vpop.f32.mrb[0].mxu0
        %4288 = vdwg.mxu0
        %4294 = vrot.lane.b32.xlu0 %v2231, 124
        %v4295 = vpop.permute.xlu0 %4294
        %4296 = vrot.lane.b32.xlu0 %v2232, 124
        %v4297 = vpop.permute.xlu0 %4296
        %4298 = vrot.lane.b32.xlu0 %v2233, 124
        %v4299 = vpop.permute.xlu0 %4298
        %4300 = vrot.lane.b32.xlu0 %v2234, 124
        %v4301 = vpop.permute.xlu0 %4300
        %4302 = vrot.lane.b32.xlu0 %v2408, 124
        %v4303 = vpop.permute.xlu0 %4302
        %v4305 = vsel %vm4197, %v4295, 0
        %v4308 = vsel %vm4197, %v4297, 0
        %v4311 = vsel %vm4197, %v4299, 0
        %v4314 = vsel %vm4197, %v4301, 0
        %v4317 = vsel %vm4197, %v4303, 0
        %4319 = vmatprep.subr.bf16.mxu0 0
        %4320 = vmatpush1.bf16.msra.mxu0 %v4215
        %4321 = vmatprep.subr.bf16.mxu0 0
        %4322 = vmatpush1.bf16.msra.mxu0 0
        %4323 = vmatprep.subr.bf16.mxu0 0
        %4324 = vmatpush1.bf16.msra.mxu0 0
        %4325 = vmatprep.subr.bf16.mxu0 0
        %4326 = vmatpush1.bf16.msra.mxu0 0
        %4327 = vmatprep.subr.bf16.mxu0 0
        %4328 = vmatpush1.bf16.msra.mxu0 0
        %4329 = vmatprep.subr.bf16.mxu0 0
        %4330 = vmatpush1.bf16.msra.mxu0 0
        %4331 = vmatprep.subr.bf16.mxu0 0
        %4332 = vmatpush1.bf16.msra.mxu0 0
        %4333 = vmatprep.subr.bf16.mxu0 0
        %4334 = vmatpush1.bf16.msra.mxu0 0
        %4335 = vmatprep.subr.bf16.mxu0 0
        %4336 = vmatpush1.bf16.msra.mxu0 0
        %4337 = vmatprep.subr.bf16.mxu0 0
        %4338 = vmatpush1.bf16.msra.mxu0 0
        %4339 = vmatprep.subr.bf16.mxu0 0
        %4340 = vmatpush1.bf16.msra.mxu0 0
        %4341 = vmatprep.subr.bf16.mxu0 0
        %4342 = vmatpush1.bf16.msra.mxu0 0
        %4343 = vmatprep.subr.bf16.mxu0 0
        %4344 = vmatpush1.bf16.msra.mxu0 0
        %4345 = vmatprep.subr.bf16.mxu0 0
        %4346 = vmatpush1.bf16.msra.mxu0 0
        %4347 = vmatprep.subr.bf16.mxu0 0
        %4348 = vmatpush1.bf16.msra.mxu0 0
        %4349 = vmatprep.subr.bf16.mxu0 0
        %4350 = vmatpush1.bf16.msra.mxu0 0
        %4351 = vmatprep.mubr.bf16.mxu0 0
        %4352 = vmatmul.mubr.bf16.gmra.mrb[0].mxu0 %v4305
        %v4353 = vpop.f32.mrb[0].mxu0
        %v4354 = vadd.f32 0.0, %v4353
        %v4355 = vpop.f32.mrb[0].mxu0
        %v4356 = vpop.f32.mrb[0].mxu0
        %v4357 = vadd.f32 0.0, %v4356
        %v4358 = vpop.f32.mrb[0].mxu0
        %4359 = vmatprep.mubr.bf16.mxu0 0
        %4360 = vmatmul.mubr.bf16.gmra.mrb[0].mxu0 %v4308
        %v4361 = vpop.f32.mrb[0].mxu0
        %v4362 = vadd.f32 0.0, %v4361
        %v4363 = vpop.f32.mrb[0].mxu0
        %v4364 = vpop.f32.mrb[0].mxu0
        %v4365 = vadd.f32 0.0, %v4364
        %v4366 = vpop.f32.mrb[0].mxu0
        %4367 = vmatprep.mubr.bf16.mxu0 0
        %4368 = vmatmul.mubr.bf16.gmra.mrb[0].mxu0 %v4311
        %v4369 = vpop.f32.mrb[0].mxu0
        %v4370 = vadd.f32 0.0, %v4369
        %v4371 = vpop.f32.mrb[0].mxu0
        %v4372 = vpop.f32.mrb[0].mxu0
        %v4373 = vadd.f32 0.0, %v4372
        %v4374 = vpop.f32.mrb[0].mxu0
        %4375 = vmatprep.mubr.bf16.mxu0 0
        %4376 = vmatmul.mubr.bf16.gmra.mrb[0].mxu0 %v4314
        %v4377 = vpop.f32.mrb[0].mxu0
        %v4378 = vadd.f32 0.0, %v4377
        %v4379 = vpop.f32.mrb[0].mxu0
        %v4380 = vpop.f32.mrb[0].mxu0
        %v4381 = vadd.f32 0.0, %v4380
        %v4382 = vpop.f32.mrb[0].mxu0
        %4383 = vmatprep.mubr.bf16.mxu0 0
        %4384 = vmatmul.mubr.bf16.gmra.mrb[0].mxu0 %v4317
        %v4385 = vpop.f32.mrb[0].mxu0
        %v4386 = vadd.f32 0.0, %v4385
        %v4387 = vpop.f32.mrb[0].mxu0
        %v4388 = vpop.f32.mrb[0].mxu0
        %v4389 = vpop.f32.mrb[0].mxu0
        %4390 = vdwg.mxu0
        %4391 = vrot.lane.b32.xlu0 %v2231, 120
        %v4392 = vpop.permute.xlu0 %4391
        %4393 = vrot.lane.b32.xlu0 %v2232, 120
        %v4394 = vpop.permute.xlu0 %4393
        %4395 = vrot.lane.b32.xlu0 %v2233, 120
        %v4396 = vpop.permute.xlu0 %4395
        %4397 = vrot.lane.b32.xlu0 %v2234, 120
        %v4398 = vpop.permute.xlu0 %4397
        %4399 = vrot.lane.b32.xlu0 %v2408, 120
        %v4400 = vpop.permute.xlu0 %4399
        %v4402 = vsel %vm4197, %v4392, 0
        %v4405 = vsel %vm4197, %v4394, 0
        %v4408 = vsel %vm4197, %v4396, 0
        %v4411 = vsel %vm4197, %v4398, 0
        %v4414 = vsel %vm4197, %v4400, 0
        %4416 = vmatprep.subr.bf16.mxu0 0
        %4417 = vmatpush1.bf16.msra.mxu0 %v4215
        %4418 = vmatprep.subr.bf16.mxu0 0
        %4419 = vmatpush1.bf16.msra.mxu0 0
        %4420 = vmatprep.subr.bf16.mxu0 0
        %4421 = vmatpush1.bf16.msra.mxu0 0
        %4422 = vmatprep.subr.bf16.mxu0 0
        %4423 = vmatpush1.bf16.msra.mxu0 0
        %4424 = vmatprep.subr.bf16.mxu0 0
        %4425 = vmatpush1.bf16.msra.mxu0 0
        %4426 = vmatprep.subr.bf16.mxu0 0
        %4427 = vmatpush1.bf16.msra.mxu0 0
        %4428 = vmatprep.subr.bf16.mxu0 0
        %4429 = vmatpush1.bf16.msra.mxu0 0
        %4430 = vmatprep.subr.bf16.mxu0 0
        %4431 = vmatpush1.bf16.msra.mxu0 0
        %4432 = vmatprep.subr.bf16.mxu0 0
        %4433 = vmatpush1.bf16.msra.mxu0 0
        %4434 = vmatprep.subr.bf16.mxu0 0
        %4435 = vmatpush1.bf16.msra.mxu0 0
        %4436 = vmatprep.subr.bf16.mxu0 0
        %4437 = vmatpush1.bf16.msra.mxu0 0
        %4438 = vmatprep.subr.bf16.mxu0 0
        %4439 = vmatpush1.bf16.msra.mxu0 0
        %4440 = vmatprep.subr.bf16.mxu0 0
        %4441 = vmatpush1.bf16.msra.mxu0 0
        %4442 = vmatprep.subr.bf16.mxu0 0
        %4443 = vmatpush1.bf16.msra.mxu0 0
        %4444 = vmatprep.subr.bf16.mxu0 0
        %4445 = vmatpush1.bf16.msra.mxu0 0
        %4446 = vmatprep.subr.bf16.mxu0 0
        %4447 = vmatpush1.bf16.msra.mxu0 0
        %4448 = vmatprep.mubr.bf16.mxu0 0
        %4449 = vmatmul.mubr.bf16.gmra.mrb[0].mxu0 %v4402
        %v4450 = vpop.f32.mrb[0].mxu0
        %v4451 = vadd.f32 0.0, %v4450
        %v4452 = vpop.f32.mrb[0].mxu0
        %v4453 = vpop.f32.mrb[0].mxu0
        %v4454 = vadd.f32 0.0, %v4453
        %v4455 = vpop.f32.mrb[0].mxu0
        %4456 = vmatprep.mubr.bf16.mxu0 0
        %4457 = vmatmul.mubr.bf16.gmra.mrb[0].mxu0 %v4405
        %v4458 = vpop.f32.mrb[0].mxu0
        %v4459 = vadd.f32 0.0, %v4458
        %v4460 = vpop.f32.mrb[0].mxu0
        %v4461 = vpop.f32.mrb[0].mxu0
        %v4462 = vadd.f32 0.0, %v4461
        %v4463 = vpop.f32.mrb[0].mxu0
        %4464 = vmatprep.mubr.bf16.mxu0 0
        %4465 = vmatmul.mubr.bf16.gmra.mrb[0].mxu0 %v4408
        %v4466 = vpop.f32.mrb[0].mxu0
        %v4467 = vadd.f32 0.0, %v4466
        %v4468 = vpop.f32.mrb[0].mxu0
        %v4469 = vpop.f32.mrb[0].mxu0
        %v4470 = vadd.f32 0.0, %v4469
        %v4471 = vpop.f32.mrb[0].mxu0
        %4472 = vmatprep.mubr.bf16.mxu0 0
        %4473 = vmatmul.mubr.bf16.gmra.mrb[0].mxu0 %v4411
        %v4474 = vpop.f32.mrb[0].mxu0
        %v4475 = vadd.f32 0.0, %v4474
        %v4476 = vpop.f32.mrb[0].mxu0
        %v4477 = vpop.f32.mrb[0].mxu0
        %v4478 = vadd.f32 0.0, %v4477
        %v4479 = vpop.f32.mrb[0].mxu0
        %4480 = vmatprep.mubr.bf16.mxu0 0
        %4481 = vmatmul.mubr.bf16.gmra.mrb[0].mxu0 %v4414
        %v4482 = vpop.f32.mrb[0].mxu0
        %v4483 = vadd.f32 0.0, %v4482
        %v4484 = vpop.f32.mrb[0].mxu0
        %v4485 = vpop.f32.mrb[0].mxu0
        %v4486 = vpop.f32.mrb[0].mxu0
        %4487 = vdwg.mxu0
        %4488 = vrot.lane.b32.xlu0 %v2231, 116
        %v4489 = vpop.permute.xlu0 %4488
        %4490 = vrot.lane.b32.xlu0 %v2232, 116
        %v4491 = vpop.permute.xlu0 %4490
        %4492 = vrot.lane.b32.xlu0 %v2233, 116
        %v4493 = vpop.permute.xlu0 %4492
        %4494 = vrot.lane.b32.xlu0 %v2234, 116
        %v4495 = vpop.permute.xlu0 %4494
        %4496 = vrot.lane.b32.xlu0 %v2408, 116
        %v4497 = vpop.permute.xlu0 %4496
        %v4499 = vsel %vm4197, %v4489, 0
        %v4502 = vsel %vm4197, %v4491, 0
        %v4505 = vsel %vm4197, %v4493, 0
        %v4508 = vsel %vm4197, %v4495, 0
        %v4511 = vsel %vm4197, %v4497, 0
        %4513 = vmatprep.subr.bf16.mxu0 0
        %4514 = vmatpush1.bf16.msra.mxu0 %v4215
        %4515 = vmatprep.subr.bf16.mxu0 0
        %4516 = vmatpush1.bf16.msra.mxu0 0
        %4517 = vmatprep.subr.bf16.mxu0 0
        %4518 = vmatpush1.bf16.msra.mxu0 0
        %4519 = vmatprep.subr.bf16.mxu0 0
        %4520 = vmatpush1.bf16.msra.mxu0 0
        %4521 = vmatprep.subr.bf16.mxu0 0
        %4522 = vmatpush1.bf16.msra.mxu0 0
        %4523 = vmatprep.subr.bf16.mxu0 0
        %4524 = vmatpush1.bf16.msra.mxu0 0
        %4525 = vmatprep.subr.bf16.mxu0 0
        %4526 = vmatpush1.bf16.msra.mxu0 0
        %4527 = vmatprep.subr.bf16.mxu0 0
        %4528 = vmatpush1.bf16.msra.mxu0 0
        %4529 = vmatprep.subr.bf16.mxu0 0
        %4530 = vmatpush1.bf16.msra.mxu0 0
        %4531 = vmatprep.subr.bf16.mxu0 0
        %4532 = vmatpush1.bf16.msra.mxu0 0
        %4533 = vmatprep.subr.bf16.mxu0 0
        %4534 = vmatpush1.bf16.msra.mxu0 0
        %4535 = vmatprep.subr.bf16.mxu0 0
        %4536 = vmatpush1.bf16.msra.mxu0 0
        %4537 = vmatprep.subr.bf16.mxu0 0
        %4538 = vmatpush1.bf16.msra.mxu0 0
        %4539 = vmatprep.subr.bf16.mxu0 0
        %4540 = vmatpush1.bf16.msra.mxu0 0
        %4541 = vmatprep.subr.bf16.mxu0 0
        %4542 = vmatpush1.bf16.msra.mxu0 0
        %4543 = vmatprep.subr.bf16.mxu0 0
        %4544 = vmatpush1.bf16.msra.mxu0 0
        %4545 = vmatprep.mubr.bf16.mxu0 0
        %4546 = vmatmul.mubr.bf16.gmra.mrb[0].mxu0 %v4499
        %v4547 = vpop.f32.mrb[0].mxu0
        %v4548 = vadd.f32 0.0, %v4547
        %v4549 = vpop.f32.mrb[0].mxu0
        %v4550 = vpop.f32.mrb[0].mxu0
        %v4551 = vadd.f32 0.0, %v4550
        %v4552 = vpop.f32.mrb[0].mxu0
        %4553 = vmatprep.mubr.bf16.mxu0 0
        %4554 = vmatmul.mubr.bf16.gmra.mrb[0].mxu0 %v4502
        %v4555 = vpop.f32.mrb[0].mxu0
        %v4556 = vadd.f32 0.0, %v4555
        %v4557 = vpop.f32.mrb[0].mxu0
        %v4558 = vpop.f32.mrb[0].mxu0
        %v4559 = vadd.f32 0.0, %v4558
        %v4560 = vpop.f32.mrb[0].mxu0
        %4561 = vmatprep.mubr.bf16.mxu0 0
        %4562 = vmatmul.mubr.bf16.gmra.mrb[0].mxu0 %v4505
        %v4563 = vpop.f32.mrb[0].mxu0
        %v4564 = vadd.f32 0.0, %v4563
        %v4565 = vpop.f32.mrb[0].mxu0
        %v4566 = vpop.f32.mrb[0].mxu0
        %v4567 = vadd.f32 0.0, %v4566
        %v4568 = vpop.f32.mrb[0].mxu0
        %4569 = vmatprep.mubr.bf16.mxu0 0
        %4570 = vmatmul.mubr.bf16.gmra.mrb[0].mxu0 %v4508
        %v4571 = vpop.f32.mrb[0].mxu0
        %v4572 = vadd.f32 0.0, %v4571
        %v4573 = vpop.f32.mrb[0].mxu0
        %v4574 = vpop.f32.mrb[0].mxu0
        %v4575 = vadd.f32 0.0, %v4574
        %v4576 = vpop.f32.mrb[0].mxu0
        %4577 = vmatprep.mubr.bf16.mxu0 0
        %4578 = vmatmul.mubr.bf16.gmra.mrb[0].mxu0 %v4511
        %v4579 = vpop.f32.mrb[0].mxu0
        %v4580 = vadd.f32 0.0, %v4579
        %v4581 = vpop.f32.mrb[0].mxu0
        %v4582 = vpop.f32.mrb[0].mxu0
        %v4583 = vpop.f32.mrb[0].mxu0
        %4584 = vdwg.mxu0
        %v4585 = vmul.f32 %v4252, 0.8
        %v4586 = vmul.f32 %v4255, 0.8
        %v4587 = vmul.f32 %v4260, 0.8
        %v4588 = vmul.f32 %v4263, 0.8
        %v4589 = vmul.f32 %v4268, 0.8
        %v4590 = vmul.f32 %v4271, 0.8
        %v4591 = vmul.f32 %v4276, 0.8
        %v4592 = vmul.f32 %v4279, 0.8
        %v4593 = vmul.f32 %v4284, 0.8
        %v4594 = vmul.f32 %v4354, 0.2
        %v4595 = vmul.f32 %v4357, 0.2
        %v4596 = vmul.f32 %v4362, 0.2
        %v4597 = vmul.f32 %v4365, 0.2
        %v4598 = vmul.f32 %v4370, 0.2
        %v4599 = vmul.f32 %v4373, 0.2
        %v4600 = vmul.f32 %v4378, 0.2
        %v4601 = vmul.f32 %v4381, 0.2
        %v4602 = vmul.f32 %v4386, 0.2
        %v4603 = vadd.f32 %v4585, %v4594
        %v4604 = vadd.f32 %v4586, %v4595
        %v4605 = vadd.f32 %v4587, %v4596
        %v4606 = vadd.f32 %v4588, %v4597
        %v4607 = vadd.f32 %v4589, %v4598
        %v4608 = vadd.f32 %v4590, %v4599
        %v4609 = vadd.f32 %v4591, %v4600
        %v4610 = vadd.f32 %v4592, %v4601
        %v4611 = vadd.f32 %v4593, %v4602
        %v4612 = vmul.f32 %v4252, 0.6
        %v4613 = vmul.f32 %v4255, 0.6
        %v4614 = vmul.f32 %v4260, 0.6
        %v4615 = vmul.f32 %v4263, 0.6
        %v4616 = vmul.f32 %v4268, 0.6
        %v4617 = vmul.f32 %v4271, 0.6
        %v4618 = vmul.f32 %v4276, 0.6
        %v4619 = vmul.f32 %v4279, 0.6
        %v4620 = vmul.f32 %v4284, 0.6
        %v4621 = vmul.f32 %v4354, 0.4
        %v4622 = vmul.f32 %v4357, 0.4
        %v4623 = vmul.f32 %v4362, 0.4
        %v4624 = vmul.f32 %v4365, 0.4
        %v4625 = vmul.f32 %v4370, 0.4
        %v4626 = vmul.f32 %v4373, 0.4
        %v4627 = vmul.f32 %v4378, 0.4
        %v4628 = vmul.f32 %v4381, 0.4
        %v4629 = vmul.f32 %v4386, 0.4
        %v4630 = vadd.f32 %v4612, %v4621
        %v4631 = vadd.f32 %v4613, %v4622
        %v4632 = vadd.f32 %v4614, %v4623
        %v4633 = vadd.f32 %v4615, %v4624
        %v4634 = vadd.f32 %v4616, %v4625
        %v4635 = vadd.f32 %v4617, %v4626
        %v4636 = vadd.f32 %v4618, %v4627
        %v4637 = vadd.f32 %v4619, %v4628
        %v4638 = vadd.f32 %v4620, %v4629
        %v4639 = vmul.f32 %v4252, 0.4
        %v4640 = vmul.f32 %v4255, 0.4
        %v4641 = vmul.f32 %v4260, 0.4
        %v4642 = vmul.f32 %v4263, 0.4
        %v4643 = vmul.f32 %v4268, 0.4
        %v4644 = vmul.f32 %v4271, 0.4
        %v4645 = vmul.f32 %v4276, 0.4
        %v4646 = vmul.f32 %v4279, 0.4
        %v4647 = vmul.f32 %v4284, 0.4
        %v4648 = vmul.f32 %v4354, 0.6
        %v4649 = vmul.f32 %v4357, 0.6
        %v4650 = vmul.f32 %v4362, 0.6
        %v4651 = vmul.f32 %v4365, 0.6
        %v4652 = vmul.f32 %v4370, 0.6
        %v4653 = vmul.f32 %v4373, 0.6
        %v4654 = vmul.f32 %v4378, 0.6
        %v4655 = vmul.f32 %v4381, 0.6
        %v4656 = vmul.f32 %v4386, 0.6
        %v4657 = vadd.f32 %v4639, %v4648
        %v4658 = vadd.f32 %v4640, %v4649
        %v4659 = vadd.f32 %v4641, %v4650
        %v4660 = vadd.f32 %v4642, %v4651
        %v4661 = vadd.f32 %v4643, %v4652
        %v4662 = vadd.f32 %v4644, %v4653
        %v4663 = vadd.f32 %v4645, %v4654
        %v4664 = vadd.f32 %v4646, %v4655
        %v4665 = vadd.f32 %v4647, %v4656
        %v4666 = vmul.f32 %v4252, 0.2
        %v4667 = vmul.f32 %v4255, 0.2
        %v4668 = vmul.f32 %v4260, 0.2
        %v4669 = vmul.f32 %v4263, 0.2
        %v4670 = vmul.f32 %v4268, 0.2
        %v4671 = vmul.f32 %v4271, 0.2
        %v4672 = vmul.f32 %v4276, 0.2
        %v4673 = vmul.f32 %v4279, 0.2
        %v4674 = vmul.f32 %v4284, 0.2
        %v4675 = vmul.f32 %v4354, 0.8
        %v4676 = vmul.f32 %v4357, 0.8
        %v4677 = vmul.f32 %v4362, 0.8
        %v4678 = vmul.f32 %v4365, 0.8
        %v4679 = vmul.f32 %v4370, 0.8
        %v4680 = vmul.f32 %v4373, 0.8
        %v4681 = vmul.f32 %v4378, 0.8
        %v4682 = vmul.f32 %v4381, 0.8
        %v4683 = vmul.f32 %v4386, 0.8
        %v4684 = vadd.f32 %v4666, %v4675
        %v4685 = vadd.f32 %v4667, %v4676
        %v4686 = vadd.f32 %v4668, %v4677
        %v4687 = vadd.f32 %v4669, %v4678
        %v4688 = vadd.f32 %v4670, %v4679
        %v4689 = vadd.f32 %v4671, %v4680
        %v4690 = vadd.f32 %v4672, %v4681
        %v4691 = vadd.f32 %v4673, %v4682
        %v4692 = vadd.f32 %v4674, %v4683
        %v4693 = vmul.f32 %v4451, 0.2
        %v4694 = vmul.f32 %v4454, 0.2
        %v4695 = vmul.f32 %v4459, 0.2
        %v4696 = vmul.f32 %v4462, 0.2
        %v4697 = vmul.f32 %v4467, 0.2
        %v4698 = vmul.f32 %v4470, 0.2
        %v4699 = vmul.f32 %v4475, 0.2
        %v4700 = vmul.f32 %v4478, 0.2
        %v4701 = vmul.f32 %v4483, 0.2
        %v4702 = vadd.f32 %v4675, %v4693
        %v4703 = vadd.f32 %v4676, %v4694
        %v4704 = vadd.f32 %v4677, %v4695
        %v4705 = vadd.f32 %v4678, %v4696
        %v4706 = vadd.f32 %v4679, %v4697
        %v4707 = vadd.f32 %v4680, %v4698
        %v4708 = vadd.f32 %v4681, %v4699
        %v4709 = vadd.f32 %v4682, %v4700
        %v4710 = vadd.f32 %v4683, %v4701
        %v4711 = vmul.f32 %v4451, 0.4
        %v4712 = vmul.f32 %v4454, 0.4
        %v4713 = vmul.f32 %v4459, 0.4
        %v4714 = vmul.f32 %v4462, 0.4
        %v4715 = vmul.f32 %v4467, 0.4
        %v4716 = vmul.f32 %v4470, 0.4
        %v4717 = vmul.f32 %v4475, 0.4
        %v4718 = vmul.f32 %v4478, 0.4
        %v4719 = vmul.f32 %v4483, 0.4
        %v4720 = vadd.f32 %v4648, %v4711
        %v4721 = vadd.f32 %v4649, %v4712
        %v4722 = vadd.f32 %v4650, %v4713
        %v4723 = vadd.f32 %v4651, %v4714
        %v4724 = vadd.f32 %v4652, %v4715
        %v4725 = vadd.f32 %v4653, %v4716
        %v4726 = vadd.f32 %v4654, %v4717
        %v4727 = vadd.f32 %v4655, %v4718
        %v4728 = vadd.f32 %v4656, %v4719
        %v4729 = vmul.f32 %v4451, 0.6
        %v4730 = vmul.f32 %v4454, 0.6
        %v4731 = vmul.f32 %v4459, 0.6
        %v4732 = vmul.f32 %v4462, 0.6
        %v4733 = vmul.f32 %v4467, 0.6
        %v4734 = vmul.f32 %v4470, 0.6
        %v4735 = vmul.f32 %v4475, 0.6
        %v4736 = vmul.f32 %v4478, 0.6
        %v4737 = vmul.f32 %v4483, 0.6
        %v4738 = vadd.f32 %v4621, %v4729
        %v4739 = vadd.f32 %v4622, %v4730
        %v4740 = vadd.f32 %v4623, %v4731
        %v4741 = vadd.f32 %v4624, %v4732
        %v4742 = vadd.f32 %v4625, %v4733
        %v4743 = vadd.f32 %v4626, %v4734
        %v4744 = vadd.f32 %v4627, %v4735
        %v4745 = vadd.f32 %v4628, %v4736
        %v4746 = vadd.f32 %v4629, %v4737
        %v4747 = vmul.f32 %v4451, 0.8
        %v4748 = vmul.f32 %v4454, 0.8
        %v4749 = vmul.f32 %v4459, 0.8
        %v4750 = vmul.f32 %v4462, 0.8
        %v4751 = vmul.f32 %v4467, 0.8
        %v4752 = vmul.f32 %v4470, 0.8
        %v4753 = vmul.f32 %v4475, 0.8
        %v4754 = vmul.f32 %v4478, 0.8
        %v4755 = vmul.f32 %v4483, 0.8
        %v4756 = vadd.f32 %v4594, %v4747
        %v4757 = vadd.f32 %v4595, %v4748
        %v4758 = vadd.f32 %v4596, %v4749
        %v4759 = vadd.f32 %v4597, %v4750
        %v4760 = vadd.f32 %v4598, %v4751
        %v4761 = vadd.f32 %v4599, %v4752
        %v4762 = vadd.f32 %v4600, %v4753
        %v4763 = vadd.f32 %v4601, %v4754
        %v4764 = vadd.f32 %v4602, %v4755
        %v4765 = vmul.f32 %v4548, 0.2
        %v4766 = vmul.f32 %v4551, 0.2
        %v4767 = vmul.f32 %v4556, 0.2
        %v4768 = vmul.f32 %v4559, 0.2
        %v4769 = vmul.f32 %v4564, 0.2
        %v4770 = vmul.f32 %v4567, 0.2
        %v4771 = vmul.f32 %v4572, 0.2
        %v4772 = vmul.f32 %v4575, 0.2
        %v4773 = vmul.f32 %v4580, 0.2
        %v4774 = vadd.f32 %v4747, %v4765
        %v4775 = vadd.f32 %v4748, %v4766
        %v4776 = vadd.f32 %v4749, %v4767
        %v4777 = vadd.f32 %v4750, %v4768
        %v4778 = vadd.f32 %v4751, %v4769
        %v4779 = vadd.f32 %v4752, %v4770
        %v4780 = vadd.f32 %v4753, %v4771
        %v4781 = vadd.f32 %v4754, %v4772
        %v4782 = vadd.f32 %v4755, %v4773
        %v4783 = vmul.f32 %v4548, 0.4
        %v4784 = vmul.f32 %v4551, 0.4
        %v4785 = vmul.f32 %v4556, 0.4
        %v4786 = vmul.f32 %v4559, 0.4
        %v4787 = vmul.f32 %v4564, 0.4
        %v4788 = vmul.f32 %v4567, 0.4
        %v4789 = vmul.f32 %v4572, 0.4
        %v4790 = vmul.f32 %v4575, 0.4
        %v4791 = vmul.f32 %v4580, 0.4
        %v4792 = vadd.f32 %v4729, %v4783
        %v4793 = vadd.f32 %v4730, %v4784
        %v4794 = vadd.f32 %v4731, %v4785
        %v4795 = vadd.f32 %v4732, %v4786
        %v4796 = vadd.f32 %v4733, %v4787
        %v4797 = vadd.f32 %v4734, %v4788
        %v4798 = vadd.f32 %v4735, %v4789
        %v4799 = vadd.f32 %v4736, %v4790
        %v4800 = vadd.f32 %v4737, %v4791
        %v4801 = vmul.f32 %v4548, 0.6
        %v4802 = vmul.f32 %v4551, 0.6
        %v4803 = vmul.f32 %v4556, 0.6
        %v4804 = vmul.f32 %v4559, 0.6
        %v4805 = vmul.f32 %v4564, 0.6
        %v4806 = vmul.f32 %v4567, 0.6
        %v4807 = vmul.f32 %v4572, 0.6
        %v4808 = vmul.f32 %v4575, 0.6
        %v4809 = vmul.f32 %v4580, 0.6
        %v4810 = vadd.f32 %v4711, %v4801
        %v4811 = vadd.f32 %v4712, %v4802
        %v4812 = vadd.f32 %v4713, %v4803
        %v4813 = vadd.f32 %v4714, %v4804
        %v4814 = vadd.f32 %v4715, %v4805
        %v4815 = vadd.f32 %v4716, %v4806
        %v4816 = vadd.f32 %v4717, %v4807
        %v4817 = vadd.f32 %v4718, %v4808
        %v4818 = vadd.f32 %v4719, %v4809
        %v4819 = vmul.f32 %v4548, 0.8
        %v4820 = vmul.f32 %v4551, 0.8
        %v4821 = vmul.f32 %v4556, 0.8
        %v4822 = vmul.f32 %v4559, 0.8
        %v4823 = vmul.f32 %v4564, 0.8
        %v4824 = vmul.f32 %v4567, 0.8
        %v4825 = vmul.f32 %v4572, 0.8
        %v4826 = vmul.f32 %v4575, 0.8
        %v4827 = vmul.f32 %v4580, 0.8
        %v4828 = vadd.f32 %v4693, %v4819
        %v4829 = vadd.f32 %v4694, %v4820
        %v4830 = vadd.f32 %v4695, %v4821
        %v4831 = vadd.f32 %v4696, %v4822
        %v4832 = vadd.f32 %v4697, %v4823
        %v4833 = vadd.f32 %v4698, %v4824
        %v4834 = vadd.f32 %v4699, %v4825
        %v4835 = vadd.f32 %v4700, %v4826
        %v4836 = vadd.f32 %v4701, %v4827
        %4846 = vrot.lane.b32.xlu0 %v4603, 16
        %v4847 = vpop.permute.xlu0 %4846
        %4848 = vrot.lane.b32.xlu0 %v4604, 16
        %v4849 = vpop.permute.xlu0 %4848
        %4850 = vrot.lane.b32.xlu0 %v4605, 16
        %v4851 = vpop.permute.xlu0 %4850
        %4852 = vrot.lane.b32.xlu0 %v4606, 16
        %v4853 = vpop.permute.xlu0 %4852
        %4854 = vrot.lane.b32.xlu0 %v4607, 16
        %v4855 = vpop.permute.xlu0 %4854
        %4856 = vrot.lane.b32.xlu0 %v4608, 16
        %v4857 = vpop.permute.xlu0 %4856
        %4858 = vrot.lane.b32.xlu0 %v4609, 16
        %v4859 = vpop.permute.xlu0 %4858
        %4860 = vrot.lane.b32.xlu0 %v4610, 16
        %v4861 = vpop.permute.xlu0 %4860
        %4862 = vrot.lane.b32.xlu0 %v4611, 16
        %v4863 = vpop.permute.xlu0 %4862
        %4882 = vrot.lane.b32.xlu0 %v4630, 32
        %v4883 = vpop.permute.xlu0 %4882
        %4884 = vrot.lane.b32.xlu0 %v4631, 32
        %v4885 = vpop.permute.xlu0 %4884
        %4886 = vrot.lane.b32.xlu0 %v4632, 32
        %v4887 = vpop.permute.xlu0 %4886
        %4888 = vrot.lane.b32.xlu0 %v4633, 32
        %v4889 = vpop.permute.xlu0 %4888
        %4890 = vrot.lane.b32.xlu0 %v4634, 32
        %v4891 = vpop.permute.xlu0 %4890
        %4892 = vrot.lane.b32.xlu0 %v4635, 32
        %v4893 = vpop.permute.xlu0 %4892
        %4894 = vrot.lane.b32.xlu0 %v4636, 32
        %v4895 = vpop.permute.xlu0 %4894
        %4896 = vrot.lane.b32.xlu0 %v4637, 32
        %v4897 = vpop.permute.xlu0 %4896
        %4898 = vrot.lane.b32.xlu0 %v4638, 32
        %v4899 = vpop.permute.xlu0 %4898
        %4918 = vrot.lane.b32.xlu0 %v4657, 48
        %v4919 = vpop.permute.xlu0 %4918
        %4920 = vrot.lane.b32.xlu0 %v4658, 48
        %v4921 = vpop.permute.xlu0 %4920
        %4922 = vrot.lane.b32.xlu0 %v4659, 48
        %v4923 = vpop.permute.xlu0 %4922
        %4924 = vrot.lane.b32.xlu0 %v4660, 48
        %v4925 = vpop.permute.xlu0 %4924
        %4926 = vrot.lane.b32.xlu0 %v4661, 48
        %v4927 = vpop.permute.xlu0 %4926
        %4928 = vrot.lane.b32.xlu0 %v4662, 48
        %v4929 = vpop.permute.xlu0 %4928
        %4930 = vrot.lane.b32.xlu0 %v4663, 48
        %v4931 = vpop.permute.xlu0 %4930
        %4932 = vrot.lane.b32.xlu0 %v4664, 48
        %v4933 = vpop.permute.xlu0 %4932
        %4934 = vrot.lane.b32.xlu0 %v4665, 48
        %v4935 = vpop.permute.xlu0 %4934
        %4954 = vrot.lane.b32.xlu0 %v4684, 64
        %v4955 = vpop.permute.xlu0 %4954
        %4956 = vrot.lane.b32.xlu0 %v4685, 64
        %v4957 = vpop.permute.xlu0 %4956
        %4958 = vrot.lane.b32.xlu0 %v4686, 64
        %v4959 = vpop.permute.xlu0 %4958
        %4960 = vrot.lane.b32.xlu0 %v4687, 64
        %v4961 = vpop.permute.xlu0 %4960
        %4962 = vrot.lane.b32.xlu0 %v4688, 64
        %v4963 = vpop.permute.xlu0 %4962
        %4964 = vrot.lane.b32.xlu0 %v4689, 64
        %v4965 = vpop.permute.xlu0 %4964
        %4966 = vrot.lane.b32.xlu0 %v4690, 64
        %v4967 = vpop.permute.xlu0 %4966
        %4968 = vrot.lane.b32.xlu0 %v4691, 64
        %v4969 = vpop.permute.xlu0 %4968
        %4970 = vrot.lane.b32.xlu0 %v4692, 64
        %v4971 = vpop.permute.xlu0 %4970
        %4990 = vrot.lane.b32.xlu0 %v4354, 80
        %v4991 = vpop.permute.xlu0 %4990
        %4992 = vrot.lane.b32.xlu0 %v4357, 80
        %v4993 = vpop.permute.xlu0 %4992
        %4994 = vrot.lane.b32.xlu0 %v4362, 80
        %v4995 = vpop.permute.xlu0 %4994
        %4996 = vrot.lane.b32.xlu0 %v4365, 80
        %v4997 = vpop.permute.xlu0 %4996
        %4998 = vrot.lane.b32.xlu0 %v4370, 80
        %v4999 = vpop.permute.xlu0 %4998
        %5000 = vrot.lane.b32.xlu0 %v4373, 80
        %v5001 = vpop.permute.xlu0 %5000
        %5002 = vrot.lane.b32.xlu0 %v4378, 80
        %v5003 = vpop.permute.xlu0 %5002
        %5004 = vrot.lane.b32.xlu0 %v4381, 80
        %v5005 = vpop.permute.xlu0 %5004
        %5006 = vrot.lane.b32.xlu0 %v4386, 80
        %v5007 = vpop.permute.xlu0 %5006
        %5026 = vrot.lane.b32.xlu0 %v4702, 96
        %v5027 = vpop.permute.xlu0 %5026
        %5028 = vrot.lane.b32.xlu0 %v4703, 96
        %v5029 = vpop.permute.xlu0 %5028
        %5030 = vrot.lane.b32.xlu0 %v4704, 96
        %v5031 = vpop.permute.xlu0 %5030
        %5032 = vrot.lane.b32.xlu0 %v4705, 96
        %v5033 = vpop.permute.xlu0 %5032
        %5034 = vrot.lane.b32.xlu0 %v4706, 96
        %v5035 = vpop.permute.xlu0 %5034
        %5036 = vrot.lane.b32.xlu0 %v4707, 96
        %v5037 = vpop.permute.xlu0 %5036
        %5038 = vrot.lane.b32.xlu0 %v4708, 96
        %v5039 = vpop.permute.xlu0 %5038
        %5040 = vrot.lane.b32.xlu0 %v4709, 96
        %v5041 = vpop.permute.xlu0 %5040
        %5042 = vrot.lane.b32.xlu0 %v4710, 96
        %v5043 = vpop.permute.xlu0 %5042
        %5062 = vrot.lane.b32.xlu0 %v4720, 112
        %v5063 = vpop.permute.xlu0 %5062
        %5064 = vrot.lane.b32.xlu0 %v4721, 112
        %v5065 = vpop.permute.xlu0 %5064
        %5066 = vrot.lane.b32.xlu0 %v4722, 112
        %v5067 = vpop.permute.xlu0 %5066
        %5068 = vrot.lane.b32.xlu0 %v4723, 112
        %v5069 = vpop.permute.xlu0 %5068
        %5070 = vrot.lane.b32.xlu0 %v4724, 112
        %v5071 = vpop.permute.xlu0 %5070
        %5072 = vrot.lane.b32.xlu0 %v4725, 112
        %v5073 = vpop.permute.xlu0 %5072
        %5074 = vrot.lane.b32.xlu0 %v4726, 112
        %v5075 = vpop.permute.xlu0 %5074
        %5076 = vrot.lane.b32.xlu0 %v4727, 112
        %v5077 = vpop.permute.xlu0 %5076
        %5078 = vrot.lane.b32.xlu0 %v4728, 112
        %v5079 = vpop.permute.xlu0 %5078
        %5098 = vrot.lane.b32.xlu0 %v4756, 16
        %v5099 = vpop.permute.xlu0 %5098
        %5100 = vrot.lane.b32.xlu0 %v4757, 16
        %v5101 = vpop.permute.xlu0 %5100
        %5102 = vrot.lane.b32.xlu0 %v4758, 16
        %v5103 = vpop.permute.xlu0 %5102
        %5104 = vrot.lane.b32.xlu0 %v4759, 16
        %v5105 = vpop.permute.xlu0 %5104
        %5106 = vrot.lane.b32.xlu0 %v4760, 16
        %v5107 = vpop.permute.xlu0 %5106
        %5108 = vrot.lane.b32.xlu0 %v4761, 16
        %v5109 = vpop.permute.xlu0 %5108
        %5110 = vrot.lane.b32.xlu0 %v4762, 16
        %v5111 = vpop.permute.xlu0 %5110
        %5112 = vrot.lane.b32.xlu0 %v4763, 16
        %v5113 = vpop.permute.xlu0 %5112
        %5114 = vrot.lane.b32.xlu0 %v4764, 16
        %v5115 = vpop.permute.xlu0 %5114
        %5134 = vrot.lane.b32.xlu0 %v4451, 32
        %v5135 = vpop.permute.xlu0 %5134
        %5136 = vrot.lane.b32.xlu0 %v4454, 32
        %v5137 = vpop.permute.xlu0 %5136
        %5138 = vrot.lane.b32.xlu0 %v4459, 32
        %v5139 = vpop.permute.xlu0 %5138
        %5140 = vrot.lane.b32.xlu0 %v4462, 32
        %v5141 = vpop.permute.xlu0 %5140
        %5142 = vrot.lane.b32.xlu0 %v4467, 32
        %v5143 = vpop.permute.xlu0 %5142
        %5144 = vrot.lane.b32.xlu0 %v4470, 32
        %v5145 = vpop.permute.xlu0 %5144
        %5146 = vrot.lane.b32.xlu0 %v4475, 32
        %v5147 = vpop.permute.xlu0 %5146
        %5148 = vrot.lane.b32.xlu0 %v4478, 32
        %v5149 = vpop.permute.xlu0 %5148
        %5150 = vrot.lane.b32.xlu0 %v4483, 32
        %v5151 = vpop.permute.xlu0 %5150
        %5170 = vrot.lane.b32.xlu0 %v4774, 48
        %v5171 = vpop.permute.xlu0 %5170
        %5172 = vrot.lane.b32.xlu0 %v4775, 48
        %v5173 = vpop.permute.xlu0 %5172
        %5174 = vrot.lane.b32.xlu0 %v4776, 48
        %v5175 = vpop.permute.xlu0 %5174
        %5176 = vrot.lane.b32.xlu0 %v4777, 48
        %v5177 = vpop.permute.xlu0 %5176
        %5178 = vrot.lane.b32.xlu0 %v4778, 48
        %v5179 = vpop.permute.xlu0 %5178
        %5180 = vrot.lane.b32.xlu0 %v4779, 48
        %v5181 = vpop.permute.xlu0 %5180
        %5182 = vrot.lane.b32.xlu0 %v4780, 48
        %v5183 = vpop.permute.xlu0 %5182
        %5184 = vrot.lane.b32.xlu0 %v4781, 48
        %v5185 = vpop.permute.xlu0 %5184
        %5186 = vrot.lane.b32.xlu0 %v4782, 48
        %v5187 = vpop.permute.xlu0 %5186
        %5206 = vrot.lane.b32.xlu0 %v4792, 64
        %v5207 = vpop.permute.xlu0 %5206
        %5208 = vrot.lane.b32.xlu0 %v4793, 64
        %v5209 = vpop.permute.xlu0 %5208
        %5210 = vrot.lane.b32.xlu0 %v4794, 64
        %v5211 = vpop.permute.xlu0 %5210
        %5212 = vrot.lane.b32.xlu0 %v4795, 64
        %v5213 = vpop.permute.xlu0 %5212
        %5214 = vrot.lane.b32.xlu0 %v4796, 64
        %v5215 = vpop.permute.xlu0 %5214
        %5216 = vrot.lane.b32.xlu0 %v4797, 64
        %v5217 = vpop.permute.xlu0 %5216
        %5218 = vrot.lane.b32.xlu0 %v4798, 64
        %v5219 = vpop.permute.xlu0 %5218
        %5220 = vrot.lane.b32.xlu0 %v4799, 64
        %v5221 = vpop.permute.xlu0 %5220
        %5222 = vrot.lane.b32.xlu0 %v4800, 64
        %v5223 = vpop.permute.xlu0 %5222
        %5242 = vrot.lane.b32.xlu0 %v4810, 80
        %v5243 = vpop.permute.xlu0 %5242
        %5244 = vrot.lane.b32.xlu0 %v4811, 80
        %v5245 = vpop.permute.xlu0 %5244
        %5246 = vrot.lane.b32.xlu0 %v4812, 80
        %v5247 = vpop.permute.xlu0 %5246
        %5248 = vrot.lane.b32.xlu0 %v4813, 80
        %v5249 = vpop.permute.xlu0 %5248
        %5250 = vrot.lane.b32.xlu0 %v4814, 80
        %v5251 = vpop.permute.xlu0 %5250
        %5252 = vrot.lane.b32.xlu0 %v4815, 80
        %v5253 = vpop.permute.xlu0 %5252
        %5254 = vrot.lane.b32.xlu0 %v4816, 80
        %v5255 = vpop.permute.xlu0 %5254
        %5256 = vrot.lane.b32.xlu0 %v4817, 80
        %v5257 = vpop.permute.xlu0 %5256
        %5258 = vrot.lane.b32.xlu0 %v4818, 80
        %v5259 = vpop.permute.xlu0 %5258
        %5278 = vrot.lane.b32.xlu0 %v4828, 96
        %v5279 = vpop.permute.xlu0 %5278
        %5280 = vrot.lane.b32.xlu0 %v4829, 96
        %v5281 = vpop.permute.xlu0 %5280
        %5282 = vrot.lane.b32.xlu0 %v4830, 96
        %v5283 = vpop.permute.xlu0 %5282
        %5284 = vrot.lane.b32.xlu0 %v4831, 96
        %v5285 = vpop.permute.xlu0 %5284
        %5286 = vrot.lane.b32.xlu0 %v4832, 96
        %v5287 = vpop.permute.xlu0 %5286
        %5288 = vrot.lane.b32.xlu0 %v4833, 96
        %v5289 = vpop.permute.xlu0 %5288
        %5290 = vrot.lane.b32.xlu0 %v4834, 96
        %v5291 = vpop.permute.xlu0 %5290
        %5292 = vrot.lane.b32.xlu0 %v4835, 96
        %v5293 = vpop.permute.xlu0 %5292
        %5294 = vrot.lane.b32.xlu0 %v4836, 96
        %v5295 = vpop.permute.xlu0 %5294
        %5314 = vrot.lane.b32.xlu0 %v4548, 112
        %v5315 = vpop.permute.xlu0 %5314
        %5316 = vrot.lane.b32.xlu0 %v4551, 112
        %v5317 = vpop.permute.xlu0 %5316
        %5318 = vrot.lane.b32.xlu0 %v4556, 112
        %v5319 = vpop.permute.xlu0 %5318
        %5320 = vrot.lane.b32.xlu0 %v4559, 112
        %v5321 = vpop.permute.xlu0 %5320
        %5322 = vrot.lane.b32.xlu0 %v4564, 112
        %v5323 = vpop.permute.xlu0 %5322
        %5324 = vrot.lane.b32.xlu0 %v4567, 112
        %v5325 = vpop.permute.xlu0 %5324
        %5326 = vrot.lane.b32.xlu0 %v4572, 112
        %v5327 = vpop.permute.xlu0 %5326
        %5328 = vrot.lane.b32.xlu0 %v4575, 112
        %v5329 = vpop.permute.xlu0 %5328
        %5330 = vrot.lane.b32.xlu0 %v4580, 112
        %v5331 = vpop.permute.xlu0 %5330
        %v5341 = vsel %vm1401, %v4252, %v4847
        %v5342 = vsel %vm1401, %v4255, %v4849
        %v5343 = vsel %vm1401, %v4260, %v4851
        %v5344 = vsel %vm1401, %v4263, %v4853
        %v5345 = vsel %vm1401, %v4268, %v4855
        %v5346 = vsel %vm1401, %v4271, %v4857
        %v5347 = vsel %vm1401, %v4276, %v4859
        %v5348 = vsel %vm1401, %v4279, %v4861
        %v5349 = vsel %vm1401, %v4284, %v4863
        %v5350 = vsel %vm1478, %v5341, %v4883
        %v5351 = vsel %vm1478, %v5342, %v4885
        %v5352 = vsel %vm1478, %v5343, %v4887
        %v5353 = vsel %vm1478, %v5344, %v4889
        %v5354 = vsel %vm1478, %v5345, %v4891
        %v5355 = vsel %vm1478, %v5346, %v4893
        %v5356 = vsel %vm1478, %v5347, %v4895
        %v5357 = vsel %vm1478, %v5348, %v4897
        %v5358 = vsel %vm1478, %v5349, %v4899
        %v5359 = vsel %vm4086, %v5350, %v4919
        %v5360 = vsel %vm4086, %v5351, %v4921
        %v5361 = vsel %vm4086, %v5352, %v4923
        %v5362 = vsel %vm4086, %v5353, %v4925
        %v5363 = vsel %vm4086, %v5354, %v4927
        %v5364 = vsel %vm4086, %v5355, %v4929
        %v5365 = vsel %vm4086, %v5356, %v4931
        %v5366 = vsel %vm4086, %v5357, %v4933
        %v5367 = vsel %vm4086, %v5358, %v4935
        %v5368 = vsel %vm974, %v5359, %v4955
        %v5369 = vsel %vm974, %v5360, %v4957
        %v5370 = vsel %vm974, %v5361, %v4959
        %v5371 = vsel %vm974, %v5362, %v4961
        %v5372 = vsel %vm974, %v5363, %v4963
        %v5373 = vsel %vm974, %v5364, %v4965
        %v5374 = vsel %vm974, %v5365, %v4967
        %v5375 = vsel %vm974, %v5366, %v4969
        %v5376 = vsel %vm974, %v5367, %v4971
        %v5377 = vsel %vm4105, %v5368, %v4991
        %v5378 = vsel %vm4105, %v5369, %v4993
        %v5379 = vsel %vm4105, %v5370, %v4995
        %v5380 = vsel %vm4105, %v5371, %v4997
        %v5381 = vsel %vm4105, %v5372, %v4999
        %v5382 = vsel %vm4105, %v5373, %v5001
        %v5383 = vsel %vm4105, %v5374, %v5003
        %v5384 = vsel %vm4105, %v5375, %v5005
        %v5385 = vsel %vm4105, %v5376, %v5007
        %v5386 = vsel %vm1498, %v5377, %v5027
        %v5387 = vsel %vm1498, %v5378, %v5029
        %v5388 = vsel %vm1498, %v5379, %v5031
        %v5389 = vsel %vm1498, %v5380, %v5033
        %v5390 = vsel %vm1498, %v5381, %v5035
        %v5391 = vsel %vm1498, %v5382, %v5037
        %v5392 = vsel %vm1498, %v5383, %v5039
        %v5393 = vsel %vm1498, %v5384, %v5041
        %v5394 = vsel %vm1498, %v5385, %v5043
        %v5395 = vsel %vm1421, %v5386, %v5063
        %v5396 = vsel %vm1421, %v5387, %v5065
        %v5397 = vsel %vm1421, %v5388, %v5067
        %v5398 = vsel %vm1421, %v5389, %v5069
        %v5399 = vsel %vm1421, %v5390, %v5071
        %v5400 = vsel %vm1421, %v5391, %v5073
        %v5401 = vsel %vm1421, %v5392, %v5075
        %v5402 = vsel %vm1421, %v5393, %v5077
        %v5403 = vsel %vm1421, %v5394, %v5079
        %v5404 = vsel %vm1401, %v4738, %v5099
        %v5405 = vsel %vm1401, %v4739, %v5101
        %v5406 = vsel %vm1401, %v4740, %v5103
        %v5407 = vsel %vm1401, %v4741, %v5105
        %v5408 = vsel %vm1401, %v4742, %v5107
        %v5409 = vsel %vm1401, %v4743, %v5109
        %v5410 = vsel %vm1401, %v4744, %v5111
        %v5411 = vsel %vm1401, %v4745, %v5113
        %v5412 = vsel %vm1401, %v4746, %v5115
        %v5413 = vsel %vm1478, %v5404, %v5135
        %v5414 = vsel %vm1478, %v5405, %v5137
        %v5415 = vsel %vm1478, %v5406, %v5139
        %v5416 = vsel %vm1478, %v5407, %v5141
        %v5417 = vsel %vm1478, %v5408, %v5143
        %v5418 = vsel %vm1478, %v5409, %v5145
        %v5419 = vsel %vm1478, %v5410, %v5147
        %v5420 = vsel %vm1478, %v5411, %v5149
        %v5421 = vsel %vm1478, %v5412, %v5151
        %v5422 = vsel %vm4086, %v5413, %v5171
        %v5423 = vsel %vm4086, %v5414, %v5173
        %v5424 = vsel %vm4086, %v5415, %v5175
        %v5425 = vsel %vm4086, %v5416, %v5177
        %v5426 = vsel %vm4086, %v5417, %v5179
        %v5427 = vsel %vm4086, %v5418, %v5181
        %v5428 = vsel %vm4086, %v5419, %v5183
        %v5429 = vsel %vm4086, %v5420, %v5185
        %v5430 = vsel %vm4086, %v5421, %v5187
        %v5431 = vsel %vm974, %v5422, %v5207
        %v5432 = vsel %vm974, %v5423, %v5209
        %v5433 = vsel %vm974, %v5424, %v5211
        %v5434 = vsel %vm974, %v5425, %v5213
        %v5435 = vsel %vm974, %v5426, %v5215
        %v5436 = vsel %vm974, %v5427, %v5217
        %v5437 = vsel %vm974, %v5428, %v5219
        %v5438 = vsel %vm974, %v5429, %v5221
        %v5439 = vsel %vm974, %v5430, %v5223
        %v5440 = vsel %vm4105, %v5431, %v5243
        %v5441 = vsel %vm4105, %v5432, %v5245
        %v5442 = vsel %vm4105, %v5433, %v5247
        %v5443 = vsel %vm4105, %v5434, %v5249
        %v5444 = vsel %vm4105, %v5435, %v5251
        %v5445 = vsel %vm4105, %v5436, %v5253
        %v5446 = vsel %vm4105, %v5437, %v5255
        %v5447 = vsel %vm4105, %v5438, %v5257
        %v5448 = vsel %vm4105, %v5439, %v5259
        %v5449 = vsel %vm1498, %v5440, %v5279
        %v5450 = vsel %vm1498, %v5441, %v5281
        %v5451 = vsel %vm1498, %v5442, %v5283
        %v5452 = vsel %vm1498, %v5443, %v5285
        %v5453 = vsel %vm1498, %v5444, %v5287
        %v5454 = vsel %vm1498, %v5445, %v5289
        %v5455 = vsel %vm1498, %v5446, %v5291
        %v5456 = vsel %vm1498, %v5447, %v5293
        %v5457 = vsel %vm1498, %v5448, %v5295
        %v5458 = vsel %vm1421, %v5449, %v5315
        %v5459 = vsel %vm1421, %v5450, %v5317
        %v5460 = vsel %vm1421, %v5451, %v5319
        %v5461 = vsel %vm1421, %v5452, %v5321
        %v5462 = vsel %vm1421, %v5453, %v5323
        %v5463 = vsel %vm1421, %v5454, %v5325
        %v5464 = vsel %vm1421, %v5455, %v5327
        %v5465 = vsel %vm1421, %v5456, %v5329
        %v5466 = vsel %vm1421, %v5457, %v5331
        %5467 = vst [vmem:[%s913] sm:$0xff] %v1172
        %5468 = vst [vmem:[%s913 + $0x8] sm:$0xff] %v1173
        %5469 = vst [vmem:[%s913 + $0x10] sm:$0xff] %v1174
        %5470 = vst [vmem:[%s913 + $0x18] sm:$0xff] %v1175
        %5471 = vst [vmem:[%s913 + $0x20] sm:$0xff] %v1176
        %5472 = vst [vmem:[%s913 + $0x28] sm:$0xff] %v1177
        %5473 = vst [vmem:[%s913 + $0x30] sm:$0xff] %v1178
        %5474 = vst [vmem:[%s913 + $0x38] sm:$0xff] %v1179
        %5475 = vst [vmem:[%s913 + $0x40] sm:$0xff] %v1180
        %5476 = vst [vmem:[%s913 + $0x48] sm:$0xff] %v1181
        %5477 = vst [vmem:[%s913 + $0x50] sm:$0xff] %v1182
        %5478 = vst [vmem:[%s913 + $0x58] sm:$0xff] %v1183
        %5479 = vst [vmem:[%s913 + $0x60] sm:$0xff] %v1184
        %5480 = vst [vmem:[%s913 + $0x68] sm:$0xff] %v1185
        %5481 = vst [vmem:[%s913 + $0x70] sm:$0xff] %v1186
        %5482 = vst [vmem:[%s913 + $0x78] sm:$0xff] %v1187
        %5483 = vst [vmem:[%s913 + $0x80] sm:$0xff] %v4124
        %5484 = vst [vmem:[%s913 + $0x88] sm:$0xff] %v4187
        %5485 = vst [vmem:[%s913 + $0x90] sm:$0xff] %v4125
        %5486 = vst [vmem:[%s913 + $0x98] sm:$0xff] %v4188
        %5487 = vst [vmem:[%s913 + $0xa0] sm:$0xff] %v4126
        %5488 = vst [vmem:[%s913 + $0xa8] sm:$0xff] %v4189
        %5489 = vst [vmem:[%s913 + $0xb0] sm:$0xff] %v4127
        %5490 = vst [vmem:[%s913 + $0xb8] sm:$0xff] %v4190
        %5491 = vst [vmem:[%s913 + $0xc0] sm:$0xff] %v4128
        %5492 = vst [vmem:[%s913 + $0xc8] sm:$0xff] %v4191
        %5493 = vst [vmem:[%s913 + $0xd0] sm:$0xff] %v4129
        %5494 = vst [vmem:[%s913 + $0xd8] sm:$0xff] %v4192
        %5495 = vst [vmem:[%s913 + $0xe0] sm:$0xff] %v4130
        %5496 = vst [vmem:[%s913 + $0xe8] sm:$0xff] %v4193
        %5497 = vst [vmem:[%s913 + $0xf0] sm:$0xff] %v4131
        %5498 = vst [vmem:[%s913 + $0xf8] sm:$0xff] %v4194
        %5499 = vst [vmem:[%s913 + $0x100] sm:$0xff] %v5395
        %5500 = vst [vmem:[%s913 + $0x108] sm:$0xff] %v5458
        %5501 = vst [vmem:[%s913 + $0x110] sm:$0xff] %v5396
        %5502 = vst [vmem:[%s913 + $0x118] sm:$0xff] %v5459
        %5503 = vst [vmem:[%s913 + $0x120] sm:$0xff] %v5397
        %5504 = vst [vmem:[%s913 + $0x128] sm:$0xff] %v5460
        %5505 = vst [vmem:[%s913 + $0x130] sm:$0xff] %v5398
        %5506 = vst [vmem:[%s913 + $0x138] sm:$0xff] %v5461
        %5507 = vst [vmem:[%s913 + $0x140] sm:$0xff] %v5399
        %5508 = vst [vmem:[%s913 + $0x148] sm:$0xff] %v5462
        %5509 = vst [vmem:[%s913 + $0x150] sm:$0xff] %v5400
        %5510 = vst [vmem:[%s913 + $0x158] sm:$0xff] %v5463
        %5511 = vst [vmem:[%s913 + $0x160] sm:$0xff] %v5401
        %5512 = vst [vmem:[%s913 + $0x168] sm:$0xff] %v5464
        %5513 = vst [vmem:[%s913 + $0x170] sm:$0xff] %v5402
        %5514 = vst [vmem:[%s913 + $0x178] sm:$0xff] %v5465
        %v5515 = vadd.f32 %v1547, %v4132
        %v5516 = vadd.f32 %v1548, %v4195
        %v5517 = vadd.f32 %v5515, %v5403
        %v5518 = vadd.f32 %v5516, %v5466
        %v5519 = vld [vmem:[#allocation29] sm:$0x3]
        %5521 = vset.pattern.permute.xlu0 0
        %5522 = vperm.xlu0 %5521, %v5519
        %v5523 = vpop.permute.xlu0 %5522
        %v5525 = vadd.f32 %v5517, %v5523
        %v5526 = vadd.f32 %v5518, %v5523
        %v5529 = vcombine.low %v5525, %v5526
        %v5531 = vunpack.c.l.s4 1983009808
        %v5532 = vunpack.c.0.s8 %v5531
        %v5533 = vlaneseq
        %v5534 = vshrl.u32 %v5533, 7
        %v5535 = vsub.s32 %v5532, %v5534
        %v5536 = vrot.slane %v5529, %v5535
        %5538 = vst [vmem:[%s920] sm:$0xf] %v5536
        %s5539 = sand.u32 %s452, 1
        %s5540 = scalar_lea.sflag [#allocation4], %s5539
        %s5541 = sand.u32 %s452, 1
        %s5542 = smul.addr %s5541, 384
        %s5543 = scalar_lea.vmem [#allocation31], %s5542
        %s5544 = sand.u32 %s478, 1
        %s5545 = scalar_lea.sflag [#allocation33], %s5544
        %s5546 = sand.u32 %s478, 1
        %s5547 = smul.addr %s5546, 4
        %s5548 = scalar_lea.vmem [#allocation32], %s5547
        // Predicated region
        $region165: #{tpu_custom_call.1} parent=91 // pred_check
          %p5549 = pneg %p462
        $region166: #{tpu_custom_call.1} parent=91 // pred_check_branch
          %5551 = sbr.rel (%p5549) target = $region168
        $region167: #{tpu_custom_call.1} parent=91 // pred_region
          %s5553 = ssub.s32 6144, 6144
          %5554 = vsyncadd %s5540, %s5553
          %s5555 = smul.addr %s51, 48
          %s5556 = smul.addr %s5555, 128
          %s5557 = scalar_lea.hbm %s18, %s5556
          %s5558 = sshll.u32 %s5543, 4
          %s5559 = int_to_ptr.vmem [resolvable:$true] %s5558
          %5564 = dma.vmem_to_hbm [thread:$0]  %s5559, 6144, %s5557, %s5540, 256, 256, 16
        $region168: #{tpu_custom_call.1} parent=91 // pred_fallthru
          _
        // Predicated region
        $region169: #{tpu_custom_call.1} parent=91 // pred_check
          %p5565 = pneg %p488
        $region170: #{tpu_custom_call.1} parent=91 // pred_check_branch
          %5567 = sbr.rel (%p5565) target = $region172
        $region171: #{tpu_custom_call.1} parent=91 // pred_region
          %s5569 = ssub.s32 64, 64
          %5570 = vsyncadd %s5545, %s5569
          %s5571 = smul.addr %s51, 2
          %s5572 = smul.addr %s5571, 32
          %s5573 = scalar_lea.hbm %s19, %s5572
          %s5575 = sshll.u32 %s5548, 4
          %s5576 = int_to_ptr.vmem [resolvable:$true] %s5575
          %5578 = dma.vmem_to_hbm [thread:$0]  %s5576, 64, %s5573, %s5545
        $region172: #{tpu_custom_call.1} parent=91 // pred_fallthru
          _
      $region92: #{tpu_custom_call.1} parent=5 // pred_fallthru
        _
      %p5579 = scmp.le.s32.totalorder 2, %s46
      // Predicated region
      $region173: #{tpu_custom_call.1} parent=5 // pred_check
        %p5580 = pneg %p5579
      $region174: #{tpu_custom_call.1} parent=5 // pred_check_branch
        %5582 = sbr.rel (%p5580) target = $region176
      $region175: #{tpu_custom_call.1} parent=5 // pred_region
        %s5583 = ssub.s32 %s46, 2
        // Predicated region
        $region177: #{tpu_custom_call.1} parent=175 // pred_check
          %p5584 = pneg %p468
        $region178: #{tpu_custom_call.1} parent=175 // pred_check_branch
          %5586 = sbr.rel (%p5584) target = $region180
        $region179: #{tpu_custom_call.1} parent=175 // pred_region
          %s5587 = sand.u32 %s453, 1
          %s5588 = scalar_lea.sflag [#allocation4], %s5587
          %s5589 = sand.u32 %s453, 1
          %s5590 = smul.addr %s5589, 384
          %s5591 = scalar_lea.vmem [#allocation31], %s5590
          %5592 = dma.done %s5588, 6144
        $region180: #{tpu_custom_call.1} parent=175 // pred_fallthru
          _
        // Predicated region
        $region181: #{tpu_custom_call.1} parent=175 // pred_check
          %p5593 = pneg %p494
        $region182: #{tpu_custom_call.1} parent=175 // pred_check_branch
          %5595 = sbr.rel (%p5593) target = $region184
        $region183: #{tpu_custom_call.1} parent=175 // pred_region
          %s5596 = sand.u32 %s479, 1
          %s5597 = scalar_lea.sflag [#allocation33], %s5596
          %s5598 = sand.u32 %s479, 1
          %s5599 = smul.addr %s5598, 4
          %s5600 = scalar_lea.vmem [#allocation32], %s5599
          %5601 = dma.done %s5597, 64
        $region184: #{tpu_custom_call.1} parent=175 // pred_fallthru
          _
      $region176: #{tpu_custom_call.1} parent=5 // pred_fallthru
        _
    $region6: #{tpu_custom_call.1} parent=1 // loop_footer
      %s50 = sadd.s32 1, %s46
    $region7: #{tpu_custom_call.1} parent=1 // loop_footer_branch
      %45 = sbr.rel target = $region3
    $region8: #{tpu_custom_call.1} parent=1 // loop_exit
      _
    %5602 = vsyncpa [#allocation3], 1
    %s5603 = scalar_lea.sflag [#allocation3], 1
    %5604 = vsyncpa %s5603, 1
    %5605 = vsyncpa [#allocation6], 1
    %s5606 = scalar_lea.sflag [#allocation6], 1
    %5607 = vsyncpa %s5606, 1
    %5608 = vsyncpa [#allocation9], 1
    %5609 = vsyncpa [#allocation12], 1
    %5610 = vsyncpa [#allocation15], 1
    %5611 = vsyncpa [#allocation18], 1
    %5612 = vsyncpa [#allocation21], 1
    %5613 = vsyncpa [#allocation24], 1
    %5614 = vsyncpa [#allocation27], 1
    %5615 = vsyncpa [#allocation30], 1
    %5616 = vsyncpa [#allocation4], 1
    %s5617 = scalar_lea.sflag [#allocation4], 1
    %5618 = vsyncpa %s5617, 1
    %5619 = vsyncpa [#allocation33], 1
    %s5620 = scalar_lea.sflag [#allocation33], 1
    %5621 = vsyncpa %s5620, 1

</llo_original>
